<compile_context>
chip_gen: v5e
topology: v5e:2x2
jax: 0.10.0
libtpu: 0.0.40
codegen_flags: <defaults>
</compile_context>

<pallas_src>
import functools

import jax
import jax.numpy as jnp
from jax import lax
from jax.experimental import pallas as pl
from jax.experimental.pallas import tpu as pltpu


# --------------------------------------------------------------------------
# Pallas kernels
# --------------------------------------------------------------------------
def _conv_bn_kernel(w_ref, p_ref, b_ref, g_ref, beta_ref, o_ref, *, relu, eps):
    # w: (Cout, K) bf16, p: (K, M) bf16, b/g/beta: (Cout, 1) f32 -> o: (Cout, M) bf16
    y = jnp.dot(w_ref[...], p_ref[...], preferred_element_type=jnp.float32) + b_ref[...]
    inv_m = 1.0 / y.shape[1]
    mean = jnp.sum(y, axis=1, keepdims=True) * inv_m
    d = y - mean
    var = jnp.sum(d * d, axis=1, keepdims=True) * inv_m          # two-pass variance
    scale = g_ref[...] * lax.rsqrt(var + eps)
    z = d * scale + beta_ref[...]
    if relu:
        z = jnp.maximum(z, 0.0)
    o_ref[...] = z.astype(o_ref.dtype)


def _conv_bn_res_kernel(w_ref, p_ref, b_ref, g_ref, beta_ref, r_ref, o_ref, *,
                        relu, eps):
    # Same as above, plus a fused residual add (BN(conv(h)) + x).
    y = jnp.dot(w_ref[...], p_ref[...], preferred_element_type=jnp.float32) + b_ref[...]
    inv_m = 1.0 / y.shape[1]
    mean = jnp.sum(y, axis=1, keepdims=True) * inv_m
    d = y - mean
    var = jnp.sum(d * d, axis=1, keepdims=True) * inv_m
    scale = g_ref[...] * lax.rsqrt(var + eps)
    z = d * scale + beta_ref[...] + r_ref[...].astype(jnp.float32)
    if relu:
        z = jnp.maximum(z, 0.0)
    o_ref[...] = z.astype(o_ref.dtype)


def _conv_bias_kernel(w_ref, p_ref, b_ref, o_ref):
    # Plain conv-as-matmul (head layer, no BN): f32 output.
    o_ref[...] = (
        jnp.dot(w_ref[...], p_ref[...], preferred_element_type=jnp.float32)
        + b_ref[...]
    ).astype(o_ref.dtype)


# --------------------------------------------------------------------------
# Pallas wrappers
# --------------------------------------------------------------------------
def _full2d(shape):
    return pl.BlockSpec(shape, lambda i: (0, 0))


def conv_bn_fused(patches_T, wT, bias, gamma, beta, *, relu, residual=None,
                  eps=1e-5):
    """Fused conv (+bias) + training-mode BatchNorm (+residual) (+ReLU).

    patches_T: [K, M] bf16, wT: [Cout, K] bf16, bias/gamma/beta: [Cout] f32.
    residual (optional): [Cout, M] bf16.  Returns [Cout, M] bf16.
    """
    K, M = patches_T.shape
    Cout = wT.shape[0]
    b = (jnp.zeros((Cout,), jnp.float32) if bias is None
         else bias.astype(jnp.float32)).reshape(Cout, 1)
    g = gamma.astype(jnp.float32).reshape(Cout, 1)
    bt = beta.astype(jnp.float32).reshape(Cout, 1)

    in_specs = [_full2d((Cout, K)), _full2d((K, M)), _full2d((Cout, 1)),
                _full2d((Cout, 1)), _full2d((Cout, 1))]
    args = [wT, patches_T, b, g, bt]
    if residual is None:
        kernel = functools.partial(_conv_bn_kernel, relu=relu, eps=eps)
    else:
        kernel = functools.partial(_conv_bn_res_kernel, relu=relu, eps=eps)
        in_specs.append(_full2d((Cout, M)))
        args.append(residual)

    return pl.pallas_call(
        kernel,
        out_shape=jax.ShapeDtypeStruct((Cout, M), jnp.bfloat16),
        grid=(1,),
        in_specs=in_specs,
        out_specs=_full2d((Cout, M)),
        compiler_params=pltpu.CompilerParams(dimension_semantics=("arbitrary",)),
    )(*args)


def conv_bias_matmul(patches_T, wT, bias, *, tm=256):
    """Conv-as-matmul without BN (head). patches_T: [K, M] bf16, wT: [Cout, K] bf16."""
    K, M = patches_T.shape
    Cout = wT.shape[0]
    if M < tm or M % tm != 0:
        tm = M
    gm = M // tm
    b = bias.astype(jnp.float32).reshape(Cout, 1)
    return pl.pallas_call(
        _conv_bias_kernel,
        out_shape=jax.ShapeDtypeStruct((Cout, M), jnp.float32),
        grid=(gm,),
        in_specs=[
            pl.BlockSpec((Cout, K), lambda i: (0, 0)),
            pl.BlockSpec((K, tm), lambda i: (0, i)),
            pl.BlockSpec((Cout, 1), lambda i: (0, 0)),
        ],
        out_specs=pl.BlockSpec((Cout, tm), lambda i: (0, i)),
        compiler_params=pltpu.CompilerParams(dimension_semantics=("parallel",)),
    )(wT, patches_T, b)


# --------------------------------------------------------------------------
# Conv / ConvTranspose building blocks (glue in XLA, hot path in Pallas)
# --------------------------------------------------------------------------
def _patches_T(x_cnhw, k, stride):
    """x: padded [C, N, H, W] -> patches^T [k*k*C, N*Ho*Wo], plus (N, Ho, Wo)."""
    C, N, H, W = x_cnhw.shape
    Ho = (H - k) // stride + 1
    Wo = (W - k) // stride + 1
    slabs = []
    for dy in range(k):
        for dx in range(k):
            s = x_cnhw[:, :, dy:dy + Ho * stride:stride, dx:dx + Wo * stride:stride]
            slabs.append(s.reshape(C, N * Ho * Wo))
    return jnp.concatenate(slabs, axis=0), (N, Ho, Wo)


def conv2d_bn(x, w_oihw, bias, gamma, beta, *, stride, pad, pad_mode="constant",
              relu, residual=None):
    """x: [Cin, N, H, W] bf16; w: [Cout, Cin, k, k] (PyTorch layout). Returns CNHW bf16."""
    cout, cin, k, _ = w_oihw.shape
    if pad > 0:
        x = jnp.pad(x, ((0, 0), (0, 0), (pad, pad), (pad, pad)), mode=pad_mode)
    pT, (N, Ho, Wo) = _patches_T(x, k, stride)
    # [Cout, Cin, k, k] -> [Cout, k, k, Cin] -> [Cout, k*k*Cin]  (dy-major, dx, cin)
    wT = jnp.transpose(w_oihw, (0, 2, 3, 1)).reshape(cout, k * k * cin).astype(jnp.bfloat16)
    res = None if residual is None else residual.reshape(cout, N * Ho * Wo)
    y = conv_bn_fused(pT, wT, bias, gamma, beta, relu=relu, residual=res)
    return y.reshape(cout, N, Ho, Wo)


def conv_transpose2d_bn(x, wt_iohw, gamma, beta, *, stride, pad, relu=False):
    """PyTorch ConvTranspose2d (no bias, no output_padding) + BN. x: [Cin, N, H, W]."""
    cin, cout, k, _ = wt_iohw.shape
    p = k - 1 - pad
    # interior dilation by (stride-1) + edge pad by p, in one lax.pad
    xd = lax.pad(x, jnp.asarray(0.0, x.dtype),
                 ((0, 0, 0), (0, 0, 0), (p, p, stride - 1), (p, p, stride - 1)))
    pT, (N, Ho, Wo) = _patches_T(xd, k, 1)
    # equivalent conv weight: flip spatially, swap in/out -> [Cout, k, k, Cin]
    wT = jnp.transpose(wt_iohw[:, :, ::-1, ::-1], (1, 2, 3, 0)) \
            .reshape(cout, k * k * cin).astype(jnp.bfloat16)
    y = conv_bn_fused(pT, wT, None, gamma, beta, relu=relu)
    return y.reshape(cout, N, Ho, Wo)


def conv2d_bias(x, w_oihw, bias, *, stride, pad, pad_mode="constant"):
    """Head conv (with bias, no BN). Cout padded to >=8 for sane stores, sliced after."""
    cout, cin, k, _ = w_oihw.shape
    if pad > 0:
        x = jnp.pad(x, ((0, 0), (0, 0), (pad, pad), (pad, pad)), mode=pad_mode)
    pT, (N, Ho, Wo) = _patches_T(x, k, stride)
    cpad = max(8, -(-cout // 8) * 8)
    wp = jnp.zeros((cpad, cin, k, k), w_oihw.dtype).at[:cout].set(w_oihw)
    bp = jnp.zeros((cpad,), jnp.float32).at[:cout].set(bias.astype(jnp.float32))
    wT = jnp.transpose(wp, (0, 2, 3, 1)).reshape(cpad, k * k * cin).astype(jnp.bfloat16)
    y = conv_bias_matmul(pT, wT, bp)          # [cpad, M] f32
    return y[:cout].reshape(cout, N, Ho, Wo)


# --------------------------------------------------------------------------
# Generator
# --------------------------------------------------------------------------
def init_params(key, base_dim=8, residual_num=2, scale=0.1):
    D = base_dim
    ks = iter(jax.random.split(key, 8 + 4 * residual_num))

    def nrm(shape):
        return scale * jax.random.normal(next(ks), shape, jnp.float32)

    params = {
        "w0": nrm((D, 3, 7, 7)), "g0": jnp.ones((D,)), "b0": jnp.zeros((D,)),
        "w1": nrm((2 * D, D, 3, 3)), "g1": jnp.ones((2 * D,)), "b1": jnp.zeros((2 * D,)),
        "w2": nrm((4 * D, 2 * D, 3, 3)), "g2": jnp.ones((4 * D,)), "b2": jnp.zeros((4 * D,)),
        "res": [],
        "wt1": nrm((4 * D, 2 * D, 3, 3)),   # ConvTranspose weight [Cin, Cout, k, k]
        "gt1": jnp.ones((2 * D,)), "bt1": jnp.zeros((2 * D,)),
        "wt2": nrm((2 * D, D, 3, 3)),
        "gt2": jnp.ones((D,)), "bt2": jnp.zeros((D,)),
        "wf": nrm((3, D, 7, 7)), "bf": nrm((3,)),
    }
    for _ in range(residual_num):
        params["res"].append({
            "w1": nrm((4 * D, 4 * D, 3, 3)), "bc1": nrm((4 * D,)),
            "g1": jnp.ones((4 * D,)), "b1": jnp.zeros((4 * D,)),
            "w2": nrm((4 * D, 4 * D, 3, 3)), "bc2": nrm((4 * D,)),
            "g2": jnp.ones((4 * D,)), "b2": jnp.zeros((4 * D,)),
        })
    return params


def generator_forward(x_nchw, params):
    p = params
    x = jnp.transpose(x_nchw, (1, 0, 2, 3)).astype(jnp.bfloat16)   # NCHW -> CNHW

    # stem: 7x7 reflect conv -> BN -> ReLU
    y = conv2d_bn(x, p["w0"], None, p["g0"], p["b0"], stride=1, pad=3,
                  pad_mode="reflect", relu=True)
    # downsample x2
    y = conv2d_bn(y, p["w1"], None, p["g1"], p["b1"], stride=2, pad=1, relu=True)
    y = conv2d_bn(y, p["w2"], None, p["g2"], p["b2"], stride=2, pad=1, relu=True)

    # residual blocks: conv->BN->ReLU->conv->BN (+x), each half fused in one call
    for rp in p["res"]:
        h = conv2d_bn(y, rp["w1"], rp["bc1"], rp["g1"], rp["b1"], stride=1, pad=1,
                      pad_mode="reflect", relu=True)
        y = conv2d_bn(h, rp["w2"], rp["bc2"], rp["g2"], rp["b2"], stride=1, pad=1,
                      pad_mode="reflect", relu=False, residual=y)

    # upsample 1: ConvTranspose -> BN -> ZeroPad2d([0,1,0,1])
    y = conv_transpose2d_bn(y, p["wt1"], p["gt1"], p["bt1"], stride=2, pad=1)
    y = jnp.pad(y, ((0, 0), (0, 0), (0, 1), (0, 1)))
    # upsample 2
    y = conv_transpose2d_bn(y, p["wt2"], p["gt2"], p["bt2"], stride=2, pad=1)
    y = jnp.pad(y, ((0, 0), (0, 0), (0, 1), (0, 1)))

    # head: 7x7 reflect conv with bias, no BN/activation
    y = conv2d_bias(y, p["wf"], p["bf"], stride=1, pad=3, pad_mode="reflect")
    return jnp.transpose(y, (1, 0, 2, 3))    # CNHW -> NCHW (f32)


if __name__ == "__main__":
    key = jax.random.PRNGKey(0)
    k_x, k_p = jax.random.split(key)

    # Small config: Generator(base_dim=8, residual_num=2), input NCHW [2, 3, 16, 16]
    base_dim, residual_num = 8, 2
    x = jax.random.normal(k_x, (2, 3, 16, 16), jnp.float32)
    params = init_params(k_p, base_dim=base_dim, residual_num=residual_num)

    fwd = jax.jit(functools.partial(generator_forward, params=params))
    out = fwd(x)
    jax.block_until_ready(out)

    assert out.shape == (2, 3, 16, 16), out.shape
    assert bool(jnp.all(jnp.isfinite(out)))
    print("KERNEL_OK")
</pallas_src>

<mosaic_0001>
module attributes {stable_mosaic.version = 11 : i64} {
  func.func @_conv_bn_kernel(%arg0: i32, %arg1: memref<8x147xbf16, #tpu.memory_space<vmem>>, %arg2: memref<147x512xbf16, #tpu.memory_space<vmem>>, %arg3: memref<8x1xf32, #tpu.memory_space<vmem>>, %arg4: memref<8x1xf32, #tpu.memory_space<vmem>>, %arg5: memref<8x1xf32, #tpu.memory_space<vmem>>, %arg6: memref<8x512xbf16, #tpu.memory_space<vmem>>) attributes {dimension_semantics = [#tpu.dimension_semantics<arbitrary>], iteration_bounds = array<i64: 1>, scalar_prefetch = 0 : i64, scratch_operands = 0 : i64, tpu.core_type = #tpu.core_type<tc>, window_params = [{pipeline_mode = #tpu.pipeline_mode<synchronous>, transform_indices = @transform_0, window_bounds = array<i64: 8, 147>}, {pipeline_mode = #tpu.pipeline_mode<synchronous>, transform_indices = @transform_1, window_bounds = array<i64: 147, 512>}, {pipeline_mode = #tpu.pipeline_mode<synchronous>, transform_indices = @transform_2, window_bounds = array<i64: 8, 1>}, {pipeline_mode = #tpu.pipeline_mode<synchronous>, transform_indices = @transform_3, window_bounds = array<i64: 8, 1>}, {pipeline_mode = #tpu.pipeline_mode<synchronous>, transform_indices = @transform_4, window_bounds = array<i64: 8, 1>}, {pipeline_mode = #tpu.pipeline_mode<synchronous>, transform_indices = @transform_5, window_bounds = array<i64: 8, 512>}]} {
    %c0 = arith.constant 0 : index
    %c0_0 = arith.constant 0 : index
    %0 = vector.load %arg1[%c0, %c0_0] : memref<8x147xbf16, #tpu.memory_space<vmem>>, vector<8x147xbf16>
    %c0_1 = arith.constant 0 : index
    %c0_2 = arith.constant 0 : index
    %1 = vector.load %arg2[%c0_1, %c0_2] : memref<147x512xbf16, #tpu.memory_space<vmem>>, vector<147x512xbf16>
    %cst = arith.constant dense<0.000000e+00> : vector<8x512xf32>
    %2 = tpu.matmul %0, %1, %cst {dimension_numbers = #tpu.dot_dimension_numbers<[1], [0], [0], [1], [0, 0, 1, 1], [], []>} : vector<8x147xbf16>, vector<147x512xbf16>, vector<8x512xf32> -> vector<8x512xf32>
    %c0_3 = arith.constant 0 : index
    %c0_4 = arith.constant 0 : index
    %3 = vector.load %arg3[%c0_3, %c0_4] : memref<8x1xf32, #tpu.memory_space<vmem>>, vector<8x1xf32>
    %4 = vector.broadcast %3 : vector<8x1xf32> to vector<8x512xf32>
    %5 = arith.addf %2, %4 : vector<8x512xf32>
    %cst_5 = arith.constant dense<0.000000e+00> : vector<8xf32>
    %6 = vector.multi_reduction <add>, %5, %cst_5 [1] : vector<8x512xf32> to vector<8xf32>
    %7 = vector.shape_cast %6 : vector<8xf32> to vector<8x1xf32>
    %cst_6 = arith.constant 0.001953125 : f32
    %8 = vector.broadcast %cst_6 : f32 to vector<8x1xf32>
    %9 = arith.mulf %7, %8 : vector<8x1xf32>
    %10 = vector.broadcast %9 : vector<8x1xf32> to vector<8x512xf32>
    %11 = arith.subf %5, %10 : vector<8x512xf32>
    %12 = arith.mulf %11, %11 : vector<8x512xf32>
    %cst_7 = arith.constant dense<0.000000e+00> : vector<8xf32>
    %13 = vector.multi_reduction <add>, %12, %cst_7 [1] : vector<8x512xf32> to vector<8xf32>
    %14 = vector.shape_cast %13 : vector<8xf32> to vector<8x1xf32>
    %cst_8 = arith.constant 0.001953125 : f32
    %15 = vector.broadcast %cst_8 : f32 to vector<8x1xf32>
    %16 = arith.mulf %14, %15 : vector<8x1xf32>
    %c0_9 = arith.constant 0 : index
    %c0_10 = arith.constant 0 : index
    %17 = vector.load %arg4[%c0_9, %c0_10] : memref<8x1xf32, #tpu.memory_space<vmem>>, vector<8x1xf32>
    %cst_11 = arith.constant 9.99999974E-6 : f32
    %18 = vector.broadcast %cst_11 : f32 to vector<8x1xf32>
    %19 = arith.addf %16, %18 : vector<8x1xf32>
    %20 = math.rsqrt %19 : vector<8x1xf32>
    %21 = arith.mulf %17, %20 : vector<8x1xf32>
    %22 = vector.broadcast %21 : vector<8x1xf32> to vector<8x512xf32>
    %23 = arith.mulf %11, %22 : vector<8x512xf32>
    %c0_12 = arith.constant 0 : index
    %c0_13 = arith.constant 0 : index
    %24 = vector.load %arg5[%c0_12, %c0_13] : memref<8x1xf32, #tpu.memory_space<vmem>>, vector<8x1xf32>
    %25 = vector.broadcast %24 : vector<8x1xf32> to vector<8x512xf32>
    %26 = arith.addf %23, %25 : vector<8x512xf32>
    %cst_14 = arith.constant 0.000000e+00 : f32
    %27 = vector.broadcast %cst_14 : f32 to vector<8x512xf32>
    %28 = arith.maximumf %26, %27 : vector<8x512xf32>
    %29 = arith.truncf %28 : vector<8x512xf32> to vector<8x512xbf16>
    %c0_15 = arith.constant 0 : index
    %c0_16 = arith.constant 0 : index
    %30 = vector.load %arg6[%c0_15, %c0_16] : memref<8x512xbf16, #tpu.memory_space<vmem>>, vector<8x512xbf16>
    tpu.vector_store %arg6[%c0_15, %c0_16], %29 {strides = array<i32>} : memref<8x512xbf16, #tpu.memory_space<vmem>>, vector<8x512xbf16>,
    return
  }
  func.func @transform_0(%arg0: i32) -> (i32, i32) {
    %c0_i32 = arith.constant 0 : i32
    %c0_i32_0 = arith.constant 0 : i32
    %c0_i32_1 = arith.constant 0 : i32
    return %c0_i32, %c0_i32_0 : i32, i32
  }
  func.func @transform_1(%arg0: i32) -> (i32, i32) {
    %c0_i32 = arith.constant 0 : i32
    %c0_i32_0 = arith.constant 0 : i32
    %c0_i32_1 = arith.constant 0 : i32
    return %c0_i32, %c0_i32_0 : i32, i32
  }
  func.func @transform_2(%arg0: i32) -> (i32, i32) {
    %c0_i32 = arith.constant 0 : i32
    %c0_i32_0 = arith.constant 0 : i32
    %c0_i32_1 = arith.constant 0 : i32
    return %c0_i32, %c0_i32_0 : i32, i32
  }
  func.func @transform_3(%arg0: i32) -> (i32, i32) {
    %c0_i32 = arith.constant 0 : i32
    %c0_i32_0 = arith.constant 0 : i32
    %c0_i32_1 = arith.constant 0 : i32
    return %c0_i32, %c0_i32_0 : i32, i32
  }
  func.func @transform_4(%arg0: i32) -> (i32, i32) {
    %c0_i32 = arith.constant 0 : i32
    %c0_i32_0 = arith.constant 0 : i32
    %c0_i32_1 = arith.constant 0 : i32
    return %c0_i32, %c0_i32_0 : i32, i32
  }
  func.func @transform_5(%arg0: i32) -> (i32, i32) {
    %c0_i32 = arith.constant 0 : i32
    %c0_i32_0 = arith.constant 0 : i32
    %c0_i32_1 = arith.constant 0 : i32
    return %c0_i32, %c0_i32_0 : i32, i32
  }
}

module attributes {stable_mosaic.version = 11 : i64} {
  func.func @_conv_bn_kernel(%arg0: i32, %arg1: memref<16x72xbf16, #tpu.memory_space<vmem>>, %arg2: memref<72x128xbf16, #tpu.memory_space<vmem>>, %arg3: memref<16x1xf32, #tpu.memory_space<vmem>>, %arg4: memref<16x1xf32, #tpu.memory_space<vmem>>, %arg5: memref<16x1xf32, #tpu.memory_space<vmem>>, %arg6: memref<16x128xbf16, #tpu.memory_space<vmem>>) attributes {dimension_semantics = [#tpu.dimension_semantics<arbitrary>], iteration_bounds = array<i64: 1>, scalar_prefetch = 0 : i64, scratch_operands = 0 : i64, tpu.core_type = #tpu.core_type<tc>, window_params = [{pipeline_mode = #tpu.pipeline_mode<synchronous>, transform_indices = @transform_0, window_bounds = array<i64: 16, 72>}, {pipeline_mode = #tpu.pipeline_mode<synchronous>, transform_indices = @transform_1, window_bounds = array<i64: 72, 128>}, {pipeline_mode = #tpu.pipeline_mode<synchronous>, transform_indices = @transform_2, window_bounds = array<i64: 16, 1>}, {pipeline_mode = #tpu.pipeline_mode<synchronous>, transform_indices = @transform_3, window_bounds = array<i64: 16, 1>}, {pipeline_mode = #tpu.pipeline_mode<synchronous>, transform_indices = @transform_4, window_bounds = array<i64: 16, 1>}, {pipeline_mode = #tpu.pipeline_mode<synchronous>, transform_indices = @transform_5, window_bounds = array<i64: 16, 128>}]} {
    %c0 = arith.constant 0 : index
    %c0_0 = arith.constant 0 : index
    %0 = vector.load %arg1[%c0, %c0_0] : memref<16x72xbf16, #tpu.memory_space<vmem>>, vector<16x72xbf16>
    %c0_1 = arith.constant 0 : index
    %c0_2 = arith.constant 0 : index
    %1 = vector.load %arg2[%c0_1, %c0_2] : memref<72x128xbf16, #tpu.memory_space<vmem>>, vector<72x128xbf16>
    %cst = arith.constant dense<0.000000e+00> : vector<16x128xf32>
    %2 = tpu.matmul %0, %1, %cst {dimension_numbers = #tpu.dot_dimension_numbers<[1], [0], [0], [1], [0, 0, 1, 1], [], []>} : vector<16x72xbf16>, vector<72x128xbf16>, vector<16x128xf32> -> vector<16x128xf32>
    %c0_3 = arith.constant 0 : index
    %c0_4 = arith.constant 0 : index
    %3 = vector.load %arg3[%c0_3, %c0_4] : memref<16x1xf32, #tpu.memory_space<vmem>>, vector<16x1xf32>
    %4 = vector.broadcast %3 : vector<16x1xf32> to vector<16x128xf32>
    %5 = arith.addf %2, %4 : vector<16x128xf32>
    %cst_5 = arith.constant dense<0.000000e+00> : vector<16xf32>
    %6 = vector.multi_reduction <add>, %5, %cst_5 [1] : vector<16x128xf32> to vector<16xf32>
    %7 = vector.shape_cast %6 : vector<16xf32> to vector<16x1xf32>
    %cst_6 = arith.constant 7.812500e-03 : f32
    %8 = vector.broadcast %cst_6 : f32 to vector<16x1xf32>
    %9 = arith.mulf %7, %8 : vector<16x1xf32>
    %10 = vector.broadcast %9 : vector<16x1xf32> to vector<16x128xf32>
    %11 = arith.subf %5, %10 : vector<16x128xf32>
    %12 = arith.mulf %11, %11 : vector<16x128xf32>
    %cst_7 = arith.constant dense<0.000000e+00> : vector<16xf32>
    %13 = vector.multi_reduction <add>, %12, %cst_7 [1] : vector<16x128xf32> to vector<16xf32>
    %14 = vector.shape_cast %13 : vector<16xf32> to vector<16x1xf32>
    %cst_8 = arith.constant 7.812500e-03 : f32
    %15 = vector.broadcast %cst_8 : f32 to vector<16x1xf32>
    %16 = arith.mulf %14, %15 : vector<16x1xf32>
    %c0_9 = arith.constant 0 : index
    %c0_10 = arith.constant 0 : index
    %17 = vector.load %arg4[%c0_9, %c0_10] : memref<16x1xf32, #tpu.memory_space<vmem>>, vector<16x1xf32>
    %cst_11 = arith.constant 9.99999974E-6 : f32
    %18 = vector.broadcast %cst_11 : f32 to vector<16x1xf32>
    %19 = arith.addf %16, %18 : vector<16x1xf32>
    %20 = math.rsqrt %19 : vector<16x1xf32>
    %21 = arith.mulf %17, %20 : vector<16x1xf32>
    %22 = vector.broadcast %21 : vector<16x1xf32> to vector<16x128xf32>
    %23 = arith.mulf %11, %22 : vector<16x128xf32>
    %c0_12 = arith.constant 0 : index
    %c0_13 = arith.constant 0 : index
    %24 = vector.load %arg5[%c0_12, %c0_13] : memref<16x1xf32, #tpu.memory_space<vmem>>, vector<16x1xf32>
    %25 = vector.broadcast %24 : vector<16x1xf32> to vector<16x128xf32>
    %26 = arith.addf %23, %25 : vector<16x128xf32>
    %cst_14 = arith.constant 0.000000e+00 : f32
    %27 = vector.broadcast %cst_14 : f32 to vector<16x128xf32>
    %28 = arith.maximumf %26, %27 : vector<16x128xf32>
    %29 = arith.truncf %28 : vector<16x128xf32> to vector<16x128xbf16>
    %c0_15 = arith.constant 0 : index
    %c0_16 = arith.constant 0 : index
    %30 = vector.load %arg6[%c0_15, %c0_16] : memref<16x128xbf16, #tpu.memory_space<vmem>>, vector<16x128xbf16>
    tpu.vector_store %arg6[%c0_15, %c0_16], %29 {strides = array<i32>} : memref<16x128xbf16, #tpu.memory_space<vmem>>, vector<16x128xbf16>,
    return
  }
  func.func @transform_0(%arg0: i32) -> (i32, i32) {
    %c0_i32 = arith.constant 0 : i32
    %c0_i32_0 = arith.constant 0 : i32
    %c0_i32_1 = arith.constant 0 : i32
    return %c0_i32, %c0_i32_0 : i32, i32
  }
  func.func @transform_1(%arg0: i32) -> (i32, i32) {
    %c0_i32 = arith.constant 0 : i32
    %c0_i32_0 = arith.constant 0 : i32
    %c0_i32_1 = arith.constant 0 : i32
    return %c0_i32, %c0_i32_0 : i32, i32
  }
  func.func @transform_2(%arg0: i32) -> (i32, i32) {
    %c0_i32 = arith.constant 0 : i32
    %c0_i32_0 = arith.constant 0 : i32
    %c0_i32_1 = arith.constant 0 : i32
    return %c0_i32, %c0_i32_0 : i32, i32
  }
  func.func @transform_3(%arg0: i32) -> (i32, i32) {
    %c0_i32 = arith.constant 0 : i32
    %c0_i32_0 = arith.constant 0 : i32
    %c0_i32_1 = arith.constant 0 : i32
    return %c0_i32, %c0_i32_0 : i32, i32
  }
  func.func @transform_4(%arg0: i32) -> (i32, i32) {
    %c0_i32 = arith.constant 0 : i32
    %c0_i32_0 = arith.constant 0 : i32
    %c0_i32_1 = arith.constant 0 : i32
    return %c0_i32, %c0_i32_0 : i32, i32
  }
  func.func @transform_5(%arg0: i32) -> (i32, i32) {
    %c0_i32 = arith.constant 0 : i32
    %c0_i32_0 = arith.constant 0 : i32
    %c0_i32_1 = arith.constant 0 : i32
    return %c0_i32, %c0_i32_0 : i32, i32
  }
}

module attributes {stable_mosaic.version = 11 : i64} {
  func.func @_conv_bn_kernel(%arg0: i32, %arg1: memref<32x144xbf16, #tpu.memory_space<vmem>>, %arg2: memref<144x32xbf16, #tpu.memory_space<vmem>>, %arg3: memref<32x1xf32, #tpu.memory_space<vmem>>, %arg4: memref<32x1xf32, #tpu.memory_space<vmem>>, %arg5: memref<32x1xf32, #tpu.memory_space<vmem>>, %arg6: memref<32x32xbf16, #tpu.memory_space<vmem>>) attributes {dimension_semantics = [#tpu.dimension_semantics<arbitrary>], iteration_bounds = array<i64: 1>, scalar_prefetch = 0 : i64, scratch_operands = 0 : i64, tpu.core_type = #tpu.core_type<tc>, window_params = [{pipeline_mode = #tpu.pipeline_mode<synchronous>, transform_indices = @transform_0, window_bounds = array<i64: 32, 144>}, {pipeline_mode = #tpu.pipeline_mode<synchronous>, transform_indices = @transform_1, window_bounds = array<i64: 144, 32>}, {pipeline_mode = #tpu.pipeline_mode<synchronous>, transform_indices = @transform_2, window_bounds = array<i64: 32, 1>}, {pipeline_mode = #tpu.pipeline_mode<synchronous>, transform_indices = @transform_3, window_bounds = array<i64: 32, 1>}, {pipeline_mode = #tpu.pipeline_mode<synchronous>, transform_indices = @transform_4, window_bounds = array<i64: 32, 1>}, {pipeline_mode = #tpu.pipeline_mode<synchronous>, transform_indices = @transform_5, window_bounds = array<i64: 32, 32>}]} {
    %c0 = arith.constant 0 : index
    %c0_0 = arith.constant 0 : index
    %0 = vector.load %arg1[%c0, %c0_0] : memref<32x144xbf16, #tpu.memory_space<vmem>>, vector<32x144xbf16>
    %c0_1 = arith.constant 0 : index
    %c0_2 = arith.constant 0 : index
    %1 = vector.load %arg2[%c0_1, %c0_2] : memref<144x32xbf16, #tpu.memory_space<vmem>>, vector<144x32xbf16>
    %cst = arith.constant dense<0.000000e+00> : vector<32x32xf32>
    %2 = tpu.matmul %0, %1, %cst {dimension_numbers = #tpu.dot_dimension_numbers<[1], [0], [0], [1], [0, 0, 1, 1], [], []>} : vector<32x144xbf16>, vector<144x32xbf16>, vector<32x32xf32> -> vector<32x32xf32>
    %c0_3 = arith.constant 0 : index
    %c0_4 = arith.constant 0 : index
    %3 = vector.load %arg3[%c0_3, %c0_4] : memref<32x1xf32, #tpu.memory_space<vmem>>, vector<32x1xf32>
    %4 = vector.broadcast %3 : vector<32x1xf32> to vector<32x32xf32>
    %5 = arith.addf %2, %4 : vector<32x32xf32>
    %cst_5 = arith.constant dense<0.000000e+00> : vector<32xf32>
    %6 = vector.multi_reduction <add>, %5, %cst_5 [1] : vector<32x32xf32> to vector<32xf32>
    %7 = vector.shape_cast %6 : vector<32xf32> to vector<32x1xf32>
    %cst_6 = arith.constant 3.125000e-02 : f32
    %8 = vector.broadcast %cst_6 : f32 to vector<32x1xf32>
    %9 = arith.mulf %7, %8 : vector<32x1xf32>
    %10 = vector.broadcast %9 : vector<32x1xf32> to vector<32x32xf32>
    %11 = arith.subf %5, %10 : vector<32x32xf32>
    %12 = arith.mulf %11, %11 : vector<32x32xf32>
    %cst_7 = arith.constant dense<0.000000e+00> : vector<32xf32>
    %13 = vector.multi_reduction <add>, %12, %cst_7 [1] : vector<32x32xf32> to vector<32xf32>
    %14 = vector.shape_cast %13 : vector<32xf32> to vector<32x1xf32>
    %cst_8 = arith.constant 3.125000e-02 : f32
    %15 = vector.broadcast %cst_8 : f32 to vector<32x1xf32>
    %16 = arith.mulf %14, %15 : vector<32x1xf32>
    %c0_9 = arith.constant 0 : index
    %c0_10 = arith.constant 0 : index
    %17 = vector.load %arg4[%c0_9, %c0_10] : memref<32x1xf32, #tpu.memory_space<vmem>>, vector<32x1xf32>
    %cst_11 = arith.constant 9.99999974E-6 : f32
    %18 = vector.broadcast %cst_11 : f32 to vector<32x1xf32>
    %19 = arith.addf %16, %18 : vector<32x1xf32>
    %20 = math.rsqrt %19 : vector<32x1xf32>
    %21 = arith.mulf %17, %20 : vector<32x1xf32>
    %22 = vector.broadcast %21 : vector<32x1xf32> to vector<32x32xf32>
    %23 = arith.mulf %11, %22 : vector<32x32xf32>
    %c0_12 = arith.constant 0 : index
    %c0_13 = arith.constant 0 : index
    %24 = vector.load %arg5[%c0_12, %c0_13] : memref<32x1xf32, #tpu.memory_space<vmem>>, vector<32x1xf32>
    %25 = vector.broadcast %24 : vector<32x1xf32> to vector<32x32xf32>
    %26 = arith.addf %23, %25 : vector<32x32xf32>
    %cst_14 = arith.constant 0.000000e+00 : f32
    %27 = vector.broadcast %cst_14 : f32 to vector<32x32xf32>
    %28 = arith.maximumf %26, %27 : vector<32x32xf32>
    %29 = arith.truncf %28 : vector<32x32xf32> to vector<32x32xbf16>
    %c0_15 = arith.constant 0 : index
    %c0_16 = arith.constant 0 : index
    %30 = vector.load %arg6[%c0_15, %c0_16] : memref<32x32xbf16, #tpu.memory_space<vmem>>, vector<32x32xbf16>
    tpu.vector_store %arg6[%c0_15, %c0_16], %29 {strides = array<i32>} : memref<32x32xbf16, #tpu.memory_space<vmem>>, vector<32x32xbf16>,
    return
  }
  func.func @transform_0(%arg0: i32) -> (i32, i32) {
    %c0_i32 = arith.constant 0 : i32
    %c0_i32_0 = arith.constant 0 : i32
    %c0_i32_1 = arith.constant 0 : i32
    return %c0_i32, %c0_i32_0 : i32, i32
  }
  func.func @transform_1(%arg0: i32) -> (i32, i32) {
    %c0_i32 = arith.constant 0 : i32
    %c0_i32_0 = arith.constant 0 : i32
    %c0_i32_1 = arith.constant 0 : i32
    return %c0_i32, %c0_i32_0 : i32, i32
  }
  func.func @transform_2(%arg0: i32) -> (i32, i32) {
    %c0_i32 = arith.constant 0 : i32
    %c0_i32_0 = arith.constant 0 : i32
    %c0_i32_1 = arith.constant 0 : i32
    return %c0_i32, %c0_i32_0 : i32, i32
  }
  func.func @transform_3(%arg0: i32) -> (i32, i32) {
    %c0_i32 = arith.constant 0 : i32
    %c0_i32_0 = arith.constant 0 : i32
    %c0_i32_1 = arith.constant 0 : i32
    return %c0_i32, %c0_i32_0 : i32, i32
  }
  func.func @transform_4(%arg0: i32) -> (i32, i32) {
    %c0_i32 = arith.constant 0 : i32
    %c0_i32_0 = arith.constant 0 : i32
    %c0_i32_1 = arith.constant 0 : i32
    return %c0_i32, %c0_i32_0 : i32, i32
  }
  func.func @transform_5(%arg0: i32) -> (i32, i32) {
    %c0_i32 = arith.constant 0 : i32
    %c0_i32_0 = arith.constant 0 : i32
    %c0_i32_1 = arith.constant 0 : i32
    return %c0_i32, %c0_i32_0 : i32, i32
  }
}

module attributes {stable_mosaic.version = 11 : i64} {
  func.func @_conv_bn_kernel(%arg0: i32, %arg1: memref<32x288xbf16, #tpu.memory_space<vmem>>, %arg2: memref<288x32xbf16, #tpu.memory_space<vmem>>, %arg3: memref<32x1xf32, #tpu.memory_space<vmem>>, %arg4: memref<32x1xf32, #tpu.memory_space<vmem>>, %arg5: memref<32x1xf32, #tpu.memory_space<vmem>>, %arg6: memref<32x32xbf16, #tpu.memory_space<vmem>>) attributes {dimension_semantics = [#tpu.dimension_semantics<arbitrary>], iteration_bounds = array<i64: 1>, scalar_prefetch = 0 : i64, scratch_operands = 0 : i64, tpu.core_type = #tpu.core_type<tc>, window_params = [{pipeline_mode = #tpu.pipeline_mode<synchronous>, transform_indices = @transform_0, window_bounds = array<i64: 32, 288>}, {pipeline_mode = #tpu.pipeline_mode<synchronous>, transform_indices = @transform_1, window_bounds = array<i64: 288, 32>}, {pipeline_mode = #tpu.pipeline_mode<synchronous>, transform_indices = @transform_2, window_bounds = array<i64: 32, 1>}, {pipeline_mode = #tpu.pipeline_mode<synchronous>, transform_indices = @transform_3, window_bounds = array<i64: 32, 1>}, {pipeline_mode = #tpu.pipeline_mode<synchronous>, transform_indices = @transform_4, window_bounds = array<i64: 32, 1>}, {pipeline_mode = #tpu.pipeline_mode<synchronous>, transform_indices = @transform_5, window_bounds = array<i64: 32, 32>}]} {
    %c0 = arith.constant 0 : index
    %c0_0 = arith.constant 0 : index
    %0 = vector.load %arg1[%c0, %c0_0] : memref<32x288xbf16, #tpu.memory_space<vmem>>, vector<32x288xbf16>
    %c0_1 = arith.constant 0 : index
    %c0_2 = arith.constant 0 : index
    %1 = vector.load %arg2[%c0_1, %c0_2] : memref<288x32xbf16, #tpu.memory_space<vmem>>, vector<288x32xbf16>
    %cst = arith.constant dense<0.000000e+00> : vector<32x32xf32>
    %2 = tpu.matmul %0, %1, %cst {dimension_numbers = #tpu.dot_dimension_numbers<[1], [0], [0], [1], [0, 0, 1, 1], [], []>} : vector<32x288xbf16>, vector<288x32xbf16>, vector<32x32xf32> -> vector<32x32xf32>
    %c0_3 = arith.constant 0 : index
    %c0_4 = arith.constant 0 : index
    %3 = vector.load %arg3[%c0_3, %c0_4] : memref<32x1xf32, #tpu.memory_space<vmem>>, vector<32x1xf32>
    %4 = vector.broadcast %3 : vector<32x1xf32> to vector<32x32xf32>
    %5 = arith.addf %2, %4 : vector<32x32xf32>
    %cst_5 = arith.constant dense<0.000000e+00> : vector<32xf32>
    %6 = vector.multi_reduction <add>, %5, %cst_5 [1] : vector<32x32xf32> to vector<32xf32>
    %7 = vector.shape_cast %6 : vector<32xf32> to vector<32x1xf32>
    %cst_6 = arith.constant 3.125000e-02 : f32
    %8 = vector.broadcast %cst_6 : f32 to vector<32x1xf32>
    %9 = arith.mulf %7, %8 : vector<32x1xf32>
    %10 = vector.broadcast %9 : vector<32x1xf32> to vector<32x32xf32>
    %11 = arith.subf %5, %10 : vector<32x32xf32>
    %12 = arith.mulf %11, %11 : vector<32x32xf32>
    %cst_7 = arith.constant dense<0.000000e+00> : vector<32xf32>
    %13 = vector.multi_reduction <add>, %12, %cst_7 [1] : vector<32x32xf32> to vector<32xf32>
    %14 = vector.shape_cast %13 : vector<32xf32> to vector<32x1xf32>
    %cst_8 = arith.constant 3.125000e-02 : f32
    %15 = vector.broadcast %cst_8 : f32 to vector<32x1xf32>
    %16 = arith.mulf %14, %15 : vector<32x1xf32>
    %c0_9 = arith.constant 0 : index
    %c0_10 = arith.constant 0 : index
    %17 = vector.load %arg4[%c0_9, %c0_10] : memref<32x1xf32, #tpu.memory_space<vmem>>, vector<32x1xf32>
    %cst_11 = arith.constant 9.99999974E-6 : f32
    %18 = vector.broadcast %cst_11 : f32 to vector<32x1xf32>
    %19 = arith.addf %16, %18 : vector<32x1xf32>
    %20 = math.rsqrt %19 : vector<32x1xf32>
    %21 = arith.mulf %17, %20 : vector<32x1xf32>
    %22 = vector.broadcast %21 : vector<32x1xf32> to vector<32x32xf32>
    %23 = arith.mulf %11, %22 : vector<32x32xf32>
    %c0_12 = arith.constant 0 : index
    %c0_13 = arith.constant 0 : index
    %24 = vector.load %arg5[%c0_12, %c0_13] : memref<32x1xf32, #tpu.memory_space<vmem>>, vector<32x1xf32>
    %25 = vector.broadcast %24 : vector<32x1xf32> to vector<32x32xf32>
    %26 = arith.addf %23, %25 : vector<32x32xf32>
    %cst_14 = arith.constant 0.000000e+00 : f32
    %27 = vector.broadcast %cst_14 : f32 to vector<32x32xf32>
    %28 = arith.maximumf %26, %27 : vector<32x32xf32>
    %29 = arith.truncf %28 : vector<32x32xf32> to vector<32x32xbf16>
    %c0_15 = arith.constant 0 : index
    %c0_16 = arith.constant 0 : index
    %30 = vector.load %arg6[%c0_15, %c0_16] : memref<32x32xbf16, #tpu.memory_space<vmem>>, vector<32x32xbf16>
    tpu.vector_store %arg6[%c0_15, %c0_16], %29 {strides = array<i32>} : memref<32x32xbf16, #tpu.memory_space<vmem>>, vector<32x32xbf16>,
    return
  }
  func.func @transform_0(%arg0: i32) -> (i32, i32) {
    %c0_i32 = arith.constant 0 : i32
    %c0_i32_0 = arith.constant 0 : i32
    %c0_i32_1 = arith.constant 0 : i32
    return %c0_i32, %c0_i32_0 : i32, i32
  }
  func.func @transform_1(%arg0: i32) -> (i32, i32) {
    %c0_i32 = arith.constant 0 : i32
    %c0_i32_0 = arith.constant 0 : i32
    %c0_i32_1 = arith.constant 0 : i32
    return %c0_i32, %c0_i32_0 : i32, i32
  }
  func.func @transform_2(%arg0: i32) -> (i32, i32) {
    %c0_i32 = arith.constant 0 : i32
    %c0_i32_0 = arith.constant 0 : i32
    %c0_i32_1 = arith.constant 0 : i32
    return %c0_i32, %c0_i32_0 : i32, i32
  }
  func.func @transform_3(%arg0: i32) -> (i32, i32) {
    %c0_i32 = arith.constant 0 : i32
    %c0_i32_0 = arith.constant 0 : i32
    %c0_i32_1 = arith.constant 0 : i32
    return %c0_i32, %c0_i32_0 : i32, i32
  }
  func.func @transform_4(%arg0: i32) -> (i32, i32) {
    %c0_i32 = arith.constant 0 : i32
    %c0_i32_0 = arith.constant 0 : i32
    %c0_i32_1 = arith.constant 0 : i32
    return %c0_i32, %c0_i32_0 : i32, i32
  }
  func.func @transform_5(%arg0: i32) -> (i32, i32) {
    %c0_i32 = arith.constant 0 : i32
    %c0_i32_0 = arith.constant 0 : i32
    %c0_i32_1 = arith.constant 0 : i32
    return %c0_i32, %c0_i32_0 : i32, i32
  }
}

module attributes {stable_mosaic.version = 11 : i64} {
  func.func @_conv_bn_res_kernel(%arg0: i32, %arg1: memref<32x288xbf16, #tpu.memory_space<vmem>>, %arg2: memref<288x32xbf16, #tpu.memory_space<vmem>>, %arg3: memref<32x1xf32, #tpu.memory_space<vmem>>, %arg4: memref<32x1xf32, #tpu.memory_space<vmem>>, %arg5: memref<32x1xf32, #tpu.memory_space<vmem>>, %arg6: memref<32x32xbf16, #tpu.memory_space<vmem>>, %arg7: memref<32x32xbf16, #tpu.memory_space<vmem>>) attributes {dimension_semantics = [#tpu.dimension_semantics<arbitrary>], iteration_bounds = array<i64: 1>, scalar_prefetch = 0 : i64, scratch_operands = 0 : i64, tpu.core_type = #tpu.core_type<tc>, window_params = [{pipeline_mode = #tpu.pipeline_mode<synchronous>, transform_indices = @transform_0, window_bounds = array<i64: 32, 288>}, {pipeline_mode = #tpu.pipeline_mode<synchronous>, transform_indices = @transform_1, window_bounds = array<i64: 288, 32>}, {pipeline_mode = #tpu.pipeline_mode<synchronous>, transform_indices = @transform_2, window_bounds = array<i64: 32, 1>}, {pipeline_mode = #tpu.pipeline_mode<synchronous>, transform_indices = @transform_3, window_bounds = array<i64: 32, 1>}, {pipeline_mode = #tpu.pipeline_mode<synchronous>, transform_indices = @transform_4, window_bounds = array<i64: 32, 1>}, {pipeline_mode = #tpu.pipeline_mode<synchronous>, transform_indices = @transform_5, window_bounds = array<i64: 32, 32>}, {pipeline_mode = #tpu.pipeline_mode<synchronous>, transform_indices = @transform_6, window_bounds = array<i64: 32, 32>}]} {
    %c0 = arith.constant 0 : index
    %c0_0 = arith.constant 0 : index
    %0 = vector.load %arg1[%c0, %c0_0] : memref<32x288xbf16, #tpu.memory_space<vmem>>, vector<32x288xbf16>
    %c0_1 = arith.constant 0 : index
    %c0_2 = arith.constant 0 : index
    %1 = vector.load %arg2[%c0_1, %c0_2] : memref<288x32xbf16, #tpu.memory_space<vmem>>, vector<288x32xbf16>
    %cst = arith.constant dense<0.000000e+00> : vector<32x32xf32>
    %2 = tpu.matmul %0, %1, %cst {dimension_numbers = #tpu.dot_dimension_numbers<[1], [0], [0], [1], [0, 0, 1, 1], [], []>} : vector<32x288xbf16>, vector<288x32xbf16>, vector<32x32xf32> -> vector<32x32xf32>
    %c0_3 = arith.constant 0 : index
    %c0_4 = arith.constant 0 : index
    %3 = vector.load %arg3[%c0_3, %c0_4] : memref<32x1xf32, #tpu.memory_space<vmem>>, vector<32x1xf32>
    %4 = vector.broadcast %3 : vector<32x1xf32> to vector<32x32xf32>
    %5 = arith.addf %2, %4 : vector<32x32xf32>
    %cst_5 = arith.constant dense<0.000000e+00> : vector<32xf32>
    %6 = vector.multi_reduction <add>, %5, %cst_5 [1] : vector<32x32xf32> to vector<32xf32>
    %7 = vector.shape_cast %6 : vector<32xf32> to vector<32x1xf32>
    %cst_6 = arith.constant 3.125000e-02 : f32
    %8 = vector.broadcast %cst_6 : f32 to vector<32x1xf32>
    %9 = arith.mulf %7, %8 : vector<32x1xf32>
    %10 = vector.broadcast %9 : vector<32x1xf32> to vector<32x32xf32>
    %11 = arith.subf %5, %10 : vector<32x32xf32>
    %12 = arith.mulf %11, %11 : vector<32x32xf32>
    %cst_7 = arith.constant dense<0.000000e+00> : vector<32xf32>
    %13 = vector.multi_reduction <add>, %12, %cst_7 [1] : vector<32x32xf32> to vector<32xf32>
    %14 = vector.shape_cast %13 : vector<32xf32> to vector<32x1xf32>
    %cst_8 = arith.constant 3.125000e-02 : f32
    %15 = vector.broadcast %cst_8 : f32 to vector<32x1xf32>
    %16 = arith.mulf %14, %15 : vector<32x1xf32>
    %c0_9 = arith.constant 0 : index
    %c0_10 = arith.constant 0 : index
    %17 = vector.load %arg4[%c0_9, %c0_10] : memref<32x1xf32, #tpu.memory_space<vmem>>, vector<32x1xf32>
    %cst_11 = arith.constant 9.99999974E-6 : f32
    %18 = vector.broadcast %cst_11 : f32 to vector<32x1xf32>
    %19 = arith.addf %16, %18 : vector<32x1xf32>
    %20 = math.rsqrt %19 : vector<32x1xf32>
    %21 = arith.mulf %17, %20 : vector<32x1xf32>
    %22 = vector.broadcast %21 : vector<32x1xf32> to vector<32x32xf32>
    %23 = arith.mulf %11, %22 : vector<32x32xf32>
    %c0_12 = arith.constant 0 : index
    %c0_13 = arith.constant 0 : index
    %24 = vector.load %arg5[%c0_12, %c0_13] : memref<32x1xf32, #tpu.memory_space<vmem>>, vector<32x1xf32>
    %25 = vector.broadcast %24 : vector<32x1xf32> to vector<32x32xf32>
    %26 = arith.addf %23, %25 : vector<32x32xf32>
    %c0_14 = arith.constant 0 : index
    %c0_15 = arith.constant 0 : index
    %27 = vector.load %arg6[%c0_14, %c0_15] : memref<32x32xbf16, #tpu.memory_space<vmem>>, vector<32x32xbf16>
    %28 = arith.extf %27 : vector<32x32xbf16> to vector<32x32xf32>
    %29 = arith.addf %26, %28 : vector<32x32xf32>
    %30 = arith.truncf %29 : vector<32x32xf32> to vector<32x32xbf16>
    %c0_16 = arith.constant 0 : index
    %c0_17 = arith.constant 0 : index
    %31 = vector.load %arg7[%c0_16, %c0_17] : memref<32x32xbf16, #tpu.memory_space<vmem>>, vector<32x32xbf16>
    tpu.vector_store %arg7[%c0_16, %c0_17], %30 {strides = array<i32>} : memref<32x32xbf16, #tpu.memory_space<vmem>>, vector<32x32xbf16>,
    return
  }
  func.func @transform_0(%arg0: i32) -> (i32, i32) {
    %c0_i32 = arith.constant 0 : i32
    %c0_i32_0 = arith.constant 0 : i32
    %c0_i32_1 = arith.constant 0 : i32
    return %c0_i32, %c0_i32_0 : i32, i32
  }
  func.func @transform_1(%arg0: i32) -> (i32, i32) {
    %c0_i32 = arith.constant 0 : i32
    %c0_i32_0 = arith.constant 0 : i32
    %c0_i32_1 = arith.constant 0 : i32
    return %c0_i32, %c0_i32_0 : i32, i32
  }
  func.func @transform_2(%arg0: i32) -> (i32, i32) {
    %c0_i32 = arith.constant 0 : i32
    %c0_i32_0 = arith.constant 0 : i32
    %c0_i32_1 = arith.constant 0 : i32
    return %c0_i32, %c0_i32_0 : i32, i32
  }
  func.func @transform_3(%arg0: i32) -> (i32, i32) {
    %c0_i32 = arith.constant 0 : i32
    %c0_i32_0 = arith.constant 0 : i32
    %c0_i32_1 = arith.constant 0 : i32
    return %c0_i32, %c0_i32_0 : i32, i32
  }
  func.func @transform_4(%arg0: i32) -> (i32, i32) {
    %c0_i32 = arith.constant 0 : i32
    %c0_i32_0 = arith.constant 0 : i32
    %c0_i32_1 = arith.constant 0 : i32
    return %c0_i32, %c0_i32_0 : i32, i32
  }
  func.func @transform_5(%arg0: i32) -> (i32, i32) {
    %c0_i32 = arith.constant 0 : i32
    %c0_i32_0 = arith.constant 0 : i32
    %c0_i32_1 = arith.constant 0 : i32
    return %c0_i32, %c0_i32_0 : i32, i32
  }
  func.func @transform_6(%arg0: i32) -> (i32, i32) {
    %c0_i32 = arith.constant 0 : i32
    %c0_i32_0 = arith.constant 0 : i32
    %c0_i32_1 = arith.constant 0 : i32
    return %c0_i32, %c0_i32_0 : i32, i32
  }
}

module attributes {stable_mosaic.version = 11 : i64} {
  func.func @_conv_bn_kernel(%arg0: i32, %arg1: memref<16x288xbf16, #tpu.memory_space<vmem>>, %arg2: memref<288x98xbf16, #tpu.memory_space<vmem>>, %arg3: memref<16x1xf32, #tpu.memory_space<vmem>>, %arg4: memref<16x1xf32, #tpu.memory_space<vmem>>, %arg5: memref<16x1xf32, #tpu.memory_space<vmem>>, %arg6: memref<16x98xbf16, #tpu.memory_space<vmem>>) attributes {dimension_semantics = [#tpu.dimension_semantics<arbitrary>], iteration_bounds = array<i64: 1>, scalar_prefetch = 0 : i64, scratch_operands = 0 : i64, tpu.core_type = #tpu.core_type<tc>, window_params = [{pipeline_mode = #tpu.pipeline_mode<synchronous>, transform_indices = @transform_0, window_bounds = array<i64: 16, 288>}, {pipeline_mode = #tpu.pipeline_mode<synchronous>, transform_indices = @transform_1, window_bounds = array<i64: 288, 98>}, {pipeline_mode = #tpu.pipeline_mode<synchronous>, transform_indices = @transform_2, window_bounds = array<i64: 16, 1>}, {pipeline_mode = #tpu.pipeline_mode<synchronous>, transform_indices = @transform_3, window_bounds = array<i64: 16, 1>}, {pipeline_mode = #tpu.pipeline_mode<synchronous>, transform_indices = @transform_4, window_bounds = array<i64: 16, 1>}, {pipeline_mode = #tpu.pipeline_mode<synchronous>, transform_indices = @transform_5, window_bounds = array<i64: 16, 98>}]} {
    %c0 = arith.constant 0 : index
    %c0_0 = arith.constant 0 : index
    %0 = vector.load %arg1[%c0, %c0_0] : memref<16x288xbf16, #tpu.memory_space<vmem>>, vector<16x288xbf16>
    %c0_1 = arith.constant 0 : index
    %c0_2 = arith.constant 0 : index
    %1 = vector.load %arg2[%c0_1, %c0_2] : memref<288x98xbf16, #tpu.memory_space<vmem>>, vector<288x98xbf16>
    %cst = arith.constant dense<0.000000e+00> : vector<16x98xf32>
    %2 = tpu.matmul %0, %1, %cst {dimension_numbers = #tpu.dot_dimension_numbers<[1], [0], [0], [1], [0, 0, 1, 1], [], []>} : vector<16x288xbf16>, vector<288x98xbf16>, vector<16x98xf32> -> vector<16x98xf32>
    %c0_3 = arith.constant 0 : index
    %c0_4 = arith.constant 0 : index
    %3 = vector.load %arg3[%c0_3, %c0_4] : memref<16x1xf32, #tpu.memory_space<vmem>>, vector<16x1xf32>
    %4 = vector.broadcast %3 : vector<16x1xf32> to vector<16x98xf32>
    %5 = arith.addf %2, %4 : vector<16x98xf32>
    %cst_5 = arith.constant dense<0.000000e+00> : vector<16xf32>
    %6 = vector.multi_reduction <add>, %5, %cst_5 [1] : vector<16x98xf32> to vector<16xf32>
    %7 = vector.shape_cast %6 : vector<16xf32> to vector<16x1xf32>
    %cst_6 = arith.constant 0.0102040814 : f32
    %8 = vector.broadcast %cst_6 : f32 to vector<16x1xf32>
    %9 = arith.mulf %7, %8 : vector<16x1xf32>
    %10 = vector.broadcast %9 : vector<16x1xf32> to vector<16x98xf32>
    %11 = arith.subf %5, %10 : vector<16x98xf32>
    %12 = arith.mulf %11, %11 : vector<16x98xf32>
    %cst_7 = arith.constant dense<0.000000e+00> : vector<16xf32>
    %13 = vector.multi_reduction <add>, %12, %cst_7 [1] : vector<16x98xf32> to vector<16xf32>
    %14 = vector.shape_cast %13 : vector<16xf32> to vector<16x1xf32>
    %cst_8 = arith.constant 0.0102040814 : f32
    %15 = vector.broadcast %cst_8 : f32 to vector<16x1xf32>
    %16 = arith.mulf %14, %15 : vector<16x1xf32>
    %c0_9 = arith.constant 0 : index
    %c0_10 = arith.constant 0 : index
    %17 = vector.load %arg4[%c0_9, %c0_10] : memref<16x1xf32, #tpu.memory_space<vmem>>, vector<16x1xf32>
    %cst_11 = arith.constant 9.99999974E-6 : f32
    %18 = vector.broadcast %cst_11 : f32 to vector<16x1xf32>
    %19 = arith.addf %16, %18 : vector<16x1xf32>
    %20 = math.rsqrt %19 : vector<16x1xf32>
    %21 = arith.mulf %17, %20 : vector<16x1xf32>
    %22 = vector.broadcast %21 : vector<16x1xf32> to vector<16x98xf32>
    %23 = arith.mulf %11, %22 : vector<16x98xf32>
    %c0_12 = arith.constant 0 : index
    %c0_13 = arith.constant 0 : index
    %24 = vector.load %arg5[%c0_12, %c0_13] : memref<16x1xf32, #tpu.memory_space<vmem>>, vector<16x1xf32>
    %25 = vector.broadcast %24 : vector<16x1xf32> to vector<16x98xf32>
    %26 = arith.addf %23, %25 : vector<16x98xf32>
    %27 = arith.truncf %26 : vector<16x98xf32> to vector<16x98xbf16>
    %c0_14 = arith.constant 0 : index
    %c0_15 = arith.constant 0 : index
    %28 = vector.load %arg6[%c0_14, %c0_15] : memref<16x98xbf16, #tpu.memory_space<vmem>>, vector<16x98xbf16>
    tpu.vector_store %arg6[%c0_14, %c0_15], %27 {strides = array<i32>} : memref<16x98xbf16, #tpu.memory_space<vmem>>, vector<16x98xbf16>,
    return
  }
  func.func @transform_0(%arg0: i32) -> (i32, i32) {
    %c0_i32 = arith.constant 0 : i32
    %c0_i32_0 = arith.constant 0 : i32
    %c0_i32_1 = arith.constant 0 : i32
    return %c0_i32, %c0_i32_0 : i32, i32
  }
  func.func @transform_1(%arg0: i32) -> (i32, i32) {
    %c0_i32 = arith.constant 0 : i32
    %c0_i32_0 = arith.constant 0 : i32
    %c0_i32_1 = arith.constant 0 : i32
    return %c0_i32, %c0_i32_0 : i32, i32
  }
  func.func @transform_2(%arg0: i32) -> (i32, i32) {
    %c0_i32 = arith.constant 0 : i32
    %c0_i32_0 = arith.constant 0 : i32
    %c0_i32_1 = arith.constant 0 : i32
    return %c0_i32, %c0_i32_0 : i32, i32
  }
  func.func @transform_3(%arg0: i32) -> (i32, i32) {
    %c0_i32 = arith.constant 0 : i32
    %c0_i32_0 = arith.constant 0 : i32
    %c0_i32_1 = arith.constant 0 : i32
    return %c0_i32, %c0_i32_0 : i32, i32
  }
  func.func @transform_4(%arg0: i32) -> (i32, i32) {
    %c0_i32 = arith.constant 0 : i32
    %c0_i32_0 = arith.constant 0 : i32
    %c0_i32_1 = arith.constant 0 : i32
    return %c0_i32, %c0_i32_0 : i32, i32
  }
  func.func @transform_5(%arg0: i32) -> (i32, i32) {
    %c0_i32 = arith.constant 0 : i32
    %c0_i32_0 = arith.constant 0 : i32
    %c0_i32_1 = arith.constant 0 : i32
    return %c0_i32, %c0_i32_0 : i32, i32
  }
}

module attributes {stable_mosaic.version = 11 : i64} {
  func.func @_conv_bn_kernel(%arg0: i32, %arg1: memref<8x144xbf16, #tpu.memory_space<vmem>>, %arg2: memref<144x450xbf16, #tpu.memory_space<vmem>>, %arg3: memref<8x1xf32, #tpu.memory_space<vmem>>, %arg4: memref<8x1xf32, #tpu.memory_space<vmem>>, %arg5: memref<8x1xf32, #tpu.memory_space<vmem>>, %arg6: memref<8x450xbf16, #tpu.memory_space<vmem>>) attributes {dimension_semantics = [#tpu.dimension_semantics<arbitrary>], iteration_bounds = array<i64: 1>, scalar_prefetch = 0 : i64, scratch_operands = 0 : i64, tpu.core_type = #tpu.core_type<tc>, window_params = [{pipeline_mode = #tpu.pipeline_mode<synchronous>, transform_indices = @transform_0, window_bounds = array<i64: 8, 144>}, {pipeline_mode = #tpu.pipeline_mode<synchronous>, transform_indices = @transform_1, window_bounds = array<i64: 144, 450>}, {pipeline_mode = #tpu.pipeline_mode<synchronous>, transform_indices = @transform_2, window_bounds = array<i64: 8, 1>}, {pipeline_mode = #tpu.pipeline_mode<synchronous>, transform_indices = @transform_3, window_bounds = array<i64: 8, 1>}, {pipeline_mode = #tpu.pipeline_mode<synchronous>, transform_indices = @transform_4, window_bounds = array<i64: 8, 1>}, {pipeline_mode = #tpu.pipeline_mode<synchronous>, transform_indices = @transform_5, window_bounds = array<i64: 8, 450>}]} {
    %c0 = arith.constant 0 : index
    %c0_0 = arith.constant 0 : index
    %0 = vector.load %arg1[%c0, %c0_0] : memref<8x144xbf16, #tpu.memory_space<vmem>>, vector<8x144xbf16>
    %c0_1 = arith.constant 0 : index
    %c0_2 = arith.constant 0 : index
    %1 = vector.load %arg2[%c0_1, %c0_2] : memref<144x450xbf16, #tpu.memory_space<vmem>>, vector<144x450xbf16>
    %cst = arith.constant dense<0.000000e+00> : vector<8x450xf32>
    %2 = tpu.matmul %0, %1, %cst {dimension_numbers = #tpu.dot_dimension_numbers<[1], [0], [0], [1], [0, 0, 1, 1], [], []>} : vector<8x144xbf16>, vector<144x450xbf16>, vector<8x450xf32> -> vector<8x450xf32>
    %c0_3 = arith.constant 0 : index
    %c0_4 = arith.constant 0 : index
    %3 = vector.load %arg3[%c0_3, %c0_4] : memref<8x1xf32, #tpu.memory_space<vmem>>, vector<8x1xf32>
    %4 = vector.broadcast %3 : vector<8x1xf32> to vector<8x450xf32>
    %5 = arith.addf %2, %4 : vector<8x450xf32>
    %cst_5 = arith.constant dense<0.000000e+00> : vector<8xf32>
    %6 = vector.multi_reduction <add>, %5, %cst_5 [1] : vector<8x450xf32> to vector<8xf32>
    %7 = vector.shape_cast %6 : vector<8xf32> to vector<8x1xf32>
    %cst_6 = arith.constant 0.00222222228 : f32
    %8 = vector.broadcast %cst_6 : f32 to vector<8x1xf32>
    %9 = arith.mulf %7, %8 : vector<8x1xf32>
    %10 = vector.broadcast %9 : vector<8x1xf32> to vector<8x450xf32>
    %11 = arith.subf %5, %10 : vector<8x450xf32>
    %12 = arith.mulf %11, %11 : vector<8x450xf32>
    %cst_7 = arith.constant dense<0.000000e+00> : vector<8xf32>
    %13 = vector.multi_reduction <add>, %12, %cst_7 [1] : vector<8x450xf32> to vector<8xf32>
    %14 = vector.shape_cast %13 : vector<8xf32> to vector<8x1xf32>
    %cst_8 = arith.constant 0.00222222228 : f32
    %15 = vector.broadcast %cst_8 : f32 to vector<8x1xf32>
    %16 = arith.mulf %14, %15 : vector<8x1xf32>
    %c0_9 = arith.constant 0 : index
    %c0_10 = arith.constant 0 : index
    %17 = vector.load %arg4[%c0_9, %c0_10] : memref<8x1xf32, #tpu.memory_space<vmem>>, vector<8x1xf32>
    %cst_11 = arith.constant 9.99999974E-6 : f32
    %18 = vector.broadcast %cst_11 : f32 to vector<8x1xf32>
    %19 = arith.addf %16, %18 : vector<8x1xf32>
    %20 = math.rsqrt %19 : vector<8x1xf32>
    %21 = arith.mulf %17, %20 : vector<8x1xf32>
    %22 = vector.broadcast %21 : vector<8x1xf32> to vector<8x450xf32>
    %23 = arith.mulf %11, %22 : vector<8x450xf32>
    %c0_12 = arith.constant 0 : index
    %c0_13 = arith.constant 0 : index
    %24 = vector.load %arg5[%c0_12, %c0_13] : memref<8x1xf32, #tpu.memory_space<vmem>>, vector<8x1xf32>
    %25 = vector.broadcast %24 : vector<8x1xf32> to vector<8x450xf32>
    %26 = arith.addf %23, %25 : vector<8x450xf32>
    %27 = arith.truncf %26 : vector<8x450xf32> to vector<8x450xbf16>
    %c0_14 = arith.constant 0 : index
    %c0_15 = arith.constant 0 : index
    %28 = vector.load %arg6[%c0_14, %c0_15] : memref<8x450xbf16, #tpu.memory_space<vmem>>, vector<8x450xbf16>
    tpu.vector_store %arg6[%c0_14, %c0_15], %27 {strides = array<i32>} : memref<8x450xbf16, #tpu.memory_space<vmem>>, vector<8x450xbf16>,
    return
  }
  func.func @transform_0(%arg0: i32) -> (i32, i32) {
    %c0_i32 = arith.constant 0 : i32
    %c0_i32_0 = arith.constant 0 : i32
    %c0_i32_1 = arith.constant 0 : i32
    return %c0_i32, %c0_i32_0 : i32, i32
  }
  func.func @transform_1(%arg0: i32) -> (i32, i32) {
    %c0_i32 = arith.constant 0 : i32
    %c0_i32_0 = arith.constant 0 : i32
    %c0_i32_1 = arith.constant 0 : i32
    return %c0_i32, %c0_i32_0 : i32, i32
  }
  func.func @transform_2(%arg0: i32) -> (i32, i32) {
    %c0_i32 = arith.constant 0 : i32
    %c0_i32_0 = arith.constant 0 : i32
    %c0_i32_1 = arith.constant 0 : i32
    return %c0_i32, %c0_i32_0 : i32, i32
  }
  func.func @transform_3(%arg0: i32) -> (i32, i32) {
    %c0_i32 = arith.constant 0 : i32
    %c0_i32_0 = arith.constant 0 : i32
    %c0_i32_1 = arith.constant 0 : i32
    return %c0_i32, %c0_i32_0 : i32, i32
  }
  func.func @transform_4(%arg0: i32) -> (i32, i32) {
    %c0_i32 = arith.constant 0 : i32
    %c0_i32_0 = arith.constant 0 : i32
    %c0_i32_1 = arith.constant 0 : i32
    return %c0_i32, %c0_i32_0 : i32, i32
  }
  func.func @transform_5(%arg0: i32) -> (i32, i32) {
    %c0_i32 = arith.constant 0 : i32
    %c0_i32_0 = arith.constant 0 : i32
    %c0_i32_1 = arith.constant 0 : i32
    return %c0_i32, %c0_i32_0 : i32, i32
  }
}

module attributes {stable_mosaic.version = 11 : i64} {
  func.func @_conv_bias_kernel(%arg0: i32, %arg1: memref<8x392xbf16, #tpu.memory_space<vmem>>, %arg2: memref<392x256xbf16, #tpu.memory_space<vmem>>, %arg3: memref<8x1xf32, #tpu.memory_space<vmem>>, %arg4: memref<8x256xf32, #tpu.memory_space<vmem>>) attributes {dimension_semantics = [#tpu.dimension_semantics<parallel>], iteration_bounds = array<i64: 2>, scalar_prefetch = 0 : i64, scratch_operands = 0 : i64, tpu.core_type = #tpu.core_type<tc>, window_params = [{pipeline_mode = #tpu.pipeline_mode<synchronous>, transform_indices = @transform_0, window_bounds = array<i64: 8, 392>}, {transform_indices = @transform_1, window_bounds = array<i64: 392, 256>}, {pipeline_mode = #tpu.pipeline_mode<synchronous>, transform_indices = @transform_2, window_bounds = array<i64: 8, 1>}, {transform_indices = @transform_3, window_bounds = array<i64: 8, 256>}]} {
    %c0 = arith.constant 0 : index
    %c0_0 = arith.constant 0 : index
    %0 = vector.load %arg1[%c0, %c0_0] : memref<8x392xbf16, #tpu.memory_space<vmem>>, vector<8x392xbf16>
    %c0_1 = arith.constant 0 : index
    %c0_2 = arith.constant 0 : index
    %1 = vector.load %arg2[%c0_1, %c0_2] : memref<392x256xbf16, #tpu.memory_space<vmem>>, vector<392x256xbf16>
    %cst = arith.constant dense<0.000000e+00> : vector<8x256xf32>
    %2 = tpu.matmul %0, %1, %cst {dimension_numbers = #tpu.dot_dimension_numbers<[1], [0], [0], [1], [0, 0, 1, 1], [], []>} : vector<8x392xbf16>, vector<392x256xbf16>, vector<8x256xf32> -> vector<8x256xf32>
    %c0_3 = arith.constant 0 : index
    %c0_4 = arith.constant 0 : index
    %3 = vector.load %arg3[%c0_3, %c0_4] : memref<8x1xf32, #tpu.memory_space<vmem>>, vector<8x1xf32>
    %4 = vector.broadcast %3 : vector<8x1xf32> to vector<8x256xf32>
    %5 = arith.addf %2, %4 : vector<8x256xf32>
    %c0_5 = arith.constant 0 : index
    %c0_6 = arith.constant 0 : index
    %6 = vector.load %arg4[%c0_5, %c0_6] : memref<8x256xf32, #tpu.memory_space<vmem>>, vector<8x256xf32>
    tpu.vector_store %arg4[%c0_5, %c0_6], %5 {strides = array<i32>} : memref<8x256xf32, #tpu.memory_space<vmem>>, vector<8x256xf32>,
    return
  }
  func.func @transform_0(%arg0: i32) -> (i32, i32) {
    %c0_i32 = arith.constant 0 : i32
    %c0_i32_0 = arith.constant 0 : i32
    %c0_i32_1 = arith.constant 0 : i32
    return %c0_i32, %c0_i32_0 : i32, i32
  }
  func.func @transform_1(%arg0: i32) -> (i32, i32) {
    %c0_i32 = arith.constant 0 : i32
    %c0_i32_0 = arith.constant 0 : i32
    return %c0_i32, %arg0 : i32, i32
  }
  func.func @transform_2(%arg0: i32) -> (i32, i32) {
    %c0_i32 = arith.constant 0 : i32
    %c0_i32_0 = arith.constant 0 : i32
    %c0_i32_1 = arith.constant 0 : i32
    return %c0_i32, %c0_i32_0 : i32, i32
  }
  func.func @transform_3(%arg0: i32) -> (i32, i32) {
    %c0_i32 = arith.constant 0 : i32
    %c0_i32_0 = arith.constant 0 : i32
    return %c0_i32, %arg0 : i32, i32
  }
}

</mosaic_0001>

<llo_original>
// kernel: generator_forward.10
$region0: #{generator_forward.10}
  #allocation0 [shape = 'u32[]', space=smem, size = 0x4, offset = 0x4, fixed_abs, tag = 'smem constant byte address 0x4 - core index']
  #allocation1 [shape = 'u32[72,128]{1,0:T(1,128)}', space=vmem, size = 0x9000, scoped, tag = 'internal scratch']
  %s0 = inlined_call_operand.vmem [shape: bf16[8,147], index: 0, kind: input, shape index: {}]
  %s1 = inlined_call_operand.vmem [shape: bf16[147,512], index: 1, kind: input, shape index: {}]
  %s2 = inlined_call_operand.vmem [shape: f32[8,1], index: 2, kind: input, shape index: {}, may-alias: {2,4}]
  %s3 = inlined_call_operand.vmem [shape: f32[8,1], index: 3, kind: input, shape index: {}]
  %s4 = inlined_call_operand.vmem [shape: f32[8,1], index: 4, kind: input, shape index: {}, may-alias: {2,4}]
  %s5 = inlined_call_operand.vmem [shape: bf16[8,512], index: 5, kind: output, shape index: {}]
  %s6 = sld [smem:[#allocation0]]
  $region30: #{generator_forward.10} parent=0
    _
  %s8 = ssub.s32 1, %s6
  %s9 = scalar_select 0, %s8, %s6
  // Predicated region
  $region2: #{generator_forward.10} parent=0 // pred_check
    _
  $region3: #{generator_forward.10} parent=0 // pred_check_branch
    %11 = sbr.rel (0) target = $region5
  $region4: #{generator_forward.10} parent=0 // pred_region
    _
  $region5: #{generator_forward.10} parent=0 // pred_fallthru
    _
  // Predicated region
  $region6: #{generator_forward.10} parent=0 // pred_check
    _
  $region7: #{generator_forward.10} parent=0 // pred_check_branch
    %13 = sbr.rel (0) target = $region9
  $region8: #{generator_forward.10} parent=0 // pred_region
    _
  $region9: #{generator_forward.10} parent=0 // pred_fallthru
    _
  // Predicated region
  $region10: #{generator_forward.10} parent=0 // pred_check
    _
  $region11: #{generator_forward.10} parent=0 // pred_check_branch
    %15 = sbr.rel (0) target = $region13
  $region12: #{generator_forward.10} parent=0 // pred_region
    _
  $region13: #{generator_forward.10} parent=0 // pred_fallthru
    _
  // Predicated region
  $region14: #{generator_forward.10} parent=0 // pred_check
    _
  $region15: #{generator_forward.10} parent=0 // pred_check_branch
    %17 = sbr.rel (0) target = $region17
  $region16: #{generator_forward.10} parent=0 // pred_region
    _
  $region17: #{generator_forward.10} parent=0 // pred_fallthru
    _
  // Predicated region
  $region18: #{generator_forward.10} parent=0 // pred_check
    _
  $region19: #{generator_forward.10} parent=0 // pred_check_branch
    %19 = sbr.rel (0) target = $region21
  $region20: #{generator_forward.10} parent=0 // pred_region
    _
  $region21: #{generator_forward.10} parent=0 // pred_fallthru
    _
  %v21 = vld [vmem:[%s0] sm:$0xff]
  %v22 = vld [vmem:[%s1] sm:$0xff]
  %v23 = vld [vmem:[%s1 + $0x8] sm:$0xff]
  %v24 = vld [vmem:[%s1 + $0x10] sm:$0xff]
  %v25 = vld [vmem:[%s1 + $0x18] sm:$0xff]
  %v26 = vld [vmem:[%s1 + $0x20] sm:$0xff]
  %v27 = vld [vmem:[%s1 + $0x28] sm:$0xff]
  %v28 = vld [vmem:[%s1 + $0x30] sm:$0xff]
  %v29 = vld [vmem:[%s1 + $0x38] sm:$0xff]
  %v30 = vld [vmem:[%s1 + $0x40] sm:$0xff]
  %v31 = vld [vmem:[%s1 + $0x48] sm:$0xff]
  %v32 = vld [vmem:[%s1 + $0x50] sm:$0xff]
  %v33 = vld [vmem:[%s1 + $0x58] sm:$0xff]
  %v34 = vld [vmem:[%s1 + $0x60] sm:$0xff]
  %v35 = vld [vmem:[%s1 + $0x68] sm:$0xff]
  %v36 = vld [vmem:[%s1 + $0x70] sm:$0xff]
  %v37 = vld [vmem:[%s1 + $0x78] sm:$0xff]
  %v38 = vld [vmem:[%s1 + $0x80] sm:$0xff]
  %v39 = vld [vmem:[%s1 + $0x88] sm:$0xff]
  %v40 = vld [vmem:[%s1 + $0x90] sm:$0xff]
  %v41 = vld [vmem:[%s1 + $0x98] sm:$0xff]
  %v42 = vld [vmem:[%s1 + $0xa0] sm:$0xff]
  %v43 = vld [vmem:[%s1 + $0xa8] sm:$0xff]
  %v44 = vld [vmem:[%s1 + $0xb0] sm:$0xff]
  %v45 = vld [vmem:[%s1 + $0xb8] sm:$0xff]
  %v46 = vld [vmem:[%s1 + $0xc0] sm:$0xff]
  %v47 = vld [vmem:[%s1 + $0xc8] sm:$0xff]
  %v48 = vld [vmem:[%s1 + $0xd0] sm:$0xff]
  %v49 = vld [vmem:[%s1 + $0xd8] sm:$0xff]
  %v50 = vld [vmem:[%s1 + $0xe0] sm:$0xff]
  %v51 = vld [vmem:[%s1 + $0xe8] sm:$0xff]
  %v52 = vld [vmem:[%s1 + $0xf0] sm:$0xff]
  %v53 = vld [vmem:[%s1 + $0xf8] sm:$0xff]
  %v54 = vld [vmem:[%s1 + $0x100] sm:$0xff]
  %v55 = vld [vmem:[%s1 + $0x108] sm:$0xff]
  %v56 = vld [vmem:[%s1 + $0x110] sm:$0xff]
  %v57 = vld [vmem:[%s1 + $0x118] sm:$0xff]
  %v58 = vld [vmem:[%s1 + $0x120] sm:$0x33]
  %v59 = vld [vmem:[%s1 + $0x128] sm:$0x33]
  %v60 = vld [vmem:[%s2] sm:$0xff]
  %62 = vset.pattern.permute.xlu0 0
  %63 = vperm.xlu0 %62, %v60
  %v64 = vpop.permute.xlu0 %63
  %v67 = vunpack.c.l.b16 %v21
  %v68 = vunpack.c.h.b16 %v21
  %v69 = vpack.c.b16 %v67, %v67
  %v70 = vpack.c.b16 %v68, %v68
  %v110 = vunpack.c.l.b16 %v22
  %v111 = vunpack.c.h.b16 %v22
  %v112 = vunpack.c.l.b16 %v23
  %v113 = vunpack.c.h.b16 %v23
  %v114 = vunpack.c.l.b16 %v24
  %v115 = vunpack.c.h.b16 %v24
  %v116 = vunpack.c.l.b16 %v25
  %v117 = vunpack.c.h.b16 %v25
  %v118 = vunpack.c.l.b16 %v26
  %v119 = vunpack.c.h.b16 %v26
  %v120 = vunpack.c.l.b16 %v27
  %v121 = vunpack.c.h.b16 %v27
  %v122 = vunpack.c.l.b16 %v28
  %v123 = vunpack.c.h.b16 %v28
  %v124 = vunpack.c.l.b16 %v29
  %v125 = vunpack.c.h.b16 %v29
  %v126 = vunpack.c.l.b16 %v30
  %v127 = vunpack.c.h.b16 %v30
  %v128 = vunpack.c.l.b16 %v31
  %v129 = vunpack.c.h.b16 %v31
  %v130 = vunpack.c.l.b16 %v32
  %v131 = vunpack.c.h.b16 %v32
  %v132 = vunpack.c.l.b16 %v33
  %v133 = vunpack.c.h.b16 %v33
  %v134 = vunpack.c.l.b16 %v34
  %v135 = vunpack.c.h.b16 %v34
  %v136 = vunpack.c.l.b16 %v35
  %v137 = vunpack.c.h.b16 %v35
  %v138 = vunpack.c.l.b16 %v36
  %v139 = vunpack.c.h.b16 %v36
  %v140 = vunpack.c.l.b16 %v37
  %v141 = vunpack.c.h.b16 %v37
  %v142 = vunpack.c.l.b16 %v38
  %v143 = vunpack.c.h.b16 %v38
  %v144 = vunpack.c.l.b16 %v39
  %v145 = vunpack.c.h.b16 %v39
  %v146 = vunpack.c.l.b16 %v40
  %v147 = vunpack.c.h.b16 %v40
  %v148 = vunpack.c.l.b16 %v41
  %v149 = vunpack.c.h.b16 %v41
  %v150 = vunpack.c.l.b16 %v42
  %v151 = vunpack.c.h.b16 %v42
  %v152 = vunpack.c.l.b16 %v43
  %v153 = vunpack.c.h.b16 %v43
  %v154 = vunpack.c.l.b16 %v44
  %v155 = vunpack.c.h.b16 %v44
  %v156 = vunpack.c.l.b16 %v45
  %v157 = vunpack.c.h.b16 %v45
  %v158 = vunpack.c.l.b16 %v46
  %v159 = vunpack.c.h.b16 %v46
  %v160 = vunpack.c.l.b16 %v47
  %v161 = vunpack.c.h.b16 %v47
  %v162 = vunpack.c.l.b16 %v48
  %v163 = vunpack.c.h.b16 %v48
  %v164 = vunpack.c.l.b16 %v49
  %v165 = vunpack.c.h.b16 %v49
  %v166 = vunpack.c.l.b16 %v50
  %v167 = vunpack.c.h.b16 %v50
  %v168 = vunpack.c.l.b16 %v51
  %v169 = vunpack.c.h.b16 %v51
  %v170 = vunpack.c.l.b16 %v52
  %v171 = vunpack.c.h.b16 %v52
  %v172 = vunpack.c.l.b16 %v53
  %v173 = vunpack.c.h.b16 %v53
  %v174 = vunpack.c.l.b16 %v54
  %v175 = vunpack.c.h.b16 %v54
  %v176 = vunpack.c.l.b16 %v55
  %v177 = vunpack.c.h.b16 %v55
  %v178 = vunpack.c.l.b16 %v56
  %v179 = vunpack.c.h.b16 %v56
  %v180 = vunpack.c.l.b16 %v57
  %v181 = vunpack.c.h.b16 %v57
  %v182 = vunpack.c.l.b16 %v58
  %v183 = vunpack.c.h.b16 %v58
  %v184 = vunpack.c.l.b16 %v59
  %v185 = vunpack.c.h.b16 %v59
  %v186 = vpack.c.b16 %v114, %v110
  %v187 = vpack.c.b16 %v115, %v111
  %v188 = vpack.c.b16 %v116, %v112
  %v189 = vpack.c.b16 %v117, %v113
  %v190 = vpack.c.b16 %v122, %v118
  %v191 = vpack.c.b16 %v123, %v119
  %v192 = vpack.c.b16 %v124, %v120
  %v193 = vpack.c.b16 %v125, %v121
  %v194 = vpack.c.b16 %v130, %v126
  %v195 = vpack.c.b16 %v131, %v127
  %v196 = vpack.c.b16 %v132, %v128
  %v197 = vpack.c.b16 %v133, %v129
  %v198 = vpack.c.b16 %v138, %v134
  %v199 = vpack.c.b16 %v139, %v135
  %v200 = vpack.c.b16 %v140, %v136
  %v201 = vpack.c.b16 %v141, %v137
  %v202 = vpack.c.b16 %v146, %v142
  %v203 = vpack.c.b16 %v147, %v143
  %v204 = vpack.c.b16 %v148, %v144
  %v205 = vpack.c.b16 %v149, %v145
  %v206 = vpack.c.b16 %v154, %v150
  %v207 = vpack.c.b16 %v155, %v151
  %v208 = vpack.c.b16 %v156, %v152
  %v209 = vpack.c.b16 %v157, %v153
  %v210 = vpack.c.b16 %v162, %v158
  %v211 = vpack.c.b16 %v163, %v159
  %v212 = vpack.c.b16 %v164, %v160
  %v213 = vpack.c.b16 %v165, %v161
  %v214 = vpack.c.b16 %v170, %v166
  %v215 = vpack.c.b16 %v171, %v167
  %v216 = vpack.c.b16 %v172, %v168
  %v217 = vpack.c.b16 %v173, %v169
  %v218 = vpack.c.b16 %v178, %v174
  %v219 = vpack.c.b16 %v179, %v175
  %v220 = vpack.c.b16 %v180, %v176
  %v221 = vpack.c.b16 %v181, %v177
  %v222 = vpack.c.b16 %v182, %v182
  %v223 = vpack.c.b16 %v183, %v183
  %v224 = vpack.c.b16 %v184, %v184
  %v225 = vpack.c.b16 %v185, %v185
  %vm262 = vcmask 154624
  %v264 = vsel %vm262, %v70, 0
  %vm266 = vcmask 1040384
  %vm267 = vcmask 1041408
  %v268 = vsel %vm266, 4294967295, 65535
  %v269 = vsel %vm267, %v268, 0
  %v271 = vand.u32 %v222, %v269
  %v274 = vand.u32 %v223, %v269
  %v277 = vand.u32 %v224, %v269
  %v280 = vand.u32 %v225, %v269
  %282 = vmatpush.bf16.msra.mxu0 %v214
  %283 = vmatpush.bf16.msra.mxu0 %v210
  %284 = vmatpush.bf16.msra.mxu0 %v206
  %285 = vmatpush.bf16.msra.mxu0 %v202
  %286 = vmatpush.bf16.msra.mxu0 %v198
  %287 = vmatpush.bf16.msra.mxu0 %v194
  %288 = vmatpush.bf16.msra.mxu0 %v190
  %289 = vmatpush.bf16.msra.mxu0 %v186
  %290 = vmatmul.bf16.gmra.mxu0 %v69
  %v291 = vpop.f32.mrf.mxu0
  %v292 = vadd.f32 %v64, %v291
  %v293 = vpop.f32.mrf.mxu0
  %294 = vdwg.mxu0
  %295 = vmatpush.bf16.msra.mxu0 0
  %296 = vmatpush.bf16.msra.mxu0 0
  %297 = vmatpush.bf16.msra.mxu0 0
  %298 = vmatpush.bf16.msra.mxu0 0
  %299 = vmatpush.bf16.msra.mxu0 0
  %300 = vmatpush.bf16.msra.mxu0 0
  %301 = vmatpush.bf16.msra.mxu0 %v271
  %302 = vmatpush.bf16.msra.mxu0 %v218
  %303 = vmatmul.bf16.gmra.mxu0 %v264
  %v304 = vpop.f32.mrf.mxu0
  %v305 = vadd.f32 %v292, %v304
  %v306 = vpop.f32.mrf.mxu0
  %307 = vdwg.mxu0
  %308 = vmatpush.bf16.msra.mxu0 %v215
  %309 = vmatpush.bf16.msra.mxu0 %v211
  %310 = vmatpush.bf16.msra.mxu0 %v207
  %311 = vmatpush.bf16.msra.mxu0 %v203
  %312 = vmatpush.bf16.msra.mxu0 %v199
  %313 = vmatpush.bf16.msra.mxu0 %v195
  %314 = vmatpush.bf16.msra.mxu0 %v191
  %315 = vmatpush.bf16.msra.mxu0 %v187
  %316 = vmatmul.bf16.gmra.mxu0 %v69
  %v317 = vpop.f32.mrf.mxu0
  %v318 = vadd.f32 %v64, %v317
  %v319 = vpop.f32.mrf.mxu0
  %320 = vdwg.mxu0
  %321 = vmatpush.bf16.msra.mxu0 0
  %322 = vmatpush.bf16.msra.mxu0 0
  %323 = vmatpush.bf16.msra.mxu0 0
  %324 = vmatpush.bf16.msra.mxu0 0
  %325 = vmatpush.bf16.msra.mxu0 0
  %326 = vmatpush.bf16.msra.mxu0 0
  %327 = vmatpush.bf16.msra.mxu0 %v274
  %328 = vmatpush.bf16.msra.mxu0 %v219
  %329 = vmatmul.bf16.gmra.mxu0 %v264
  %v330 = vpop.f32.mrf.mxu0
  %v331 = vadd.f32 %v318, %v330
  %v332 = vpop.f32.mrf.mxu0
  %333 = vdwg.mxu0
  %334 = vmatpush.bf16.msra.mxu0 %v216
  %335 = vmatpush.bf16.msra.mxu0 %v212
  %336 = vmatpush.bf16.msra.mxu0 %v208
  %337 = vmatpush.bf16.msra.mxu0 %v204
  %338 = vmatpush.bf16.msra.mxu0 %v200
  %339 = vmatpush.bf16.msra.mxu0 %v196
  %340 = vmatpush.bf16.msra.mxu0 %v192
  %341 = vmatpush.bf16.msra.mxu0 %v188
  %342 = vmatmul.bf16.gmra.mxu0 %v69
  %v343 = vpop.f32.mrf.mxu0
  %v344 = vadd.f32 %v64, %v343
  %v345 = vpop.f32.mrf.mxu0
  %346 = vdwg.mxu0
  %347 = vmatpush.bf16.msra.mxu0 0
  %348 = vmatpush.bf16.msra.mxu0 0
  %349 = vmatpush.bf16.msra.mxu0 0
  %350 = vmatpush.bf16.msra.mxu0 0
  %351 = vmatpush.bf16.msra.mxu0 0
  %352 = vmatpush.bf16.msra.mxu0 0
  %353 = vmatpush.bf16.msra.mxu0 %v277
  %354 = vmatpush.bf16.msra.mxu0 %v220
  %355 = vmatmul.bf16.gmra.mxu0 %v264
  %v356 = vpop.f32.mrf.mxu0
  %v357 = vadd.f32 %v344, %v356
  %v358 = vpop.f32.mrf.mxu0
  %359 = vdwg.mxu0
  %360 = vmatpush.bf16.msra.mxu0 %v217
  %361 = vmatpush.bf16.msra.mxu0 %v213
  %362 = vmatpush.bf16.msra.mxu0 %v209
  %363 = vmatpush.bf16.msra.mxu0 %v205
  %364 = vmatpush.bf16.msra.mxu0 %v201
  %365 = vmatpush.bf16.msra.mxu0 %v197
  %366 = vmatpush.bf16.msra.mxu0 %v193
  %367 = vmatpush.bf16.msra.mxu0 %v189
  %368 = vmatmul.bf16.gmra.mxu0 %v69
  %v369 = vpop.f32.mrf.mxu0
  %v370 = vadd.f32 %v64, %v369
  %v371 = vpop.f32.mrf.mxu0
  %372 = vdwg.mxu0
  %373 = vmatpush.bf16.msra.mxu0 0
  %374 = vmatpush.bf16.msra.mxu0 0
  %375 = vmatpush.bf16.msra.mxu0 0
  %376 = vmatpush.bf16.msra.mxu0 0
  %377 = vmatpush.bf16.msra.mxu0 0
  %378 = vmatpush.bf16.msra.mxu0 0
  %379 = vmatpush.bf16.msra.mxu0 %v280
  %380 = vmatpush.bf16.msra.mxu0 %v221
  %381 = vmatmul.bf16.gmra.mxu0 %v264
  %v382 = vpop.f32.mrf.mxu0
  %v383 = vadd.f32 %v370, %v382
  %v384 = vpop.f32.mrf.mxu0
  %385 = vdwg.mxu0
  %v386 = vadd.f32 %v305, %v331
  %v387 = vadd.f32 %v386, %v357
  %v388 = vadd.f32 %v387, %v383
  %389 = vadd.xlane.f32.xlu0 %v388
  %v390 = vpop.xlane.xlu0 %389
  %v391 = vmul.f32 %v390, 0.001953125
  %v392 = vsub.f32 %v305, %v391
  %v393 = vsub.f32 %v331, %v391
  %v394 = vsub.f32 %v357, %v391
  %v395 = vsub.f32 %v383, %v391
  %v396 = vmul.f32 %v392, %v392
  %v397 = vmul.f32 %v393, %v393
  %v398 = vmul.f32 %v394, %v394
  %v399 = vmul.f32 %v395, %v395
  %v400 = vadd.f32 %v396, %v397
  %v401 = vadd.f32 %v400, %v398
  %v402 = vadd.f32 %v401, %v399
  %403 = vadd.xlane.f32.xlu0 %v402
  %v404 = vpop.xlane.xlu0 %403
  %v405 = vmul.f32 %v404, 0.001953125
  %v406 = vld [vmem:[%s3] sm:$0xff]
  %v407 = vadd.f32 %v405, 1e-05
  %v408 = vrsqrt.pop %v407
  %v409 = vmul.f32 %v408, %v407
  %v410 = vmul.f32 %v409, %v408
  %v411 = vmul.f32 0.5, %v410
  %v412 = vsub.f32 1.5, %v411
  %v413 = vmul.f32 %v408, %v412
  %vm414 = vweird.f32 %v407
  %vm415 = vweird.f32 %v408
  %vm416 = vmor %vm414, %vm415
  %v417 = vsel %vm416, %v408, %v413
  %v418 = vmul.f32 %v406, %v417
  %420 = vset.pattern.permute.xlu0 0
  %421 = vperm.xlu0 %420, %v418
  %v422 = vpop.permute.xlu0 %421
  %v424 = vmul.f32 %v392, %v422
  %v425 = vmul.f32 %v393, %v422
  %v426 = vmul.f32 %v394, %v422
  %v427 = vmul.f32 %v395, %v422
  %v428 = vld [vmem:[%s4] sm:$0xff]
  %430 = vset.pattern.permute.xlu0 0
  %431 = vperm.xlu0 %430, %v428
  %v432 = vpop.permute.xlu0 %431
  %v434 = vadd.f32 %v424, %v432
  %v435 = vadd.f32 %v425, %v432
  %v436 = vadd.f32 %v426, %v432
  %v437 = vadd.f32 %v427, %v432
  %v438 = vmax.f32 %v434, 0.0
  %v439 = vmax.f32 %v435, 0.0
  %v440 = vmax.f32 %v436, 0.0
  %v441 = vmax.f32 %v437, 0.0
  %v442 = vpack.c.bf16 %v439, %v438
  %v443 = vpack.c.bf16 %v441, %v440
  %444 = vst [vmem:[%s5] sm:$0xff] %v442
  %445 = vst [vmem:[%s5 + $0x8] sm:$0xff] %v443
  // Predicated region
  $region22: #{generator_forward.10} parent=0 // pred_check
    _
  $region23: #{generator_forward.10} parent=0 // pred_check_branch
    %447 = sbr.rel (0) target = $region25
  $region24: #{generator_forward.10} parent=0 // pred_region
    _
  $region25: #{generator_forward.10} parent=0 // pred_fallthru
    _
  // Predicated region
  $region26: #{generator_forward.10} parent=0 // pred_check
    _
  $region27: #{generator_forward.10} parent=0 // pred_check_branch
    %449 = sbr.rel (0) target = $region29
  $region28: #{generator_forward.10} parent=0 // pred_region
    _
  $region29: #{generator_forward.10} parent=0 // pred_fallthru
    _

// kernel: generator_forward.11
$region0: #{generator_forward.11}
  #allocation0 [shape = 'u32[]', space=smem, size = 0x4, offset = 0x4, fixed_abs, tag = 'smem constant byte address 0x4 - core index']
  #allocation1 [shape = 'u32[72,128]{1,0:T(1,128)}', space=vmem, size = 0x9000, scoped, tag = 'internal scratch']
  %s0 = inlined_call_operand.vmem [shape: bf16[16,72], index: 0, kind: input, shape index: {}]
  %s1 = inlined_call_operand.vmem [shape: bf16[72,128], index: 1, kind: input, shape index: {}]
  %s2 = inlined_call_operand.vmem [shape: f32[16,1], index: 2, kind: input, shape index: {}, may-alias: {2,4}]
  %s3 = inlined_call_operand.vmem [shape: f32[16,1], index: 3, kind: input, shape index: {}]
  %s4 = inlined_call_operand.vmem [shape: f32[16,1], index: 4, kind: input, shape index: {}, may-alias: {2,4}]
  %s5 = inlined_call_operand.vmem [shape: bf16[16,128], index: 5, kind: output, shape index: {}]
  %s6 = sld [smem:[#allocation0]]
  $region30: #{generator_forward.11} parent=0
    _
  %s8 = ssub.s32 1, %s6
  %s9 = scalar_select 0, %s8, %s6
  // Predicated region
  $region2: #{generator_forward.11} parent=0 // pred_check
    _
  $region3: #{generator_forward.11} parent=0 // pred_check_branch
    %11 = sbr.rel (0) target = $region5
  $region4: #{generator_forward.11} parent=0 // pred_region
    _
  $region5: #{generator_forward.11} parent=0 // pred_fallthru
    _
  // Predicated region
  $region6: #{generator_forward.11} parent=0 // pred_check
    _
  $region7: #{generator_forward.11} parent=0 // pred_check_branch
    %13 = sbr.rel (0) target = $region9
  $region8: #{generator_forward.11} parent=0 // pred_region
    _
  $region9: #{generator_forward.11} parent=0 // pred_fallthru
    _
  // Predicated region
  $region10: #{generator_forward.11} parent=0 // pred_check
    _
  $region11: #{generator_forward.11} parent=0 // pred_check_branch
    %15 = sbr.rel (0) target = $region13
  $region12: #{generator_forward.11} parent=0 // pred_region
    _
  $region13: #{generator_forward.11} parent=0 // pred_fallthru
    _
  // Predicated region
  $region14: #{generator_forward.11} parent=0 // pred_check
    _
  $region15: #{generator_forward.11} parent=0 // pred_check_branch
    %17 = sbr.rel (0) target = $region17
  $region16: #{generator_forward.11} parent=0 // pred_region
    _
  $region17: #{generator_forward.11} parent=0 // pred_fallthru
    _
  // Predicated region
  $region18: #{generator_forward.11} parent=0 // pred_check
    _
  $region19: #{generator_forward.11} parent=0 // pred_check_branch
    %19 = sbr.rel (0) target = $region21
  $region20: #{generator_forward.11} parent=0 // pred_region
    _
  $region21: #{generator_forward.11} parent=0 // pred_fallthru
    _
  %v21 = vld [vmem:[%s0] sm:$0xf]
  %v22 = vld [vmem:[%s0 + $0x4] sm:$0xf]
  %v23 = vld [vmem:[%s1] sm:$0xf]
  %v24 = vld [vmem:[%s1 + $0x4] sm:$0xf]
  %v25 = vld [vmem:[%s1 + $0x8] sm:$0xf]
  %v26 = vld [vmem:[%s1 + $0xc] sm:$0xf]
  %v27 = vld [vmem:[%s1 + $0x10] sm:$0xf]
  %v28 = vld [vmem:[%s1 + $0x14] sm:$0xf]
  %v29 = vld [vmem:[%s1 + $0x18] sm:$0xf]
  %v30 = vld [vmem:[%s1 + $0x1c] sm:$0xf]
  %v31 = vld [vmem:[%s1 + $0x20] sm:$0xf]
  %v32 = vld [vmem:[%s2] sm:$0xff]
  %v33 = vld [vmem:[%s2 + $0x8] sm:$0xff]
  %35 = vset.pattern.permute.xlu0 0
  %36 = vperm.xlu0 %35, %v32
  %v37 = vpop.permute.xlu0 %36
  %40 = vset.pattern.permute.xlu0 0
  %41 = vperm.xlu0 %40, %v33
  %v42 = vpop.permute.xlu0 %41
  %v46 = vunpack.c.l.b16 %v21
  %v47 = vunpack.c.l.b16 %v22
  %v48 = vpack.c.b16 %v47, %v46
  %v58 = vunpack.c.l.b16 %v23
  %v59 = vunpack.c.l.b16 %v24
  %v60 = vunpack.c.l.b16 %v25
  %v61 = vunpack.c.l.b16 %v26
  %v62 = vunpack.c.l.b16 %v27
  %v63 = vunpack.c.l.b16 %v28
  %v64 = vunpack.c.l.b16 %v29
  %v65 = vunpack.c.l.b16 %v30
  %v66 = vunpack.c.l.b16 %v31
  %v67 = vpack.c.b16 %v59, %v58
  %v68 = vpack.c.b16 %v61, %v60
  %v69 = vpack.c.b16 %v63, %v62
  %v70 = vpack.c.b16 %v65, %v64
  %v71 = vpack.c.b16 %v66, %v66
  %vm76 = vcmask 588800
  %v78 = vsel %vm76, %v48, 0
  %vm80 = vcmask 1043456
  %v82 = vsel %vm80, %v71, 0
  %84 = vmatpush.bf16.msra.mxu0 0
  %85 = vmatpush.bf16.msra.mxu0 0
  %86 = vmatpush.bf16.msra.mxu0 0
  %87 = vmatpush.bf16.msra.mxu0 %v82
  %88 = vmatpush.bf16.msra.mxu0 %v70
  %89 = vmatpush.bf16.msra.mxu0 %v69
  %90 = vmatpush.bf16.msra.mxu0 %v68
  %91 = vmatpush.bf16.msra.mxu0 %v67
  %92 = vmatmul.bf16.gmra.mxu0 %v78
  %v93 = vpop.f32.mrf.mxu0
  %v94 = vadd.f32 %v37, %v93
  %v95 = vpop.f32.mrf.mxu0
  %v96 = vadd.f32 %v42, %v95
  %97 = vdwg.mxu0
  %98 = vadd.xlane.f32.xlu0 %v94
  %v99 = vpop.xlane.xlu0 %98
  %100 = vadd.xlane.f32.xlu0 %v96
  %v101 = vpop.xlane.xlu0 %100
  %v102 = vmul.f32 %v99, 0.0078125
  %v103 = vmul.f32 %v101, 0.0078125
  %v104 = vsub.f32 %v94, %v102
  %v105 = vsub.f32 %v96, %v103
  %v106 = vmul.f32 %v104, %v104
  %v107 = vmul.f32 %v105, %v105
  %108 = vadd.xlane.f32.xlu0 %v106
  %v109 = vpop.xlane.xlu0 %108
  %110 = vadd.xlane.f32.xlu0 %v107
  %v111 = vpop.xlane.xlu0 %110
  %v112 = vmul.f32 %v109, 0.0078125
  %v113 = vmul.f32 %v111, 0.0078125
  %v114 = vld [vmem:[%s3] sm:$0xff]
  %v115 = vld [vmem:[%s3 + $0x8] sm:$0xff]
  %v116 = vadd.f32 %v112, 1e-05
  %v117 = vadd.f32 %v113, 1e-05
  %v118 = vrsqrt.pop %v116
  %v119 = vmul.f32 %v118, %v116
  %v120 = vmul.f32 %v119, %v118
  %v121 = vmul.f32 0.5, %v120
  %v122 = vsub.f32 1.5, %v121
  %v123 = vmul.f32 %v118, %v122
  %vm124 = vweird.f32 %v116
  %vm125 = vweird.f32 %v118
  %vm126 = vmor %vm124, %vm125
  %v127 = vsel %vm126, %v118, %v123
  %v128 = vrsqrt.pop %v117
  %v129 = vmul.f32 %v128, %v117
  %v130 = vmul.f32 %v129, %v128
  %v131 = vmul.f32 0.5, %v130
  %v132 = vsub.f32 1.5, %v131
  %v133 = vmul.f32 %v128, %v132
  %vm134 = vweird.f32 %v117
  %vm135 = vweird.f32 %v128
  %vm136 = vmor %vm134, %vm135
  %v137 = vsel %vm136, %v128, %v133
  %v138 = vmul.f32 %v114, %v127
  %v139 = vmul.f32 %v115, %v137
  %141 = vset.pattern.permute.xlu0 0
  %142 = vperm.xlu0 %141, %v138
  %v143 = vpop.permute.xlu0 %142
  %146 = vset.pattern.permute.xlu0 0
  %147 = vperm.xlu0 %146, %v139
  %v148 = vpop.permute.xlu0 %147
  %v150 = vmul.f32 %v104, %v143
  %v151 = vmul.f32 %v105, %v148
  %v152 = vld [vmem:[%s4] sm:$0xff]
  %v153 = vld [vmem:[%s4 + $0x8] sm:$0xff]
  %155 = vset.pattern.permute.xlu0 0
  %156 = vperm.xlu0 %155, %v152
  %v157 = vpop.permute.xlu0 %156
  %160 = vset.pattern.permute.xlu0 0
  %161 = vperm.xlu0 %160, %v153
  %v162 = vpop.permute.xlu0 %161
  %v164 = vadd.f32 %v150, %v157
  %v165 = vadd.f32 %v151, %v162
  %v166 = vmax.f32 %v164, 0.0
  %v167 = vmax.f32 %v165, 0.0
  %v168 = vpack.c.bf16 %v166, %v166
  %v169 = vpack.c.bf16 %v167, %v167
  %170 = vst [vmem:[%s5] sm:$0xf] %v168
  %171 = vst [vmem:[%s5 + $0x4] sm:$0xf] %v169
  // Predicated region
  $region22: #{generator_forward.11} parent=0 // pred_check
    _
  $region23: #{generator_forward.11} parent=0 // pred_check_branch
    %173 = sbr.rel (0) target = $region25
  $region24: #{generator_forward.11} parent=0 // pred_region
    _
  $region25: #{generator_forward.11} parent=0 // pred_fallthru
    _
  // Predicated region
  $region26: #{generator_forward.11} parent=0 // pred_check
    _
  $region27: #{generator_forward.11} parent=0 // pred_check_branch
    %175 = sbr.rel (0) target = $region29
  $region28: #{generator_forward.11} parent=0 // pred_region
    _
  $region29: #{generator_forward.11} parent=0 // pred_fallthru
    _

// kernel: generator_forward.12
$region0: #{generator_forward.12}
  #allocation0 [shape = 'u32[]', space=smem, size = 0x4, offset = 0x4, fixed_abs, tag = 'smem constant byte address 0x4 - core index']
  #allocation1 [shape = 'u32[72,128]{1,0:T(1,128)}', space=vmem, size = 0x9000, scoped, tag = 'internal scratch']
  %s0 = inlined_call_operand.vmem [shape: bf16[32,144], index: 0, kind: input, shape index: {}]
  %s1 = inlined_call_operand.vmem [shape: bf16[144,32], index: 1, kind: input, shape index: {}]
  %s2 = inlined_call_operand.vmem [shape: f32[32,1], index: 2, kind: input, shape index: {}, may-alias: {2,4}]
  %s3 = inlined_call_operand.vmem [shape: f32[32,1], index: 3, kind: input, shape index: {}]
  %s4 = inlined_call_operand.vmem [shape: f32[32,1], index: 4, kind: input, shape index: {}, may-alias: {2,4}]
  %s5 = inlined_call_operand.vmem [shape: bf16[32,32], index: 5, kind: output, shape index: {}]
  %s6 = sld [smem:[#allocation0]]
  $region30: #{generator_forward.12} parent=0
    _
  %s8 = ssub.s32 1, %s6
  %s9 = scalar_select 0, %s8, %s6
  // Predicated region
  $region2: #{generator_forward.12} parent=0 // pred_check
    _
  $region3: #{generator_forward.12} parent=0 // pred_check_branch
    %11 = sbr.rel (0) target = $region5
  $region4: #{generator_forward.12} parent=0 // pred_region
    _
  $region5: #{generator_forward.12} parent=0 // pred_fallthru
    _
  // Predicated region
  $region6: #{generator_forward.12} parent=0 // pred_check
    _
  $region7: #{generator_forward.12} parent=0 // pred_check_branch
    %13 = sbr.rel (0) target = $region9
  $region8: #{generator_forward.12} parent=0 // pred_region
    _
  $region9: #{generator_forward.12} parent=0 // pred_fallthru
    _
  // Predicated region
  $region10: #{generator_forward.12} parent=0 // pred_check
    _
  $region11: #{generator_forward.12} parent=0 // pred_check_branch
    %15 = sbr.rel (0) target = $region13
  $region12: #{generator_forward.12} parent=0 // pred_region
    _
  $region13: #{generator_forward.12} parent=0 // pred_fallthru
    _
  // Predicated region
  $region14: #{generator_forward.12} parent=0 // pred_check
    _
  $region15: #{generator_forward.12} parent=0 // pred_check_branch
    %17 = sbr.rel (0) target = $region17
  $region16: #{generator_forward.12} parent=0 // pred_region
    _
  $region17: #{generator_forward.12} parent=0 // pred_fallthru
    _
  // Predicated region
  $region18: #{generator_forward.12} parent=0 // pred_check
    _
  $region19: #{generator_forward.12} parent=0 // pred_check_branch
    %19 = sbr.rel (0) target = $region21
  $region20: #{generator_forward.12} parent=0 // pred_region
    _
  $region21: #{generator_forward.12} parent=0 // pred_fallthru
    _
  %v21 = vld [vmem:[%s0] sm:$0xff]
  %v22 = vld [vmem:[%s0 + $0x8] sm:$0xff]
  %v23 = vld [vmem:[%s0 + $0x10] sm:$0xff]
  %v24 = vld [vmem:[%s0 + $0x18] sm:$0xff]
  %v25 = vld [vmem:[%s1] sm:$0xf]
  %v26 = vld [vmem:[%s1 + $0x4] sm:$0xf]
  %v27 = vld [vmem:[%s1 + $0x8] sm:$0xf]
  %v28 = vld [vmem:[%s1 + $0xc] sm:$0xf]
  %v29 = vld [vmem:[%s1 + $0x10] sm:$0xf]
  %v30 = vld [vmem:[%s1 + $0x14] sm:$0xf]
  %v31 = vld [vmem:[%s1 + $0x18] sm:$0xf]
  %v32 = vld [vmem:[%s1 + $0x1c] sm:$0xf]
  %v33 = vld [vmem:[%s1 + $0x20] sm:$0xf]
  %v34 = vld [vmem:[%s1 + $0x24] sm:$0xf]
  %v35 = vld [vmem:[%s1 + $0x28] sm:$0xf]
  %v36 = vld [vmem:[%s1 + $0x2c] sm:$0xf]
  %v37 = vld [vmem:[%s1 + $0x30] sm:$0xf]
  %v38 = vld [vmem:[%s1 + $0x34] sm:$0xf]
  %v39 = vld [vmem:[%s1 + $0x38] sm:$0xf]
  %v40 = vld [vmem:[%s1 + $0x3c] sm:$0xf]
  %v41 = vld [vmem:[%s1 + $0x40] sm:$0xf]
  %v42 = vld [vmem:[%s1 + $0x44] sm:$0xf]
  %v43 = vld [vmem:[%s2] sm:$0xff]
  %v44 = vld [vmem:[%s2 + $0x8] sm:$0xff]
  %v45 = vld [vmem:[%s2 + $0x10] sm:$0xff]
  %v46 = vld [vmem:[%s2 + $0x18] sm:$0xff]
  %48 = vset.pattern.permute.xlu0 0
  %49 = vperm.xlu0 %48, %v43
  %v50 = vpop.permute.xlu0 %49
  %53 = vset.pattern.permute.xlu0 0
  %54 = vperm.xlu0 %53, %v44
  %v55 = vpop.permute.xlu0 %54
  %58 = vset.pattern.permute.xlu0 0
  %59 = vperm.xlu0 %58, %v45
  %v60 = vpop.permute.xlu0 %59
  %63 = vset.pattern.permute.xlu0 0
  %64 = vperm.xlu0 %63, %v46
  %v65 = vpop.permute.xlu0 %64
  %v71 = vunpack.c.l.b16 %v21
  %v72 = vunpack.c.h.b16 %v21
  %v73 = vunpack.c.l.b16 %v22
  %v74 = vunpack.c.h.b16 %v22
  %v75 = vunpack.c.l.b16 %v23
  %v76 = vunpack.c.h.b16 %v23
  %v77 = vunpack.c.l.b16 %v24
  %v78 = vunpack.c.h.b16 %v24
  %v79 = vpack.c.b16 %v73, %v71
  %v80 = vpack.c.b16 %v74, %v72
  %v81 = vpack.c.b16 %v77, %v75
  %v82 = vpack.c.b16 %v78, %v76
  %v103 = vunpack.c.l.b16 %v25
  %v104 = vunpack.c.l.b16 %v26
  %v105 = vunpack.c.l.b16 %v27
  %v106 = vunpack.c.l.b16 %v28
  %v107 = vunpack.c.l.b16 %v29
  %v108 = vunpack.c.l.b16 %v30
  %v109 = vunpack.c.l.b16 %v31
  %v110 = vunpack.c.l.b16 %v32
  %v111 = vunpack.c.l.b16 %v33
  %v112 = vunpack.c.l.b16 %v34
  %v113 = vunpack.c.l.b16 %v35
  %v114 = vunpack.c.l.b16 %v36
  %v115 = vunpack.c.l.b16 %v37
  %v116 = vunpack.c.l.b16 %v38
  %v117 = vunpack.c.l.b16 %v39
  %v118 = vunpack.c.l.b16 %v40
  %v119 = vunpack.c.l.b16 %v41
  %v120 = vunpack.c.l.b16 %v42
  %v121 = vpack.c.b16 %v104, %v103
  %v122 = vpack.c.b16 %v106, %v105
  %v123 = vpack.c.b16 %v108, %v107
  %v124 = vpack.c.b16 %v110, %v109
  %v125 = vpack.c.b16 %v112, %v111
  %v126 = vpack.c.b16 %v114, %v113
  %v127 = vpack.c.b16 %v116, %v115
  %v128 = vpack.c.b16 %v118, %v117
  %v129 = vpack.c.b16 %v120, %v119
  %vm139 = vcmask 130048
  %v141 = vsel %vm139, %v80, 0
  %v144 = vsel %vm139, %v82, 0
  %146 = vmatpush.bf16.msra.mxu0 %v128
  %147 = vmatpush.bf16.msra.mxu0 %v127
  %148 = vmatpush.bf16.msra.mxu0 %v126
  %149 = vmatpush.bf16.msra.mxu0 %v125
  %150 = vmatpush.bf16.msra.mxu0 %v124
  %151 = vmatpush.bf16.msra.mxu0 %v123
  %152 = vmatpush.bf16.msra.mxu0 %v122
  %153 = vmatpush.bf16.msra.mxu0 %v121
  %154 = vmatmul.bf16.gmra.mxu0 %v79
  %v155 = vpop.f32.mrf.mxu0
  %v156 = vadd.f32 %v50, %v155
  %v157 = vpop.f32.mrf.mxu0
  %v158 = vadd.f32 %v55, %v157
  %159 = vmatmul.bf16.gmra.mxu0 %v81
  %v160 = vpop.f32.mrf.mxu0
  %v161 = vadd.f32 %v60, %v160
  %v162 = vpop.f32.mrf.mxu0
  %v163 = vadd.f32 %v65, %v162
  %164 = vdwg.mxu0
  %165 = vmatpush.bf16.msra.mxu0 0
  %166 = vmatpush.bf16.msra.mxu0 0
  %167 = vmatpush.bf16.msra.mxu0 0
  %168 = vmatpush.bf16.msra.mxu0 0
  %169 = vmatpush.bf16.msra.mxu0 0
  %170 = vmatpush.bf16.msra.mxu0 0
  %171 = vmatpush.bf16.msra.mxu0 0
  %172 = vmatpush.bf16.msra.mxu0 %v129
  %173 = vmatmul.bf16.gmra.mxu0 %v141
  %v174 = vpop.f32.mrf.mxu0
  %v175 = vadd.f32 %v156, %v174
  %v176 = vpop.f32.mrf.mxu0
  %v177 = vadd.f32 %v158, %v176
  %178 = vmatmul.bf16.gmra.mxu0 %v144
  %v179 = vpop.f32.mrf.mxu0
  %v180 = vadd.f32 %v161, %v179
  %v181 = vpop.f32.mrf.mxu0
  %v182 = vadd.f32 %v163, %v181
  %183 = vdwg.mxu0
  %vm184 = vcmask 261120
  %v185 = vsel %vm184, %v175, 0.0
  %186 = vadd.xlane.f32.xlu0 %v185
  %v187 = vpop.xlane.xlu0 %186
  %v188 = vsel %vm184, %v177, 0.0
  %189 = vadd.xlane.f32.xlu0 %v188
  %v190 = vpop.xlane.xlu0 %189
  %v191 = vsel %vm184, %v180, 0.0
  %192 = vadd.xlane.f32.xlu0 %v191
  %v193 = vpop.xlane.xlu0 %192
  %v194 = vsel %vm184, %v182, 0.0
  %195 = vadd.xlane.f32.xlu0 %v194
  %v196 = vpop.xlane.xlu0 %195
  %v197 = vmul.f32 %v187, 0.03125
  %v198 = vmul.f32 %v190, 0.03125
  %v199 = vmul.f32 %v193, 0.03125
  %v200 = vmul.f32 %v196, 0.03125
  %v201 = vsub.f32 %v175, %v197
  %v202 = vsub.f32 %v177, %v198
  %v203 = vsub.f32 %v180, %v199
  %v204 = vsub.f32 %v182, %v200
  %v205 = vmul.f32 %v201, %v201
  %v206 = vmul.f32 %v202, %v202
  %v207 = vmul.f32 %v203, %v203
  %v208 = vmul.f32 %v204, %v204
  %v209 = vsel %vm184, %v205, 0.0
  %210 = vadd.xlane.f32.xlu0 %v209
  %v211 = vpop.xlane.xlu0 %210
  %v212 = vsel %vm184, %v206, 0.0
  %213 = vadd.xlane.f32.xlu0 %v212
  %v214 = vpop.xlane.xlu0 %213
  %v215 = vsel %vm184, %v207, 0.0
  %216 = vadd.xlane.f32.xlu0 %v215
  %v217 = vpop.xlane.xlu0 %216
  %v218 = vsel %vm184, %v208, 0.0
  %219 = vadd.xlane.f32.xlu0 %v218
  %v220 = vpop.xlane.xlu0 %219
  %v221 = vmul.f32 %v211, 0.03125
  %v222 = vmul.f32 %v214, 0.03125
  %v223 = vmul.f32 %v217, 0.03125
  %v224 = vmul.f32 %v220, 0.03125
  %v225 = vld [vmem:[%s3] sm:$0xff]
  %v226 = vld [vmem:[%s3 + $0x8] sm:$0xff]
  %v227 = vld [vmem:[%s3 + $0x10] sm:$0xff]
  %v228 = vld [vmem:[%s3 + $0x18] sm:$0xff]
  %v229 = vadd.f32 %v221, 1e-05
  %v230 = vadd.f32 %v222, 1e-05
  %v231 = vadd.f32 %v223, 1e-05
  %v232 = vadd.f32 %v224, 1e-05
  %v233 = vrsqrt.pop %v229
  %v234 = vmul.f32 %v233, %v229
  %v235 = vmul.f32 %v234, %v233
  %v236 = vmul.f32 0.5, %v235
  %v237 = vsub.f32 1.5, %v236
  %v238 = vmul.f32 %v233, %v237
  %vm239 = vweird.f32 %v229
  %vm240 = vweird.f32 %v233
  %vm241 = vmor %vm239, %vm240
  %v242 = vsel %vm241, %v233, %v238
  %v243 = vrsqrt.pop %v230
  %v244 = vmul.f32 %v243, %v230
  %v245 = vmul.f32 %v244, %v243
  %v246 = vmul.f32 0.5, %v245
  %v247 = vsub.f32 1.5, %v246
  %v248 = vmul.f32 %v243, %v247
  %vm249 = vweird.f32 %v230
  %vm250 = vweird.f32 %v243
  %vm251 = vmor %vm249, %vm250
  %v252 = vsel %vm251, %v243, %v248
  %v253 = vrsqrt.pop %v231
  %v254 = vmul.f32 %v253, %v231
  %v255 = vmul.f32 %v254, %v253
  %v256 = vmul.f32 0.5, %v255
  %v257 = vsub.f32 1.5, %v256
  %v258 = vmul.f32 %v253, %v257
  %vm259 = vweird.f32 %v231
  %vm260 = vweird.f32 %v253
  %vm261 = vmor %vm259, %vm260
  %v262 = vsel %vm261, %v253, %v258
  %v263 = vrsqrt.pop %v232
  %v264 = vmul.f32 %v263, %v232
  %v265 = vmul.f32 %v264, %v263
  %v266 = vmul.f32 0.5, %v265
  %v267 = vsub.f32 1.5, %v266
  %v268 = vmul.f32 %v263, %v267
  %vm269 = vweird.f32 %v232
  %vm270 = vweird.f32 %v263
  %vm271 = vmor %vm269, %vm270
  %v272 = vsel %vm271, %v263, %v268
  %v273 = vmul.f32 %v225, %v242
  %v274 = vmul.f32 %v226, %v252
  %v275 = vmul.f32 %v227, %v262
  %v276 = vmul.f32 %v228, %v272
  %278 = vset.pattern.permute.xlu0 0
  %279 = vperm.xlu0 %278, %v273
  %v280 = vpop.permute.xlu0 %279
  %283 = vset.pattern.permute.xlu0 0
  %284 = vperm.xlu0 %283, %v274
  %v285 = vpop.permute.xlu0 %284
  %288 = vset.pattern.permute.xlu0 0
  %289 = vperm.xlu0 %288, %v275
  %v290 = vpop.permute.xlu0 %289
  %293 = vset.pattern.permute.xlu0 0
  %294 = vperm.xlu0 %293, %v276
  %v295 = vpop.permute.xlu0 %294
  %v297 = vmul.f32 %v201, %v280
  %v298 = vmul.f32 %v202, %v285
  %v299 = vmul.f32 %v203, %v290
  %v300 = vmul.f32 %v204, %v295
  %v301 = vld [vmem:[%s4] sm:$0xff]
  %v302 = vld [vmem:[%s4 + $0x8] sm:$0xff]
  %v303 = vld [vmem:[%s4 + $0x10] sm:$0xff]
  %v304 = vld [vmem:[%s4 + $0x18] sm:$0xff]
  %306 = vset.pattern.permute.xlu0 0
  %307 = vperm.xlu0 %306, %v301
  %v308 = vpop.permute.xlu0 %307
  %311 = vset.pattern.permute.xlu0 0
  %312 = vperm.xlu0 %311, %v302
  %v313 = vpop.permute.xlu0 %312
  %316 = vset.pattern.permute.xlu0 0
  %317 = vperm.xlu0 %316, %v303
  %v318 = vpop.permute.xlu0 %317
  %321 = vset.pattern.permute.xlu0 0
  %322 = vperm.xlu0 %321, %v304
  %v323 = vpop.permute.xlu0 %322
  %v325 = vadd.f32 %v297, %v308
  %v326 = vadd.f32 %v298, %v313
  %v327 = vadd.f32 %v299, %v318
  %v328 = vadd.f32 %v300, %v323
  %v329 = vmax.f32 %v325, 0.0
  %v330 = vmax.f32 %v326, 0.0
  %v331 = vmax.f32 %v327, 0.0
  %v332 = vmax.f32 %v328, 0.0
  %v333 = vpack.c.bf16 %v329, %v329
  %v334 = vpack.c.bf16 %v330, %v330
  %v335 = vpack.c.bf16 %v331, %v331
  %v336 = vpack.c.bf16 %v332, %v332
  %vm337 = vcmask 257024
  %338 = vst.msk [vmem:[%s5] sm:$0xf] %vm337, %v333
  %339 = vst.msk [vmem:[%s5 + $0x4] sm:$0xf] %vm337, %v334
  %340 = vst.msk [vmem:[%s5 + $0x8] sm:$0xf] %vm337, %v335
  %341 = vst.msk [vmem:[%s5 + $0xc] sm:$0xf] %vm337, %v336
  // Predicated region
  $region22: #{generator_forward.12} parent=0 // pred_check
    _
  $region23: #{generator_forward.12} parent=0 // pred_check_branch
    %343 = sbr.rel (0) target = $region25
  $region24: #{generator_forward.12} parent=0 // pred_region
    _
  $region25: #{generator_forward.12} parent=0 // pred_fallthru
    _
  // Predicated region
  $region26: #{generator_forward.12} parent=0 // pred_check
    _
  $region27: #{generator_forward.12} parent=0 // pred_check_branch
    %345 = sbr.rel (0) target = $region29
  $region28: #{generator_forward.12} parent=0 // pred_region
    _
  $region29: #{generator_forward.12} parent=0 // pred_fallthru
    _

// kernel: generator_forward.13
$region0: #{generator_forward.13}
  #allocation0 [shape = 'u32[]', space=smem, size = 0x4, offset = 0x4, fixed_abs, tag = 'smem constant byte address 0x4 - core index']
  #allocation1 [shape = 'u32[72,128]{1,0:T(1,128)}', space=vmem, size = 0x9000, scoped, tag = 'internal scratch']
  %s0 = inlined_call_operand.vmem [shape: bf16[32,288], index: 0, kind: input, shape index: {}]
  %s1 = inlined_call_operand.vmem [shape: bf16[288,32], index: 1, kind: input, shape index: {}]
  %s2 = inlined_call_operand.vmem [shape: f32[32,1], index: 2, kind: input, shape index: {}]
  %s3 = inlined_call_operand.vmem [shape: f32[32,1], index: 3, kind: input, shape index: {}]
  %s4 = inlined_call_operand.vmem [shape: f32[32,1], index: 4, kind: input, shape index: {}]
  %s5 = inlined_call_operand.vmem [shape: bf16[32,32], index: 5, kind: output, shape index: {}]
  %s6 = sld [smem:[#allocation0]]
  $region30: #{generator_forward.13} parent=0
    _
  %s8 = ssub.s32 1, %s6
  %s9 = scalar_select 0, %s8, %s6
  // Predicated region
  $region2: #{generator_forward.13} parent=0 // pred_check
    _
  $region3: #{generator_forward.13} parent=0 // pred_check_branch
    %11 = sbr.rel (0) target = $region5
  $region4: #{generator_forward.13} parent=0 // pred_region
    _
  $region5: #{generator_forward.13} parent=0 // pred_fallthru
    _
  // Predicated region
  $region6: #{generator_forward.13} parent=0 // pred_check
    _
  $region7: #{generator_forward.13} parent=0 // pred_check_branch
    %13 = sbr.rel (0) target = $region9
  $region8: #{generator_forward.13} parent=0 // pred_region
    _
  $region9: #{generator_forward.13} parent=0 // pred_fallthru
    _
  // Predicated region
  $region10: #{generator_forward.13} parent=0 // pred_check
    _
  $region11: #{generator_forward.13} parent=0 // pred_check_branch
    %15 = sbr.rel (0) target = $region13
  $region12: #{generator_forward.13} parent=0 // pred_region
    _
  $region13: #{generator_forward.13} parent=0 // pred_fallthru
    _
  // Predicated region
  $region14: #{generator_forward.13} parent=0 // pred_check
    _
  $region15: #{generator_forward.13} parent=0 // pred_check_branch
    %17 = sbr.rel (0) target = $region17
  $region16: #{generator_forward.13} parent=0 // pred_region
    _
  $region17: #{generator_forward.13} parent=0 // pred_fallthru
    _
  // Predicated region
  $region18: #{generator_forward.13} parent=0 // pred_check
    _
  $region19: #{generator_forward.13} parent=0 // pred_check_branch
    %19 = sbr.rel (0) target = $region21
  $region20: #{generator_forward.13} parent=0 // pred_region
    _
  $region21: #{generator_forward.13} parent=0 // pred_fallthru
    _
  %v21 = vld [vmem:[%s0] sm:$0xff]
  %v22 = vld [vmem:[%s0 + $0x8] sm:$0xf]
  %v23 = vld [vmem:[%s0 + $0xc] sm:$0xff]
  %v24 = vld [vmem:[%s0 + $0x14] sm:$0xf]
  %v25 = vld [vmem:[%s0 + $0x18] sm:$0xff]
  %v26 = vld [vmem:[%s0 + $0x20] sm:$0xf]
  %v27 = vld [vmem:[%s0 + $0x24] sm:$0xff]
  %v28 = vld [vmem:[%s0 + $0x2c] sm:$0xf]
  %v29 = vld [vmem:[%s1] sm:$0xf]
  %v30 = vld [vmem:[%s1 + $0x4] sm:$0xf]
  %v31 = vld [vmem:[%s1 + $0x8] sm:$0xf]
  %v32 = vld [vmem:[%s1 + $0xc] sm:$0xf]
  %v33 = vld [vmem:[%s1 + $0x10] sm:$0xf]
  %v34 = vld [vmem:[%s1 + $0x14] sm:$0xf]
  %v35 = vld [vmem:[%s1 + $0x18] sm:$0xf]
  %v36 = vld [vmem:[%s1 + $0x1c] sm:$0xf]
  %v37 = vld [vmem:[%s1 + $0x20] sm:$0xf]
  %v38 = vld [vmem:[%s1 + $0x24] sm:$0xf]
  %v39 = vld [vmem:[%s1 + $0x28] sm:$0xf]
  %v40 = vld [vmem:[%s1 + $0x2c] sm:$0xf]
  %v41 = vld [vmem:[%s1 + $0x30] sm:$0xf]
  %v42 = vld [vmem:[%s1 + $0x34] sm:$0xf]
  %v43 = vld [vmem:[%s1 + $0x38] sm:$0xf]
  %v44 = vld [vmem:[%s1 + $0x3c] sm:$0xf]
  %v45 = vld [vmem:[%s1 + $0x40] sm:$0xf]
  %v46 = vld [vmem:[%s1 + $0x44] sm:$0xf]
  %v47 = vld [vmem:[%s1 + $0x48] sm:$0xf]
  %v48 = vld [vmem:[%s1 + $0x4c] sm:$0xf]
  %v49 = vld [vmem:[%s1 + $0x50] sm:$0xf]
  %v50 = vld [vmem:[%s1 + $0x54] sm:$0xf]
  %v51 = vld [vmem:[%s1 + $0x58] sm:$0xf]
  %v52 = vld [vmem:[%s1 + $0x5c] sm:$0xf]
  %v53 = vld [vmem:[%s1 + $0x60] sm:$0xf]
  %v54 = vld [vmem:[%s1 + $0x64] sm:$0xf]
  %v55 = vld [vmem:[%s1 + $0x68] sm:$0xf]
  %v56 = vld [vmem:[%s1 + $0x6c] sm:$0xf]
  %v57 = vld [vmem:[%s1 + $0x70] sm:$0xf]
  %v58 = vld [vmem:[%s1 + $0x74] sm:$0xf]
  %v59 = vld [vmem:[%s1 + $0x78] sm:$0xf]
  %v60 = vld [vmem:[%s1 + $0x7c] sm:$0xf]
  %v61 = vld [vmem:[%s1 + $0x80] sm:$0xf]
  %v62 = vld [vmem:[%s1 + $0x84] sm:$0xf]
  %v63 = vld [vmem:[%s1 + $0x88] sm:$0xf]
  %v64 = vld [vmem:[%s1 + $0x8c] sm:$0xf]
  %v65 = vld [vmem:[%s2] sm:$0xff]
  %v66 = vld [vmem:[%s2 + $0x8] sm:$0xff]
  %v67 = vld [vmem:[%s2 + $0x10] sm:$0xff]
  %v68 = vld [vmem:[%s2 + $0x18] sm:$0xff]
  %70 = vset.pattern.permute.xlu0 0
  %71 = vperm.xlu0 %70, %v65
  %v72 = vpop.permute.xlu0 %71
  %75 = vset.pattern.permute.xlu0 0
  %76 = vperm.xlu0 %75, %v66
  %v77 = vpop.permute.xlu0 %76
  %80 = vset.pattern.permute.xlu0 0
  %81 = vperm.xlu0 %80, %v67
  %v82 = vpop.permute.xlu0 %81
  %85 = vset.pattern.permute.xlu0 0
  %86 = vperm.xlu0 %85, %v68
  %v87 = vpop.permute.xlu0 %86
  %v97 = vunpack.c.l.b16 %v21
  %v98 = vunpack.c.h.b16 %v21
  %v99 = vunpack.c.l.b16 %v22
  %v100 = vunpack.c.l.b16 %v23
  %v101 = vunpack.c.h.b16 %v23
  %v102 = vunpack.c.l.b16 %v24
  %v103 = vunpack.c.l.b16 %v25
  %v104 = vunpack.c.h.b16 %v25
  %v105 = vunpack.c.l.b16 %v26
  %v106 = vunpack.c.l.b16 %v27
  %v107 = vunpack.c.h.b16 %v27
  %v108 = vunpack.c.l.b16 %v28
  %v109 = vpack.c.b16 %v100, %v97
  %v110 = vpack.c.b16 %v101, %v98
  %v111 = vpack.c.b16 %v102, %v99
  %v112 = vpack.c.b16 %v106, %v103
  %v113 = vpack.c.b16 %v107, %v104
  %v114 = vpack.c.b16 %v108, %v105
  %v155 = vunpack.c.l.b16 %v29
  %v156 = vunpack.c.l.b16 %v30
  %v157 = vunpack.c.l.b16 %v31
  %v158 = vunpack.c.l.b16 %v32
  %v159 = vunpack.c.l.b16 %v33
  %v160 = vunpack.c.l.b16 %v34
  %v161 = vunpack.c.l.b16 %v35
  %v162 = vunpack.c.l.b16 %v36
  %v163 = vunpack.c.l.b16 %v37
  %v164 = vunpack.c.l.b16 %v38
  %v165 = vunpack.c.l.b16 %v39
  %v166 = vunpack.c.l.b16 %v40
  %v167 = vunpack.c.l.b16 %v41
  %v168 = vunpack.c.l.b16 %v42
  %v169 = vunpack.c.l.b16 %v43
  %v170 = vunpack.c.l.b16 %v44
  %v171 = vunpack.c.l.b16 %v45
  %v172 = vunpack.c.l.b16 %v46
  %v173 = vunpack.c.l.b16 %v47
  %v174 = vunpack.c.l.b16 %v48
  %v175 = vunpack.c.l.b16 %v49
  %v176 = vunpack.c.l.b16 %v50
  %v177 = vunpack.c.l.b16 %v51
  %v178 = vunpack.c.l.b16 %v52
  %v179 = vunpack.c.l.b16 %v53
  %v180 = vunpack.c.l.b16 %v54
  %v181 = vunpack.c.l.b16 %v55
  %v182 = vunpack.c.l.b16 %v56
  %v183 = vunpack.c.l.b16 %v57
  %v184 = vunpack.c.l.b16 %v58
  %v185 = vunpack.c.l.b16 %v59
  %v186 = vunpack.c.l.b16 %v60
  %v187 = vunpack.c.l.b16 %v61
  %v188 = vunpack.c.l.b16 %v62
  %v189 = vunpack.c.l.b16 %v63
  %v190 = vunpack.c.l.b16 %v64
  %v191 = vpack.c.b16 %v156, %v155
  %v192 = vpack.c.b16 %v158, %v157
  %v193 = vpack.c.b16 %v160, %v159
  %v194 = vpack.c.b16 %v162, %v161
  %v195 = vpack.c.b16 %v164, %v163
  %v196 = vpack.c.b16 %v166, %v165
  %v197 = vpack.c.b16 %v168, %v167
  %v198 = vpack.c.b16 %v170, %v169
  %v199 = vpack.c.b16 %v172, %v171
  %v200 = vpack.c.b16 %v174, %v173
  %v201 = vpack.c.b16 %v176, %v175
  %v202 = vpack.c.b16 %v178, %v177
  %v203 = vpack.c.b16 %v180, %v179
  %v204 = vpack.c.b16 %v182, %v181
  %v205 = vpack.c.b16 %v184, %v183
  %v206 = vpack.c.b16 %v186, %v185
  %v207 = vpack.c.b16 %v188, %v187
  %v208 = vpack.c.b16 %v190, %v189
  %vm227 = vcmask 261120
  %v229 = vsel %vm227, %v111, 0
  %v232 = vsel %vm227, %v114, 0
  %234 = vmatpush.bf16.msra.mxu0 %v198
  %235 = vmatpush.bf16.msra.mxu0 %v197
  %236 = vmatpush.bf16.msra.mxu0 %v196
  %237 = vmatpush.bf16.msra.mxu0 %v195
  %238 = vmatpush.bf16.msra.mxu0 %v194
  %239 = vmatpush.bf16.msra.mxu0 %v193
  %240 = vmatpush.bf16.msra.mxu0 %v192
  %241 = vmatpush.bf16.msra.mxu0 %v191
  %242 = vmatmul.bf16.gmra.mxu0 %v109
  %v243 = vpop.f32.mrf.mxu0
  %v244 = vadd.f32 %v72, %v243
  %v245 = vpop.f32.mrf.mxu0
  %v246 = vadd.f32 %v77, %v245
  %247 = vmatmul.bf16.gmra.mxu0 %v112
  %v248 = vpop.f32.mrf.mxu0
  %v249 = vadd.f32 %v82, %v248
  %v250 = vpop.f32.mrf.mxu0
  %v251 = vadd.f32 %v87, %v250
  %252 = vdwg.mxu0
  %253 = vmatpush.bf16.msra.mxu0 %v206
  %254 = vmatpush.bf16.msra.mxu0 %v205
  %255 = vmatpush.bf16.msra.mxu0 %v204
  %256 = vmatpush.bf16.msra.mxu0 %v203
  %257 = vmatpush.bf16.msra.mxu0 %v202
  %258 = vmatpush.bf16.msra.mxu0 %v201
  %259 = vmatpush.bf16.msra.mxu0 %v200
  %260 = vmatpush.bf16.msra.mxu0 %v199
  %261 = vmatmul.bf16.gmra.mxu0 %v110
  %v262 = vpop.f32.mrf.mxu0
  %v263 = vadd.f32 %v244, %v262
  %v264 = vpop.f32.mrf.mxu0
  %v265 = vadd.f32 %v246, %v264
  %266 = vmatmul.bf16.gmra.mxu0 %v113
  %v267 = vpop.f32.mrf.mxu0
  %v268 = vadd.f32 %v249, %v267
  %v269 = vpop.f32.mrf.mxu0
  %v270 = vadd.f32 %v251, %v269
  %271 = vdwg.mxu0
  %272 = vmatpush.bf16.msra.mxu0 0
  %273 = vmatpush.bf16.msra.mxu0 0
  %274 = vmatpush.bf16.msra.mxu0 0
  %275 = vmatpush.bf16.msra.mxu0 0
  %276 = vmatpush.bf16.msra.mxu0 0
  %277 = vmatpush.bf16.msra.mxu0 0
  %278 = vmatpush.bf16.msra.mxu0 %v208
  %279 = vmatpush.bf16.msra.mxu0 %v207
  %280 = vmatmul.bf16.gmra.mxu0 %v229
  %v281 = vpop.f32.mrf.mxu0
  %v282 = vadd.f32 %v263, %v281
  %v283 = vpop.f32.mrf.mxu0
  %v284 = vadd.f32 %v265, %v283
  %285 = vmatmul.bf16.gmra.mxu0 %v232
  %v286 = vpop.f32.mrf.mxu0
  %v287 = vadd.f32 %v268, %v286
  %v288 = vpop.f32.mrf.mxu0
  %v289 = vadd.f32 %v270, %v288
  %290 = vdwg.mxu0
  %v291 = vsel %vm227, %v282, 0.0
  %292 = vadd.xlane.f32.xlu0 %v291
  %v293 = vpop.xlane.xlu0 %292
  %v294 = vsel %vm227, %v284, 0.0
  %295 = vadd.xlane.f32.xlu0 %v294
  %v296 = vpop.xlane.xlu0 %295
  %v297 = vsel %vm227, %v287, 0.0
  %298 = vadd.xlane.f32.xlu0 %v297
  %v299 = vpop.xlane.xlu0 %298
  %v300 = vsel %vm227, %v289, 0.0
  %301 = vadd.xlane.f32.xlu0 %v300
  %v302 = vpop.xlane.xlu0 %301
  %v303 = vmul.f32 %v293, 0.03125
  %v304 = vmul.f32 %v296, 0.03125
  %v305 = vmul.f32 %v299, 0.03125
  %v306 = vmul.f32 %v302, 0.03125
  %v307 = vsub.f32 %v282, %v303
  %v308 = vsub.f32 %v284, %v304
  %v309 = vsub.f32 %v287, %v305
  %v310 = vsub.f32 %v289, %v306
  %v311 = vmul.f32 %v307, %v307
  %v312 = vmul.f32 %v308, %v308
  %v313 = vmul.f32 %v309, %v309
  %v314 = vmul.f32 %v310, %v310
  %v315 = vsel %vm227, %v311, 0.0
  %316 = vadd.xlane.f32.xlu0 %v315
  %v317 = vpop.xlane.xlu0 %316
  %v318 = vsel %vm227, %v312, 0.0
  %319 = vadd.xlane.f32.xlu0 %v318
  %v320 = vpop.xlane.xlu0 %319
  %v321 = vsel %vm227, %v313, 0.0
  %322 = vadd.xlane.f32.xlu0 %v321
  %v323 = vpop.xlane.xlu0 %322
  %v324 = vsel %vm227, %v314, 0.0
  %325 = vadd.xlane.f32.xlu0 %v324
  %v326 = vpop.xlane.xlu0 %325
  %v327 = vmul.f32 %v317, 0.03125
  %v328 = vmul.f32 %v320, 0.03125
  %v329 = vmul.f32 %v323, 0.03125
  %v330 = vmul.f32 %v326, 0.03125
  %v331 = vld [vmem:[%s3] sm:$0xff]
  %v332 = vld [vmem:[%s3 + $0x8] sm:$0xff]
  %v333 = vld [vmem:[%s3 + $0x10] sm:$0xff]
  %v334 = vld [vmem:[%s3 + $0x18] sm:$0xff]
  %v335 = vadd.f32 %v327, 1e-05
  %v336 = vadd.f32 %v328, 1e-05
  %v337 = vadd.f32 %v329, 1e-05
  %v338 = vadd.f32 %v330, 1e-05
  %v339 = vrsqrt.pop %v335
  %v340 = vmul.f32 %v339, %v335
  %v341 = vmul.f32 %v340, %v339
  %v342 = vmul.f32 0.5, %v341
  %v343 = vsub.f32 1.5, %v342
  %v344 = vmul.f32 %v339, %v343
  %vm345 = vweird.f32 %v335
  %vm346 = vweird.f32 %v339
  %vm347 = vmor %vm345, %vm346
  %v348 = vsel %vm347, %v339, %v344
  %v349 = vrsqrt.pop %v336
  %v350 = vmul.f32 %v349, %v336
  %v351 = vmul.f32 %v350, %v349
  %v352 = vmul.f32 0.5, %v351
  %v353 = vsub.f32 1.5, %v352
  %v354 = vmul.f32 %v349, %v353
  %vm355 = vweird.f32 %v336
  %vm356 = vweird.f32 %v349
  %vm357 = vmor %vm355, %vm356
  %v358 = vsel %vm357, %v349, %v354
  %v359 = vrsqrt.pop %v337
  %v360 = vmul.f32 %v359, %v337
  %v361 = vmul.f32 %v360, %v359
  %v362 = vmul.f32 0.5, %v361
  %v363 = vsub.f32 1.5, %v362
  %v364 = vmul.f32 %v359, %v363
  %vm365 = vweird.f32 %v337
  %vm366 = vweird.f32 %v359
  %vm367 = vmor %vm365, %vm366
  %v368 = vsel %vm367, %v359, %v364
  %v369 = vrsqrt.pop %v338
  %v370 = vmul.f32 %v369, %v338
  %v371 = vmul.f32 %v370, %v369
  %v372 = vmul.f32 0.5, %v371
  %v373 = vsub.f32 1.5, %v372
  %v374 = vmul.f32 %v369, %v373
  %vm375 = vweird.f32 %v338
  %vm376 = vweird.f32 %v369
  %vm377 = vmor %vm375, %vm376
  %v378 = vsel %vm377, %v369, %v374
  %v379 = vmul.f32 %v331, %v348
  %v380 = vmul.f32 %v332, %v358
  %v381 = vmul.f32 %v333, %v368
  %v382 = vmul.f32 %v334, %v378
  %384 = vset.pattern.permute.xlu0 0
  %385 = vperm.xlu0 %384, %v379
  %v386 = vpop.permute.xlu0 %385
  %389 = vset.pattern.permute.xlu0 0
  %390 = vperm.xlu0 %389, %v380
  %v391 = vpop.permute.xlu0 %390
  %394 = vset.pattern.permute.xlu0 0
  %395 = vperm.xlu0 %394, %v381
  %v396 = vpop.permute.xlu0 %395
  %399 = vset.pattern.permute.xlu0 0
  %400 = vperm.xlu0 %399, %v382
  %v401 = vpop.permute.xlu0 %400
  %v403 = vmul.f32 %v307, %v386
  %v404 = vmul.f32 %v308, %v391
  %v405 = vmul.f32 %v309, %v396
  %v406 = vmul.f32 %v310, %v401
  %v407 = vld [vmem:[%s4] sm:$0xff]
  %v408 = vld [vmem:[%s4 + $0x8] sm:$0xff]
  %v409 = vld [vmem:[%s4 + $0x10] sm:$0xff]
  %v410 = vld [vmem:[%s4 + $0x18] sm:$0xff]
  %412 = vset.pattern.permute.xlu0 0
  %413 = vperm.xlu0 %412, %v407
  %v414 = vpop.permute.xlu0 %413
  %417 = vset.pattern.permute.xlu0 0
  %418 = vperm.xlu0 %417, %v408
  %v419 = vpop.permute.xlu0 %418
  %422 = vset.pattern.permute.xlu0 0
  %423 = vperm.xlu0 %422, %v409
  %v424 = vpop.permute.xlu0 %423
  %427 = vset.pattern.permute.xlu0 0
  %428 = vperm.xlu0 %427, %v410
  %v429 = vpop.permute.xlu0 %428
  %v431 = vadd.f32 %v403, %v414
  %v432 = vadd.f32 %v404, %v419
  %v433 = vadd.f32 %v405, %v424
  %v434 = vadd.f32 %v406, %v429
  %v435 = vmax.f32 %v431, 0.0
  %v436 = vmax.f32 %v432, 0.0
  %v437 = vmax.f32 %v433, 0.0
  %v438 = vmax.f32 %v434, 0.0
  %v439 = vpack.c.bf16 %v435, %v435
  %v440 = vpack.c.bf16 %v436, %v436
  %v441 = vpack.c.bf16 %v437, %v437
  %v442 = vpack.c.bf16 %v438, %v438
  %vm443 = vcmask 257024
  %444 = vst.msk [vmem:[%s5] sm:$0xf] %vm443, %v439
  %445 = vst.msk [vmem:[%s5 + $0x4] sm:$0xf] %vm443, %v440
  %446 = vst.msk [vmem:[%s5 + $0x8] sm:$0xf] %vm443, %v441
  %447 = vst.msk [vmem:[%s5 + $0xc] sm:$0xf] %vm443, %v442
  // Predicated region
  $region22: #{generator_forward.13} parent=0 // pred_check
    _
  $region23: #{generator_forward.13} parent=0 // pred_check_branch
    %449 = sbr.rel (0) target = $region25
  $region24: #{generator_forward.13} parent=0 // pred_region
    _
  $region25: #{generator_forward.13} parent=0 // pred_fallthru
    _
  // Predicated region
  $region26: #{generator_forward.13} parent=0 // pred_check
    _
  $region27: #{generator_forward.13} parent=0 // pred_check_branch
    %451 = sbr.rel (0) target = $region29
  $region28: #{generator_forward.13} parent=0 // pred_region
    _
  $region29: #{generator_forward.13} parent=0 // pred_fallthru
    _

// kernel: generator_forward.14
$region0: #{generator_forward.14}
  #allocation0 [shape = 'u32[]', space=smem, size = 0x4, offset = 0x4, fixed_abs, tag = 'smem constant byte address 0x4 - core index']
  #allocation1 [shape = 'u32[72,128]{1,0:T(1,128)}', space=vmem, size = 0x9000, scoped, tag = 'internal scratch']
  %s0 = inlined_call_operand.vmem [shape: bf16[32,288], index: 0, kind: input, shape index: {}]
  %s1 = inlined_call_operand.vmem [shape: bf16[288,32], index: 1, kind: input, shape index: {}]
  %s2 = inlined_call_operand.vmem [shape: f32[32,1], index: 2, kind: input, shape index: {}]
  %s3 = inlined_call_operand.vmem [shape: f32[32,1], index: 3, kind: input, shape index: {}]
  %s4 = inlined_call_operand.vmem [shape: f32[32,1], index: 4, kind: input, shape index: {}]
  %s5 = inlined_call_operand.vmem [shape: bf16[32,32], index: 5, kind: input, shape index: {}]
  %s6 = inlined_call_operand.vmem [shape: bf16[32,32], index: 6, kind: output, shape index: {}]
  %s7 = sld [smem:[#allocation0]]
  $region34: #{generator_forward.14} parent=0
    _
  %s9 = ssub.s32 1, %s7
  %s10 = scalar_select 0, %s9, %s7
  // Predicated region
  $region2: #{generator_forward.14} parent=0 // pred_check
    _
  $region3: #{generator_forward.14} parent=0 // pred_check_branch
    %12 = sbr.rel (0) target = $region5
  $region4: #{generator_forward.14} parent=0 // pred_region
    _
  $region5: #{generator_forward.14} parent=0 // pred_fallthru
    _
  // Predicated region
  $region6: #{generator_forward.14} parent=0 // pred_check
    _
  $region7: #{generator_forward.14} parent=0 // pred_check_branch
    %14 = sbr.rel (0) target = $region9
  $region8: #{generator_forward.14} parent=0 // pred_region
    _
  $region9: #{generator_forward.14} parent=0 // pred_fallthru
    _
  // Predicated region
  $region10: #{generator_forward.14} parent=0 // pred_check
    _
  $region11: #{generator_forward.14} parent=0 // pred_check_branch
    %16 = sbr.rel (0) target = $region13
  $region12: #{generator_forward.14} parent=0 // pred_region
    _
  $region13: #{generator_forward.14} parent=0 // pred_fallthru
    _
  // Predicated region
  $region14: #{generator_forward.14} parent=0 // pred_check
    _
  $region15: #{generator_forward.14} parent=0 // pred_check_branch
    %18 = sbr.rel (0) target = $region17
  $region16: #{generator_forward.14} parent=0 // pred_region
    _
  $region17: #{generator_forward.14} parent=0 // pred_fallthru
    _
  // Predicated region
  $region18: #{generator_forward.14} parent=0 // pred_check
    _
  $region19: #{generator_forward.14} parent=0 // pred_check_branch
    %20 = sbr.rel (0) target = $region21
  $region20: #{generator_forward.14} parent=0 // pred_region
    _
  $region21: #{generator_forward.14} parent=0 // pred_fallthru
    _
  // Predicated region
  $region22: #{generator_forward.14} parent=0 // pred_check
    _
  $region23: #{generator_forward.14} parent=0 // pred_check_branch
    %22 = sbr.rel (0) target = $region25
  $region24: #{generator_forward.14} parent=0 // pred_region
    _
  $region25: #{generator_forward.14} parent=0 // pred_fallthru
    _
  %v24 = vld [vmem:[%s0] sm:$0xff]
  %v25 = vld [vmem:[%s0 + $0x8] sm:$0xf]
  %v26 = vld [vmem:[%s0 + $0xc] sm:$0xff]
  %v27 = vld [vmem:[%s0 + $0x14] sm:$0xf]
  %v28 = vld [vmem:[%s0 + $0x18] sm:$0xff]
  %v29 = vld [vmem:[%s0 + $0x20] sm:$0xf]
  %v30 = vld [vmem:[%s0 + $0x24] sm:$0xff]
  %v31 = vld [vmem:[%s0 + $0x2c] sm:$0xf]
  %v32 = vld [vmem:[%s1] sm:$0xf]
  %v33 = vld [vmem:[%s1 + $0x4] sm:$0xf]
  %v34 = vld [vmem:[%s1 + $0x8] sm:$0xf]
  %v35 = vld [vmem:[%s1 + $0xc] sm:$0xf]
  %v36 = vld [vmem:[%s1 + $0x10] sm:$0xf]
  %v37 = vld [vmem:[%s1 + $0x14] sm:$0xf]
  %v38 = vld [vmem:[%s1 + $0x18] sm:$0xf]
  %v39 = vld [vmem:[%s1 + $0x1c] sm:$0xf]
  %v40 = vld [vmem:[%s1 + $0x20] sm:$0xf]
  %v41 = vld [vmem:[%s1 + $0x24] sm:$0xf]
  %v42 = vld [vmem:[%s1 + $0x28] sm:$0xf]
  %v43 = vld [vmem:[%s1 + $0x2c] sm:$0xf]
  %v44 = vld [vmem:[%s1 + $0x30] sm:$0xf]
  %v45 = vld [vmem:[%s1 + $0x34] sm:$0xf]
  %v46 = vld [vmem:[%s1 + $0x38] sm:$0xf]
  %v47 = vld [vmem:[%s1 + $0x3c] sm:$0xf]
  %v48 = vld [vmem:[%s1 + $0x40] sm:$0xf]
  %v49 = vld [vmem:[%s1 + $0x44] sm:$0xf]
  %v50 = vld [vmem:[%s1 + $0x48] sm:$0xf]
  %v51 = vld [vmem:[%s1 + $0x4c] sm:$0xf]
  %v52 = vld [vmem:[%s1 + $0x50] sm:$0xf]
  %v53 = vld [vmem:[%s1 + $0x54] sm:$0xf]
  %v54 = vld [vmem:[%s1 + $0x58] sm:$0xf]
  %v55 = vld [vmem:[%s1 + $0x5c] sm:$0xf]
  %v56 = vld [vmem:[%s1 + $0x60] sm:$0xf]
  %v57 = vld [vmem:[%s1 + $0x64] sm:$0xf]
  %v58 = vld [vmem:[%s1 + $0x68] sm:$0xf]
  %v59 = vld [vmem:[%s1 + $0x6c] sm:$0xf]
  %v60 = vld [vmem:[%s1 + $0x70] sm:$0xf]
  %v61 = vld [vmem:[%s1 + $0x74] sm:$0xf]
  %v62 = vld [vmem:[%s1 + $0x78] sm:$0xf]
  %v63 = vld [vmem:[%s1 + $0x7c] sm:$0xf]
  %v64 = vld [vmem:[%s1 + $0x80] sm:$0xf]
  %v65 = vld [vmem:[%s1 + $0x84] sm:$0xf]
  %v66 = vld [vmem:[%s1 + $0x88] sm:$0xf]
  %v67 = vld [vmem:[%s1 + $0x8c] sm:$0xf]
  %v68 = vld [vmem:[%s2] sm:$0xff]
  %v69 = vld [vmem:[%s2 + $0x8] sm:$0xff]
  %v70 = vld [vmem:[%s2 + $0x10] sm:$0xff]
  %v71 = vld [vmem:[%s2 + $0x18] sm:$0xff]
  %73 = vset.pattern.permute.xlu0 0
  %74 = vperm.xlu0 %73, %v68
  %v75 = vpop.permute.xlu0 %74
  %78 = vset.pattern.permute.xlu0 0
  %79 = vperm.xlu0 %78, %v69
  %v80 = vpop.permute.xlu0 %79
  %83 = vset.pattern.permute.xlu0 0
  %84 = vperm.xlu0 %83, %v70
  %v85 = vpop.permute.xlu0 %84
  %88 = vset.pattern.permute.xlu0 0
  %89 = vperm.xlu0 %88, %v71
  %v90 = vpop.permute.xlu0 %89
  %v100 = vunpack.c.l.b16 %v24
  %v101 = vunpack.c.h.b16 %v24
  %v102 = vunpack.c.l.b16 %v25
  %v103 = vunpack.c.l.b16 %v26
  %v104 = vunpack.c.h.b16 %v26
  %v105 = vunpack.c.l.b16 %v27
  %v106 = vunpack.c.l.b16 %v28
  %v107 = vunpack.c.h.b16 %v28
  %v108 = vunpack.c.l.b16 %v29
  %v109 = vunpack.c.l.b16 %v30
  %v110 = vunpack.c.h.b16 %v30
  %v111 = vunpack.c.l.b16 %v31
  %v112 = vpack.c.b16 %v103, %v100
  %v113 = vpack.c.b16 %v104, %v101
  %v114 = vpack.c.b16 %v105, %v102
  %v115 = vpack.c.b16 %v109, %v106
  %v116 = vpack.c.b16 %v110, %v107
  %v117 = vpack.c.b16 %v111, %v108
  %v158 = vunpack.c.l.b16 %v32
  %v159 = vunpack.c.l.b16 %v33
  %v160 = vunpack.c.l.b16 %v34
  %v161 = vunpack.c.l.b16 %v35
  %v162 = vunpack.c.l.b16 %v36
  %v163 = vunpack.c.l.b16 %v37
  %v164 = vunpack.c.l.b16 %v38
  %v165 = vunpack.c.l.b16 %v39
  %v166 = vunpack.c.l.b16 %v40
  %v167 = vunpack.c.l.b16 %v41
  %v168 = vunpack.c.l.b16 %v42
  %v169 = vunpack.c.l.b16 %v43
  %v170 = vunpack.c.l.b16 %v44
  %v171 = vunpack.c.l.b16 %v45
  %v172 = vunpack.c.l.b16 %v46
  %v173 = vunpack.c.l.b16 %v47
  %v174 = vunpack.c.l.b16 %v48
  %v175 = vunpack.c.l.b16 %v49
  %v176 = vunpack.c.l.b16 %v50
  %v177 = vunpack.c.l.b16 %v51
  %v178 = vunpack.c.l.b16 %v52
  %v179 = vunpack.c.l.b16 %v53
  %v180 = vunpack.c.l.b16 %v54
  %v181 = vunpack.c.l.b16 %v55
  %v182 = vunpack.c.l.b16 %v56
  %v183 = vunpack.c.l.b16 %v57
  %v184 = vunpack.c.l.b16 %v58
  %v185 = vunpack.c.l.b16 %v59
  %v186 = vunpack.c.l.b16 %v60
  %v187 = vunpack.c.l.b16 %v61
  %v188 = vunpack.c.l.b16 %v62
  %v189 = vunpack.c.l.b16 %v63
  %v190 = vunpack.c.l.b16 %v64
  %v191 = vunpack.c.l.b16 %v65
  %v192 = vunpack.c.l.b16 %v66
  %v193 = vunpack.c.l.b16 %v67
  %v194 = vpack.c.b16 %v159, %v158
  %v195 = vpack.c.b16 %v161, %v160
  %v196 = vpack.c.b16 %v163, %v162
  %v197 = vpack.c.b16 %v165, %v164
  %v198 = vpack.c.b16 %v167, %v166
  %v199 = vpack.c.b16 %v169, %v168
  %v200 = vpack.c.b16 %v171, %v170
  %v201 = vpack.c.b16 %v173, %v172
  %v202 = vpack.c.b16 %v175, %v174
  %v203 = vpack.c.b16 %v177, %v176
  %v204 = vpack.c.b16 %v179, %v178
  %v205 = vpack.c.b16 %v181, %v180
  %v206 = vpack.c.b16 %v183, %v182
  %v207 = vpack.c.b16 %v185, %v184
  %v208 = vpack.c.b16 %v187, %v186
  %v209 = vpack.c.b16 %v189, %v188
  %v210 = vpack.c.b16 %v191, %v190
  %v211 = vpack.c.b16 %v193, %v192
  %vm230 = vcmask 261120
  %v232 = vsel %vm230, %v114, 0
  %v235 = vsel %vm230, %v117, 0
  %237 = vmatpush.bf16.msra.mxu0 %v201
  %238 = vmatpush.bf16.msra.mxu0 %v200
  %239 = vmatpush.bf16.msra.mxu0 %v199
  %240 = vmatpush.bf16.msra.mxu0 %v198
  %241 = vmatpush.bf16.msra.mxu0 %v197
  %242 = vmatpush.bf16.msra.mxu0 %v196
  %243 = vmatpush.bf16.msra.mxu0 %v195
  %244 = vmatpush.bf16.msra.mxu0 %v194
  %245 = vmatmul.bf16.gmra.mxu0 %v112
  %v246 = vpop.f32.mrf.mxu0
  %v247 = vadd.f32 %v75, %v246
  %v248 = vpop.f32.mrf.mxu0
  %v249 = vadd.f32 %v80, %v248
  %250 = vmatmul.bf16.gmra.mxu0 %v115
  %v251 = vpop.f32.mrf.mxu0
  %v252 = vadd.f32 %v85, %v251
  %v253 = vpop.f32.mrf.mxu0
  %v254 = vadd.f32 %v90, %v253
  %255 = vdwg.mxu0
  %256 = vmatpush.bf16.msra.mxu0 %v209
  %257 = vmatpush.bf16.msra.mxu0 %v208
  %258 = vmatpush.bf16.msra.mxu0 %v207
  %259 = vmatpush.bf16.msra.mxu0 %v206
  %260 = vmatpush.bf16.msra.mxu0 %v205
  %261 = vmatpush.bf16.msra.mxu0 %v204
  %262 = vmatpush.bf16.msra.mxu0 %v203
  %263 = vmatpush.bf16.msra.mxu0 %v202
  %264 = vmatmul.bf16.gmra.mxu0 %v113
  %v265 = vpop.f32.mrf.mxu0
  %v266 = vadd.f32 %v247, %v265
  %v267 = vpop.f32.mrf.mxu0
  %v268 = vadd.f32 %v249, %v267
  %269 = vmatmul.bf16.gmra.mxu0 %v116
  %v270 = vpop.f32.mrf.mxu0
  %v271 = vadd.f32 %v252, %v270
  %v272 = vpop.f32.mrf.mxu0
  %v273 = vadd.f32 %v254, %v272
  %274 = vdwg.mxu0
  %275 = vmatpush.bf16.msra.mxu0 0
  %276 = vmatpush.bf16.msra.mxu0 0
  %277 = vmatpush.bf16.msra.mxu0 0
  %278 = vmatpush.bf16.msra.mxu0 0
  %279 = vmatpush.bf16.msra.mxu0 0
  %280 = vmatpush.bf16.msra.mxu0 0
  %281 = vmatpush.bf16.msra.mxu0 %v211
  %282 = vmatpush.bf16.msra.mxu0 %v210
  %283 = vmatmul.bf16.gmra.mxu0 %v232
  %v284 = vpop.f32.mrf.mxu0
  %v285 = vadd.f32 %v266, %v284
  %v286 = vpop.f32.mrf.mxu0
  %v287 = vadd.f32 %v268, %v286
  %288 = vmatmul.bf16.gmra.mxu0 %v235
  %v289 = vpop.f32.mrf.mxu0
  %v290 = vadd.f32 %v271, %v289
  %v291 = vpop.f32.mrf.mxu0
  %v292 = vadd.f32 %v273, %v291
  %293 = vdwg.mxu0
  %v294 = vsel %vm230, %v285, 0.0
  %295 = vadd.xlane.f32.xlu0 %v294
  %v296 = vpop.xlane.xlu0 %295
  %v297 = vsel %vm230, %v287, 0.0
  %298 = vadd.xlane.f32.xlu0 %v297
  %v299 = vpop.xlane.xlu0 %298
  %v300 = vsel %vm230, %v290, 0.0
  %301 = vadd.xlane.f32.xlu0 %v300
  %v302 = vpop.xlane.xlu0 %301
  %v303 = vsel %vm230, %v292, 0.0
  %304 = vadd.xlane.f32.xlu0 %v303
  %v305 = vpop.xlane.xlu0 %304
  %v306 = vmul.f32 %v296, 0.03125
  %v307 = vmul.f32 %v299, 0.03125
  %v308 = vmul.f32 %v302, 0.03125
  %v309 = vmul.f32 %v305, 0.03125
  %v310 = vsub.f32 %v285, %v306
  %v311 = vsub.f32 %v287, %v307
  %v312 = vsub.f32 %v290, %v308
  %v313 = vsub.f32 %v292, %v309
  %v314 = vmul.f32 %v310, %v310
  %v315 = vmul.f32 %v311, %v311
  %v316 = vmul.f32 %v312, %v312
  %v317 = vmul.f32 %v313, %v313
  %v318 = vsel %vm230, %v314, 0.0
  %319 = vadd.xlane.f32.xlu0 %v318
  %v320 = vpop.xlane.xlu0 %319
  %v321 = vsel %vm230, %v315, 0.0
  %322 = vadd.xlane.f32.xlu0 %v321
  %v323 = vpop.xlane.xlu0 %322
  %v324 = vsel %vm230, %v316, 0.0
  %325 = vadd.xlane.f32.xlu0 %v324
  %v326 = vpop.xlane.xlu0 %325
  %v327 = vsel %vm230, %v317, 0.0
  %328 = vadd.xlane.f32.xlu0 %v327
  %v329 = vpop.xlane.xlu0 %328
  %v330 = vmul.f32 %v320, 0.03125
  %v331 = vmul.f32 %v323, 0.03125
  %v332 = vmul.f32 %v326, 0.03125
  %v333 = vmul.f32 %v329, 0.03125
  %v334 = vld [vmem:[%s3] sm:$0xff]
  %v335 = vld [vmem:[%s3 + $0x8] sm:$0xff]
  %v336 = vld [vmem:[%s3 + $0x10] sm:$0xff]
  %v337 = vld [vmem:[%s3 + $0x18] sm:$0xff]
  %v338 = vadd.f32 %v330, 1e-05
  %v339 = vadd.f32 %v331, 1e-05
  %v340 = vadd.f32 %v332, 1e-05
  %v341 = vadd.f32 %v333, 1e-05
  %v342 = vrsqrt.pop %v338
  %v343 = vmul.f32 %v342, %v338
  %v344 = vmul.f32 %v343, %v342
  %v345 = vmul.f32 0.5, %v344
  %v346 = vsub.f32 1.5, %v345
  %v347 = vmul.f32 %v342, %v346
  %vm348 = vweird.f32 %v338
  %vm349 = vweird.f32 %v342
  %vm350 = vmor %vm348, %vm349
  %v351 = vsel %vm350, %v342, %v347
  %v352 = vrsqrt.pop %v339
  %v353 = vmul.f32 %v352, %v339
  %v354 = vmul.f32 %v353, %v352
  %v355 = vmul.f32 0.5, %v354
  %v356 = vsub.f32 1.5, %v355
  %v357 = vmul.f32 %v352, %v356
  %vm358 = vweird.f32 %v339
  %vm359 = vweird.f32 %v352
  %vm360 = vmor %vm358, %vm359
  %v361 = vsel %vm360, %v352, %v357
  %v362 = vrsqrt.pop %v340
  %v363 = vmul.f32 %v362, %v340
  %v364 = vmul.f32 %v363, %v362
  %v365 = vmul.f32 0.5, %v364
  %v366 = vsub.f32 1.5, %v365
  %v367 = vmul.f32 %v362, %v366
  %vm368 = vweird.f32 %v340
  %vm369 = vweird.f32 %v362
  %vm370 = vmor %vm368, %vm369
  %v371 = vsel %vm370, %v362, %v367
  %v372 = vrsqrt.pop %v341
  %v373 = vmul.f32 %v372, %v341
  %v374 = vmul.f32 %v373, %v372
  %v375 = vmul.f32 0.5, %v374
  %v376 = vsub.f32 1.5, %v375
  %v377 = vmul.f32 %v372, %v376
  %vm378 = vweird.f32 %v341
  %vm379 = vweird.f32 %v372
  %vm380 = vmor %vm378, %vm379
  %v381 = vsel %vm380, %v372, %v377
  %v382 = vmul.f32 %v334, %v351
  %v383 = vmul.f32 %v335, %v361
  %v384 = vmul.f32 %v336, %v371
  %v385 = vmul.f32 %v337, %v381
  %387 = vset.pattern.permute.xlu0 0
  %388 = vperm.xlu0 %387, %v382
  %v389 = vpop.permute.xlu0 %388
  %392 = vset.pattern.permute.xlu0 0
  %393 = vperm.xlu0 %392, %v383
  %v394 = vpop.permute.xlu0 %393
  %397 = vset.pattern.permute.xlu0 0
  %398 = vperm.xlu0 %397, %v384
  %v399 = vpop.permute.xlu0 %398
  %402 = vset.pattern.permute.xlu0 0
  %403 = vperm.xlu0 %402, %v385
  %v404 = vpop.permute.xlu0 %403
  %v406 = vmul.f32 %v310, %v389
  %v407 = vmul.f32 %v311, %v394
  %v408 = vmul.f32 %v312, %v399
  %v409 = vmul.f32 %v313, %v404
  %v410 = vld [vmem:[%s4] sm:$0xff]
  %v411 = vld [vmem:[%s4 + $0x8] sm:$0xff]
  %v412 = vld [vmem:[%s4 + $0x10] sm:$0xff]
  %v413 = vld [vmem:[%s4 + $0x18] sm:$0xff]
  %415 = vset.pattern.permute.xlu0 0
  %416 = vperm.xlu0 %415, %v410
  %v417 = vpop.permute.xlu0 %416
  %420 = vset.pattern.permute.xlu0 0
  %421 = vperm.xlu0 %420, %v411
  %v422 = vpop.permute.xlu0 %421
  %425 = vset.pattern.permute.xlu0 0
  %426 = vperm.xlu0 %425, %v412
  %v427 = vpop.permute.xlu0 %426
  %430 = vset.pattern.permute.xlu0 0
  %431 = vperm.xlu0 %430, %v413
  %v432 = vpop.permute.xlu0 %431
  %v434 = vadd.f32 %v406, %v417
  %v435 = vadd.f32 %v407, %v422
  %v436 = vadd.f32 %v408, %v427
  %v437 = vadd.f32 %v409, %v432
  %v438 = vld [vmem:[%s5] sm:$0xf]
  %v439 = vld [vmem:[%s5 + $0x4] sm:$0xf]
  %v440 = vld [vmem:[%s5 + $0x8] sm:$0xf]
  %v441 = vld [vmem:[%s5 + $0xc] sm:$0xf]
  %v442 = vunpack.c.l.bf16 %v438
  %v443 = vunpack.c.l.bf16 %v439
  %v444 = vunpack.c.l.bf16 %v440
  %v445 = vunpack.c.l.bf16 %v441
  %v446 = vadd.f32 %v434, %v442
  %v447 = vadd.f32 %v435, %v443
  %v448 = vadd.f32 %v436, %v444
  %v449 = vadd.f32 %v437, %v445
  %v450 = vpack.c.bf16 %v446, %v446
  %v451 = vpack.c.bf16 %v447, %v447
  %v452 = vpack.c.bf16 %v448, %v448
  %v453 = vpack.c.bf16 %v449, %v449
  %vm454 = vcmask 257024
  %455 = vst.msk [vmem:[%s6] sm:$0xf] %vm454, %v450
  %456 = vst.msk [vmem:[%s6 + $0x4] sm:$0xf] %vm454, %v451
  %457 = vst.msk [vmem:[%s6 + $0x8] sm:$0xf] %vm454, %v452
  %458 = vst.msk [vmem:[%s6 + $0xc] sm:$0xf] %vm454, %v453
  // Predicated region
  $region26: #{generator_forward.14} parent=0 // pred_check
    _
  $region27: #{generator_forward.14} parent=0 // pred_check_branch
    %460 = sbr.rel (0) target = $region29
  $region28: #{generator_forward.14} parent=0 // pred_region
    _
  $region29: #{generator_forward.14} parent=0 // pred_fallthru
    _
  // Predicated region
  $region30: #{generator_forward.14} parent=0 // pred_check
    _
  $region31: #{generator_forward.14} parent=0 // pred_check_branch
    %462 = sbr.rel (0) target = $region33
  $region32: #{generator_forward.14} parent=0 // pred_region
    _
  $region33: #{generator_forward.14} parent=0 // pred_fallthru
    _

// kernel: generator_forward.17
$region0: #{generator_forward.17}
  #allocation0 [shape = 'u32[]', space=smem, size = 0x4, offset = 0x4, fixed_abs, tag = 'smem constant byte address 0x4 - core index']
  #allocation1 [shape = 'u32[72,128]{1,0:T(1,128)}', space=vmem, size = 0x9000, scoped, tag = 'internal scratch']
  %s0 = inlined_call_operand.vmem [shape: bf16[16,288], index: 0, kind: input, shape index: {}]
  %s1 = inlined_call_operand.vmem [shape: bf16[288,98], index: 1, kind: input, shape index: {}]
  %s2 = inlined_call_operand.vmem [shape: f32[16,1], index: 2, kind: input, shape index: {}, may-alias: {2,4}]
  %s3 = inlined_call_operand.vmem [shape: f32[16,1], index: 3, kind: input, shape index: {}]
  %s4 = inlined_call_operand.vmem [shape: f32[16,1], index: 4, kind: input, shape index: {}, may-alias: {2,4}]
  %s5 = inlined_call_operand.vmem [shape: bf16[16,98], index: 5, kind: output, shape index: {}]
  %s6 = sld [smem:[#allocation0]]
  $region30: #{generator_forward.17} parent=0
    _
  %s8 = ssub.s32 1, %s6
  %s9 = scalar_select 0, %s8, %s6
  // Predicated region
  $region2: #{generator_forward.17} parent=0 // pred_check
    _
  $region3: #{generator_forward.17} parent=0 // pred_check_branch
    %11 = sbr.rel (0) target = $region5
  $region4: #{generator_forward.17} parent=0 // pred_region
    _
  $region5: #{generator_forward.17} parent=0 // pred_fallthru
    _
  // Predicated region
  $region6: #{generator_forward.17} parent=0 // pred_check
    _
  $region7: #{generator_forward.17} parent=0 // pred_check_branch
    %13 = sbr.rel (0) target = $region9
  $region8: #{generator_forward.17} parent=0 // pred_region
    _
  $region9: #{generator_forward.17} parent=0 // pred_fallthru
    _
  // Predicated region
  $region10: #{generator_forward.17} parent=0 // pred_check
    _
  $region11: #{generator_forward.17} parent=0 // pred_check_branch
    %15 = sbr.rel (0) target = $region13
  $region12: #{generator_forward.17} parent=0 // pred_region
    _
  $region13: #{generator_forward.17} parent=0 // pred_fallthru
    _
  // Predicated region
  $region14: #{generator_forward.17} parent=0 // pred_check
    _
  $region15: #{generator_forward.17} parent=0 // pred_check_branch
    %17 = sbr.rel (0) target = $region17
  $region16: #{generator_forward.17} parent=0 // pred_region
    _
  $region17: #{generator_forward.17} parent=0 // pred_fallthru
    _
  // Predicated region
  $region18: #{generator_forward.17} parent=0 // pred_check
    _
  $region19: #{generator_forward.17} parent=0 // pred_check_branch
    %19 = sbr.rel (0) target = $region21
  $region20: #{generator_forward.17} parent=0 // pred_region
    _
  $region21: #{generator_forward.17} parent=0 // pred_fallthru
    _
  %v21 = vld [vmem:[%s0] sm:$0xff]
  %v22 = vld [vmem:[%s0 + $0x8] sm:$0xf]
  %v23 = vld [vmem:[%s0 + $0xc] sm:$0xff]
  %v24 = vld [vmem:[%s0 + $0x14] sm:$0xf]
  %v25 = vld [vmem:[%s1] sm:$0xf]
  %v26 = vld [vmem:[%s1 + $0x4] sm:$0xf]
  %v27 = vld [vmem:[%s1 + $0x8] sm:$0xf]
  %v28 = vld [vmem:[%s1 + $0xc] sm:$0xf]
  %v29 = vld [vmem:[%s1 + $0x10] sm:$0xf]
  %v30 = vld [vmem:[%s1 + $0x14] sm:$0xf]
  %v31 = vld [vmem:[%s1 + $0x18] sm:$0xf]
  %v32 = vld [vmem:[%s1 + $0x1c] sm:$0xf]
  %v33 = vld [vmem:[%s1 + $0x20] sm:$0xf]
  %v34 = vld [vmem:[%s1 + $0x24] sm:$0xf]
  %v35 = vld [vmem:[%s1 + $0x28] sm:$0xf]
  %v36 = vld [vmem:[%s1 + $0x2c] sm:$0xf]
  %v37 = vld [vmem:[%s1 + $0x30] sm:$0xf]
  %v38 = vld [vmem:[%s1 + $0x34] sm:$0xf]
  %v39 = vld [vmem:[%s1 + $0x38] sm:$0xf]
  %v40 = vld [vmem:[%s1 + $0x3c] sm:$0xf]
  %v41 = vld [vmem:[%s1 + $0x40] sm:$0xf]
  %v42 = vld [vmem:[%s1 + $0x44] sm:$0xf]
  %v43 = vld [vmem:[%s1 + $0x48] sm:$0xf]
  %v44 = vld [vmem:[%s1 + $0x4c] sm:$0xf]
  %v45 = vld [vmem:[%s1 + $0x50] sm:$0xf]
  %v46 = vld [vmem:[%s1 + $0x54] sm:$0xf]
  %v47 = vld [vmem:[%s1 + $0x58] sm:$0xf]
  %v48 = vld [vmem:[%s1 + $0x5c] sm:$0xf]
  %v49 = vld [vmem:[%s1 + $0x60] sm:$0xf]
  %v50 = vld [vmem:[%s1 + $0x64] sm:$0xf]
  %v51 = vld [vmem:[%s1 + $0x68] sm:$0xf]
  %v52 = vld [vmem:[%s1 + $0x6c] sm:$0xf]
  %v53 = vld [vmem:[%s1 + $0x70] sm:$0xf]
  %v54 = vld [vmem:[%s1 + $0x74] sm:$0xf]
  %v55 = vld [vmem:[%s1 + $0x78] sm:$0xf]
  %v56 = vld [vmem:[%s1 + $0x7c] sm:$0xf]
  %v57 = vld [vmem:[%s1 + $0x80] sm:$0xf]
  %v58 = vld [vmem:[%s1 + $0x84] sm:$0xf]
  %v59 = vld [vmem:[%s1 + $0x88] sm:$0xf]
  %v60 = vld [vmem:[%s1 + $0x8c] sm:$0xf]
  %v61 = vld [vmem:[%s2] sm:$0xff]
  %v62 = vld [vmem:[%s2 + $0x8] sm:$0xff]
  %64 = vset.pattern.permute.xlu0 0
  %65 = vperm.xlu0 %64, %v61
  %v66 = vpop.permute.xlu0 %65
  %69 = vset.pattern.permute.xlu0 0
  %70 = vperm.xlu0 %69, %v62
  %v71 = vpop.permute.xlu0 %70
  %v77 = vunpack.c.l.b16 %v21
  %v78 = vunpack.c.h.b16 %v21
  %v79 = vunpack.c.l.b16 %v22
  %v80 = vunpack.c.l.b16 %v23
  %v81 = vunpack.c.h.b16 %v23
  %v82 = vunpack.c.l.b16 %v24
  %v83 = vpack.c.b16 %v80, %v77
  %v84 = vpack.c.b16 %v81, %v78
  %v85 = vpack.c.b16 %v82, %v79
  %v124 = vunpack.c.l.b16 %v25
  %v125 = vunpack.c.l.b16 %v26
  %v126 = vunpack.c.l.b16 %v27
  %v127 = vunpack.c.l.b16 %v28
  %v128 = vunpack.c.l.b16 %v29
  %v129 = vunpack.c.l.b16 %v30
  %v130 = vunpack.c.l.b16 %v31
  %v131 = vunpack.c.l.b16 %v32
  %v132 = vunpack.c.l.b16 %v33
  %v133 = vunpack.c.l.b16 %v34
  %v134 = vunpack.c.l.b16 %v35
  %v135 = vunpack.c.l.b16 %v36
  %v136 = vunpack.c.l.b16 %v37
  %v137 = vunpack.c.l.b16 %v38
  %v138 = vunpack.c.l.b16 %v39
  %v139 = vunpack.c.l.b16 %v40
  %v140 = vunpack.c.l.b16 %v41
  %v141 = vunpack.c.l.b16 %v42
  %v142 = vunpack.c.l.b16 %v43
  %v143 = vunpack.c.l.b16 %v44
  %v144 = vunpack.c.l.b16 %v45
  %v145 = vunpack.c.l.b16 %v46
  %v146 = vunpack.c.l.b16 %v47
  %v147 = vunpack.c.l.b16 %v48
  %v148 = vunpack.c.l.b16 %v49
  %v149 = vunpack.c.l.b16 %v50
  %v150 = vunpack.c.l.b16 %v51
  %v151 = vunpack.c.l.b16 %v52
  %v152 = vunpack.c.l.b16 %v53
  %v153 = vunpack.c.l.b16 %v54
  %v154 = vunpack.c.l.b16 %v55
  %v155 = vunpack.c.l.b16 %v56
  %v156 = vunpack.c.l.b16 %v57
  %v157 = vunpack.c.l.b16 %v58
  %v158 = vunpack.c.l.b16 %v59
  %v159 = vunpack.c.l.b16 %v60
  %v160 = vpack.c.b16 %v125, %v124
  %v161 = vpack.c.b16 %v127, %v126
  %v162 = vpack.c.b16 %v129, %v128
  %v163 = vpack.c.b16 %v131, %v130
  %v164 = vpack.c.b16 %v133, %v132
  %v165 = vpack.c.b16 %v135, %v134
  %v166 = vpack.c.b16 %v137, %v136
  %v167 = vpack.c.b16 %v139, %v138
  %v168 = vpack.c.b16 %v141, %v140
  %v169 = vpack.c.b16 %v143, %v142
  %v170 = vpack.c.b16 %v145, %v144
  %v171 = vpack.c.b16 %v147, %v146
  %v172 = vpack.c.b16 %v149, %v148
  %v173 = vpack.c.b16 %v151, %v150
  %v174 = vpack.c.b16 %v153, %v152
  %v175 = vpack.c.b16 %v155, %v154
  %v176 = vpack.c.b16 %v157, %v156
  %v177 = vpack.c.b16 %v159, %v158
  %vm196 = vcmask 261120
  %v198 = vsel %vm196, %v85, 0
  %200 = vmatpush.bf16.msra.mxu0 %v167
  %201 = vmatpush.bf16.msra.mxu0 %v166
  %202 = vmatpush.bf16.msra.mxu0 %v165
  %203 = vmatpush.bf16.msra.mxu0 %v164
  %204 = vmatpush.bf16.msra.mxu0 %v163
  %205 = vmatpush.bf16.msra.mxu0 %v162
  %206 = vmatpush.bf16.msra.mxu0 %v161
  %207 = vmatpush.bf16.msra.mxu0 %v160
  %208 = vmatmul.bf16.gmra.mxu0 %v83
  %v209 = vpop.f32.mrf.mxu0
  %v210 = vadd.f32 %v66, %v209
  %v211 = vpop.f32.mrf.mxu0
  %v212 = vadd.f32 %v71, %v211
  %213 = vdwg.mxu0
  %214 = vmatpush.bf16.msra.mxu0 %v175
  %215 = vmatpush.bf16.msra.mxu0 %v174
  %216 = vmatpush.bf16.msra.mxu0 %v173
  %217 = vmatpush.bf16.msra.mxu0 %v172
  %218 = vmatpush.bf16.msra.mxu0 %v171
  %219 = vmatpush.bf16.msra.mxu0 %v170
  %220 = vmatpush.bf16.msra.mxu0 %v169
  %221 = vmatpush.bf16.msra.mxu0 %v168
  %222 = vmatmul.bf16.gmra.mxu0 %v84
  %v223 = vpop.f32.mrf.mxu0
  %v224 = vadd.f32 %v210, %v223
  %v225 = vpop.f32.mrf.mxu0
  %v226 = vadd.f32 %v212, %v225
  %227 = vdwg.mxu0
  %228 = vmatpush.bf16.msra.mxu0 0
  %229 = vmatpush.bf16.msra.mxu0 0
  %230 = vmatpush.bf16.msra.mxu0 0
  %231 = vmatpush.bf16.msra.mxu0 0
  %232 = vmatpush.bf16.msra.mxu0 0
  %233 = vmatpush.bf16.msra.mxu0 0
  %234 = vmatpush.bf16.msra.mxu0 %v177
  %235 = vmatpush.bf16.msra.mxu0 %v176
  %236 = vmatmul.bf16.gmra.mxu0 %v198
  %v237 = vpop.f32.mrf.mxu0
  %v238 = vadd.f32 %v224, %v237
  %v239 = vpop.f32.mrf.mxu0
  %v240 = vadd.f32 %v226, %v239
  %241 = vdwg.mxu0
  %vm242 = vcmask 801792
  %v243 = vsel %vm242, %v238, 0.0
  %244 = vadd.xlane.f32.xlu0 %v243
  %v245 = vpop.xlane.xlu0 %244
  %v246 = vsel %vm242, %v240, 0.0
  %247 = vadd.xlane.f32.xlu0 %v246
  %v248 = vpop.xlane.xlu0 %247
  %v249 = vmul.f32 %v245, 0.010204081
  %v250 = vmul.f32 %v248, 0.010204081
  %v251 = vsub.f32 %v238, %v249
  %v252 = vsub.f32 %v240, %v250
  %v253 = vmul.f32 %v251, %v251
  %v254 = vmul.f32 %v252, %v252
  %v255 = vsel %vm242, %v253, 0.0
  %256 = vadd.xlane.f32.xlu0 %v255
  %v257 = vpop.xlane.xlu0 %256
  %v258 = vsel %vm242, %v254, 0.0
  %259 = vadd.xlane.f32.xlu0 %v258
  %v260 = vpop.xlane.xlu0 %259
  %v261 = vmul.f32 %v257, 0.010204081
  %v262 = vmul.f32 %v260, 0.010204081
  %v263 = vld [vmem:[%s3] sm:$0xff]
  %v264 = vld [vmem:[%s3 + $0x8] sm:$0xff]
  %v265 = vadd.f32 %v261, 1e-05
  %v266 = vadd.f32 %v262, 1e-05
  %v267 = vrsqrt.pop %v265
  %v268 = vmul.f32 %v267, %v265
  %v269 = vmul.f32 %v268, %v267
  %v270 = vmul.f32 0.5, %v269
  %v271 = vsub.f32 1.5, %v270
  %v272 = vmul.f32 %v267, %v271
  %vm273 = vweird.f32 %v265
  %vm274 = vweird.f32 %v267
  %vm275 = vmor %vm273, %vm274
  %v276 = vsel %vm275, %v267, %v272
  %v277 = vrsqrt.pop %v266
  %v278 = vmul.f32 %v277, %v266
  %v279 = vmul.f32 %v278, %v277
  %v280 = vmul.f32 0.5, %v279
  %v281 = vsub.f32 1.5, %v280
  %v282 = vmul.f32 %v277, %v281
  %vm283 = vweird.f32 %v266
  %vm284 = vweird.f32 %v277
  %vm285 = vmor %vm283, %vm284
  %v286 = vsel %vm285, %v277, %v282
  %v287 = vmul.f32 %v263, %v276
  %v288 = vmul.f32 %v264, %v286
  %290 = vset.pattern.permute.xlu0 0
  %291 = vperm.xlu0 %290, %v287
  %v292 = vpop.permute.xlu0 %291
  %295 = vset.pattern.permute.xlu0 0
  %296 = vperm.xlu0 %295, %v288
  %v297 = vpop.permute.xlu0 %296
  %v299 = vmul.f32 %v251, %v292
  %v300 = vmul.f32 %v252, %v297
  %v301 = vld [vmem:[%s4] sm:$0xff]
  %v302 = vld [vmem:[%s4 + $0x8] sm:$0xff]
  %304 = vset.pattern.permute.xlu0 0
  %305 = vperm.xlu0 %304, %v301
  %v306 = vpop.permute.xlu0 %305
  %309 = vset.pattern.permute.xlu0 0
  %310 = vperm.xlu0 %309, %v302
  %v311 = vpop.permute.xlu0 %310
  %v313 = vadd.f32 %v299, %v306
  %v314 = vadd.f32 %v300, %v311
  %v315 = vpack.c.bf16 %v313, %v313
  %v316 = vpack.c.bf16 %v314, %v314
  %vm317 = vcmask 797696
  %318 = vst.msk [vmem:[%s5] sm:$0xf] %vm317, %v315
  %319 = vst.msk [vmem:[%s5 + $0x4] sm:$0xf] %vm317, %v316
  // Predicated region
  $region22: #{generator_forward.17} parent=0 // pred_check
    _
  $region23: #{generator_forward.17} parent=0 // pred_check_branch
    %321 = sbr.rel (0) target = $region25
  $region24: #{generator_forward.17} parent=0 // pred_region
    _
  $region25: #{generator_forward.17} parent=0 // pred_fallthru
    _
  // Predicated region
  $region26: #{generator_forward.17} parent=0 // pred_check
    _
  $region27: #{generator_forward.17} parent=0 // pred_check_branch
    %323 = sbr.rel (0) target = $region29
  $region28: #{generator_forward.17} parent=0 // pred_region
    _
  $region29: #{generator_forward.17} parent=0 // pred_fallthru
    _

// kernel: generator_forward.18
$region0: #{generator_forward.18}
  #allocation0 [shape = 'u32[]', space=smem, size = 0x4, offset = 0x4, fixed_abs, tag = 'smem constant byte address 0x4 - core index']
  #allocation1 [shape = 'u32[72,128]{1,0:T(1,128)}', space=vmem, size = 0x9000, scoped, tag = 'internal scratch']
  %s0 = inlined_call_operand.vmem [shape: bf16[8,144], index: 0, kind: input, shape index: {}]
  %s1 = inlined_call_operand.vmem [shape: bf16[144,450], index: 1, kind: input, shape index: {}]
  %s2 = inlined_call_operand.vmem [shape: f32[8,1], index: 2, kind: input, shape index: {}, may-alias: {2,4}]
  %s3 = inlined_call_operand.vmem [shape: f32[8,1], index: 3, kind: input, shape index: {}]
  %s4 = inlined_call_operand.vmem [shape: f32[8,1], index: 4, kind: input, shape index: {}, may-alias: {2,4}]
  %s5 = inlined_call_operand.vmem [shape: bf16[8,450], index: 5, kind: output, shape index: {}]
  %s6 = sld [smem:[#allocation0]]
  $region30: #{generator_forward.18} parent=0
    _
  %s8 = ssub.s32 1, %s6
  %s9 = scalar_select 0, %s8, %s6
  // Predicated region
  $region2: #{generator_forward.18} parent=0 // pred_check
    _
  $region3: #{generator_forward.18} parent=0 // pred_check_branch
    %11 = sbr.rel (0) target = $region5
  $region4: #{generator_forward.18} parent=0 // pred_region
    _
  $region5: #{generator_forward.18} parent=0 // pred_fallthru
    _
  // Predicated region
  $region6: #{generator_forward.18} parent=0 // pred_check
    _
  $region7: #{generator_forward.18} parent=0 // pred_check_branch
    %13 = sbr.rel (0) target = $region9
  $region8: #{generator_forward.18} parent=0 // pred_region
    _
  $region9: #{generator_forward.18} parent=0 // pred_fallthru
    _
  // Predicated region
  $region10: #{generator_forward.18} parent=0 // pred_check
    _
  $region11: #{generator_forward.18} parent=0 // pred_check_branch
    %15 = sbr.rel (0) target = $region13
  $region12: #{generator_forward.18} parent=0 // pred_region
    _
  $region13: #{generator_forward.18} parent=0 // pred_fallthru
    _
  // Predicated region
  $region14: #{generator_forward.18} parent=0 // pred_check
    _
  $region15: #{generator_forward.18} parent=0 // pred_check_branch
    %17 = sbr.rel (0) target = $region17
  $region16: #{generator_forward.18} parent=0 // pred_region
    _
  $region17: #{generator_forward.18} parent=0 // pred_fallthru
    _
  // Predicated region
  $region18: #{generator_forward.18} parent=0 // pred_check
    _
  $region19: #{generator_forward.18} parent=0 // pred_check_branch
    %19 = sbr.rel (0) target = $region21
  $region20: #{generator_forward.18} parent=0 // pred_region
    _
  $region21: #{generator_forward.18} parent=0 // pred_fallthru
    _
  %v21 = vld [vmem:[%s0] sm:$0xff]
  %v22 = vld [vmem:[%s1] sm:$0xff]
  %v23 = vld [vmem:[%s1 + $0x8] sm:$0xff]
  %v24 = vld [vmem:[%s1 + $0x10] sm:$0xff]
  %v25 = vld [vmem:[%s1 + $0x18] sm:$0xff]
  %v26 = vld [vmem:[%s1 + $0x20] sm:$0xff]
  %v27 = vld [vmem:[%s1 + $0x28] sm:$0xff]
  %v28 = vld [vmem:[%s1 + $0x30] sm:$0xff]
  %v29 = vld [vmem:[%s1 + $0x38] sm:$0xff]
  %v30 = vld [vmem:[%s1 + $0x40] sm:$0xff]
  %v31 = vld [vmem:[%s1 + $0x48] sm:$0xff]
  %v32 = vld [vmem:[%s1 + $0x50] sm:$0xff]
  %v33 = vld [vmem:[%s1 + $0x58] sm:$0xff]
  %v34 = vld [vmem:[%s1 + $0x60] sm:$0xff]
  %v35 = vld [vmem:[%s1 + $0x68] sm:$0xff]
  %v36 = vld [vmem:[%s1 + $0x70] sm:$0xff]
  %v37 = vld [vmem:[%s1 + $0x78] sm:$0xff]
  %v38 = vld [vmem:[%s1 + $0x80] sm:$0xff]
  %v39 = vld [vmem:[%s1 + $0x88] sm:$0xff]
  %v40 = vld [vmem:[%s1 + $0x90] sm:$0xff]
  %v41 = vld [vmem:[%s1 + $0x98] sm:$0xff]
  %v42 = vld [vmem:[%s1 + $0xa0] sm:$0xff]
  %v43 = vld [vmem:[%s1 + $0xa8] sm:$0xff]
  %v44 = vld [vmem:[%s1 + $0xb0] sm:$0xff]
  %v45 = vld [vmem:[%s1 + $0xb8] sm:$0xff]
  %v46 = vld [vmem:[%s1 + $0xc0] sm:$0xff]
  %v47 = vld [vmem:[%s1 + $0xc8] sm:$0xff]
  %v48 = vld [vmem:[%s1 + $0xd0] sm:$0xff]
  %v49 = vld [vmem:[%s1 + $0xd8] sm:$0xff]
  %v50 = vld [vmem:[%s1 + $0xe0] sm:$0xff]
  %v51 = vld [vmem:[%s1 + $0xe8] sm:$0xff]
  %v52 = vld [vmem:[%s1 + $0xf0] sm:$0xff]
  %v53 = vld [vmem:[%s1 + $0xf8] sm:$0xff]
  %v54 = vld [vmem:[%s1 + $0x100] sm:$0xff]
  %v55 = vld [vmem:[%s1 + $0x108] sm:$0xff]
  %v56 = vld [vmem:[%s1 + $0x110] sm:$0xff]
  %v57 = vld [vmem:[%s1 + $0x118] sm:$0xff]
  %v58 = vld [vmem:[%s2] sm:$0xff]
  %60 = vset.pattern.permute.xlu0 0
  %61 = vperm.xlu0 %60, %v58
  %v62 = vpop.permute.xlu0 %61
  %v65 = vunpack.c.l.b16 %v21
  %v66 = vunpack.c.h.b16 %v21
  %v67 = vpack.c.b16 %v65, %v65
  %v68 = vpack.c.b16 %v66, %v66
  %v106 = vunpack.c.l.b16 %v22
  %v107 = vunpack.c.h.b16 %v22
  %v108 = vunpack.c.l.b16 %v23
  %v109 = vunpack.c.h.b16 %v23
  %v110 = vunpack.c.l.b16 %v24
  %v111 = vunpack.c.h.b16 %v24
  %v112 = vunpack.c.l.b16 %v25
  %v113 = vunpack.c.h.b16 %v25
  %v114 = vunpack.c.l.b16 %v26
  %v115 = vunpack.c.h.b16 %v26
  %v116 = vunpack.c.l.b16 %v27
  %v117 = vunpack.c.h.b16 %v27
  %v118 = vunpack.c.l.b16 %v28
  %v119 = vunpack.c.h.b16 %v28
  %v120 = vunpack.c.l.b16 %v29
  %v121 = vunpack.c.h.b16 %v29
  %v122 = vunpack.c.l.b16 %v30
  %v123 = vunpack.c.h.b16 %v30
  %v124 = vunpack.c.l.b16 %v31
  %v125 = vunpack.c.h.b16 %v31
  %v126 = vunpack.c.l.b16 %v32
  %v127 = vunpack.c.h.b16 %v32
  %v128 = vunpack.c.l.b16 %v33
  %v129 = vunpack.c.h.b16 %v33
  %v130 = vunpack.c.l.b16 %v34
  %v131 = vunpack.c.h.b16 %v34
  %v132 = vunpack.c.l.b16 %v35
  %v133 = vunpack.c.h.b16 %v35
  %v134 = vunpack.c.l.b16 %v36
  %v135 = vunpack.c.h.b16 %v36
  %v136 = vunpack.c.l.b16 %v37
  %v137 = vunpack.c.h.b16 %v37
  %v138 = vunpack.c.l.b16 %v38
  %v139 = vunpack.c.h.b16 %v38
  %v140 = vunpack.c.l.b16 %v39
  %v141 = vunpack.c.h.b16 %v39
  %v142 = vunpack.c.l.b16 %v40
  %v143 = vunpack.c.h.b16 %v40
  %v144 = vunpack.c.l.b16 %v41
  %v145 = vunpack.c.h.b16 %v41
  %v146 = vunpack.c.l.b16 %v42
  %v147 = vunpack.c.h.b16 %v42
  %v148 = vunpack.c.l.b16 %v43
  %v149 = vunpack.c.h.b16 %v43
  %v150 = vunpack.c.l.b16 %v44
  %v151 = vunpack.c.h.b16 %v44
  %v152 = vunpack.c.l.b16 %v45
  %v153 = vunpack.c.h.b16 %v45
  %v154 = vunpack.c.l.b16 %v46
  %v155 = vunpack.c.h.b16 %v46
  %v156 = vunpack.c.l.b16 %v47
  %v157 = vunpack.c.h.b16 %v47
  %v158 = vunpack.c.l.b16 %v48
  %v159 = vunpack.c.h.b16 %v48
  %v160 = vunpack.c.l.b16 %v49
  %v161 = vunpack.c.h.b16 %v49
  %v162 = vunpack.c.l.b16 %v50
  %v163 = vunpack.c.h.b16 %v50
  %v164 = vunpack.c.l.b16 %v51
  %v165 = vunpack.c.h.b16 %v51
  %v166 = vunpack.c.l.b16 %v52
  %v167 = vunpack.c.h.b16 %v52
  %v168 = vunpack.c.l.b16 %v53
  %v169 = vunpack.c.h.b16 %v53
  %v170 = vunpack.c.l.b16 %v54
  %v171 = vunpack.c.h.b16 %v54
  %v172 = vunpack.c.l.b16 %v55
  %v173 = vunpack.c.h.b16 %v55
  %v174 = vunpack.c.l.b16 %v56
  %v175 = vunpack.c.h.b16 %v56
  %v176 = vunpack.c.l.b16 %v57
  %v177 = vunpack.c.h.b16 %v57
  %v178 = vpack.c.b16 %v110, %v106
  %v179 = vpack.c.b16 %v111, %v107
  %v180 = vpack.c.b16 %v112, %v108
  %v181 = vpack.c.b16 %v113, %v109
  %v182 = vpack.c.b16 %v118, %v114
  %v183 = vpack.c.b16 %v119, %v115
  %v184 = vpack.c.b16 %v120, %v116
  %v185 = vpack.c.b16 %v121, %v117
  %v186 = vpack.c.b16 %v126, %v122
  %v187 = vpack.c.b16 %v127, %v123
  %v188 = vpack.c.b16 %v128, %v124
  %v189 = vpack.c.b16 %v129, %v125
  %v190 = vpack.c.b16 %v134, %v130
  %v191 = vpack.c.b16 %v135, %v131
  %v192 = vpack.c.b16 %v136, %v132
  %v193 = vpack.c.b16 %v137, %v133
  %v194 = vpack.c.b16 %v142, %v138
  %v195 = vpack.c.b16 %v143, %v139
  %v196 = vpack.c.b16 %v144, %v140
  %v197 = vpack.c.b16 %v145, %v141
  %v198 = vpack.c.b16 %v150, %v146
  %v199 = vpack.c.b16 %v151, %v147
  %v200 = vpack.c.b16 %v152, %v148
  %v201 = vpack.c.b16 %v153, %v149
  %v202 = vpack.c.b16 %v158, %v154
  %v203 = vpack.c.b16 %v159, %v155
  %v204 = vpack.c.b16 %v160, %v156
  %v205 = vpack.c.b16 %v161, %v157
  %v206 = vpack.c.b16 %v166, %v162
  %v207 = vpack.c.b16 %v167, %v163
  %v208 = vpack.c.b16 %v168, %v164
  %v209 = vpack.c.b16 %v169, %v165
  %v210 = vpack.c.b16 %v174, %v170
  %v211 = vpack.c.b16 %v175, %v171
  %v212 = vpack.c.b16 %v176, %v172
  %v213 = vpack.c.b16 %v177, %v173
  %vm250 = vcmask 130048
  %v252 = vsel %vm250, %v68, 0
  %254 = vmatpush.bf16.msra.mxu0 %v206
  %255 = vmatpush.bf16.msra.mxu0 %v202
  %256 = vmatpush.bf16.msra.mxu0 %v198
  %257 = vmatpush.bf16.msra.mxu0 %v194
  %258 = vmatpush.bf16.msra.mxu0 %v190
  %259 = vmatpush.bf16.msra.mxu0 %v186
  %260 = vmatpush.bf16.msra.mxu0 %v182
  %261 = vmatpush.bf16.msra.mxu0 %v178
  %262 = vmatmul.bf16.gmra.mxu0 %v67
  %v263 = vpop.f32.mrf.mxu0
  %v264 = vadd.f32 %v62, %v263
  %v265 = vpop.f32.mrf.mxu0
  %266 = vdwg.mxu0
  %267 = vmatpush.bf16.msra.mxu0 0
  %268 = vmatpush.bf16.msra.mxu0 0
  %269 = vmatpush.bf16.msra.mxu0 0
  %270 = vmatpush.bf16.msra.mxu0 0
  %271 = vmatpush.bf16.msra.mxu0 0
  %272 = vmatpush.bf16.msra.mxu0 0
  %273 = vmatpush.bf16.msra.mxu0 0
  %274 = vmatpush.bf16.msra.mxu0 %v210
  %275 = vmatmul.bf16.gmra.mxu0 %v252
  %v276 = vpop.f32.mrf.mxu0
  %v277 = vadd.f32 %v264, %v276
  %v278 = vpop.f32.mrf.mxu0
  %279 = vdwg.mxu0
  %280 = vmatpush.bf16.msra.mxu0 %v207
  %281 = vmatpush.bf16.msra.mxu0 %v203
  %282 = vmatpush.bf16.msra.mxu0 %v199
  %283 = vmatpush.bf16.msra.mxu0 %v195
  %284 = vmatpush.bf16.msra.mxu0 %v191
  %285 = vmatpush.bf16.msra.mxu0 %v187
  %286 = vmatpush.bf16.msra.mxu0 %v183
  %287 = vmatpush.bf16.msra.mxu0 %v179
  %288 = vmatmul.bf16.gmra.mxu0 %v67
  %v289 = vpop.f32.mrf.mxu0
  %v290 = vadd.f32 %v62, %v289
  %v291 = vpop.f32.mrf.mxu0
  %292 = vdwg.mxu0
  %293 = vmatpush.bf16.msra.mxu0 0
  %294 = vmatpush.bf16.msra.mxu0 0
  %295 = vmatpush.bf16.msra.mxu0 0
  %296 = vmatpush.bf16.msra.mxu0 0
  %297 = vmatpush.bf16.msra.mxu0 0
  %298 = vmatpush.bf16.msra.mxu0 0
  %299 = vmatpush.bf16.msra.mxu0 0
  %300 = vmatpush.bf16.msra.mxu0 %v211
  %301 = vmatmul.bf16.gmra.mxu0 %v252
  %v302 = vpop.f32.mrf.mxu0
  %v303 = vadd.f32 %v290, %v302
  %v304 = vpop.f32.mrf.mxu0
  %305 = vdwg.mxu0
  %306 = vmatpush.bf16.msra.mxu0 %v208
  %307 = vmatpush.bf16.msra.mxu0 %v204
  %308 = vmatpush.bf16.msra.mxu0 %v200
  %309 = vmatpush.bf16.msra.mxu0 %v196
  %310 = vmatpush.bf16.msra.mxu0 %v192
  %311 = vmatpush.bf16.msra.mxu0 %v188
  %312 = vmatpush.bf16.msra.mxu0 %v184
  %313 = vmatpush.bf16.msra.mxu0 %v180
  %314 = vmatmul.bf16.gmra.mxu0 %v67
  %v315 = vpop.f32.mrf.mxu0
  %v316 = vadd.f32 %v62, %v315
  %v317 = vpop.f32.mrf.mxu0
  %318 = vdwg.mxu0
  %319 = vmatpush.bf16.msra.mxu0 0
  %320 = vmatpush.bf16.msra.mxu0 0
  %321 = vmatpush.bf16.msra.mxu0 0
  %322 = vmatpush.bf16.msra.mxu0 0
  %323 = vmatpush.bf16.msra.mxu0 0
  %324 = vmatpush.bf16.msra.mxu0 0
  %325 = vmatpush.bf16.msra.mxu0 0
  %326 = vmatpush.bf16.msra.mxu0 %v212
  %327 = vmatmul.bf16.gmra.mxu0 %v252
  %v328 = vpop.f32.mrf.mxu0
  %v329 = vadd.f32 %v316, %v328
  %v330 = vpop.f32.mrf.mxu0
  %331 = vdwg.mxu0
  %332 = vmatpush.bf16.msra.mxu0 %v209
  %333 = vmatpush.bf16.msra.mxu0 %v205
  %334 = vmatpush.bf16.msra.mxu0 %v201
  %335 = vmatpush.bf16.msra.mxu0 %v197
  %336 = vmatpush.bf16.msra.mxu0 %v193
  %337 = vmatpush.bf16.msra.mxu0 %v189
  %338 = vmatpush.bf16.msra.mxu0 %v185
  %339 = vmatpush.bf16.msra.mxu0 %v181
  %340 = vmatmul.bf16.gmra.mxu0 %v67
  %v341 = vpop.f32.mrf.mxu0
  %v342 = vadd.f32 %v62, %v341
  %v343 = vpop.f32.mrf.mxu0
  %344 = vdwg.mxu0
  %345 = vmatpush.bf16.msra.mxu0 0
  %346 = vmatpush.bf16.msra.mxu0 0
  %347 = vmatpush.bf16.msra.mxu0 0
  %348 = vmatpush.bf16.msra.mxu0 0
  %349 = vmatpush.bf16.msra.mxu0 0
  %350 = vmatpush.bf16.msra.mxu0 0
  %351 = vmatpush.bf16.msra.mxu0 0
  %352 = vmatpush.bf16.msra.mxu0 %v213
  %353 = vmatmul.bf16.gmra.mxu0 %v252
  %v354 = vpop.f32.mrf.mxu0
  %v355 = vadd.f32 %v342, %v354
  %v356 = vpop.f32.mrf.mxu0
  %357 = vdwg.mxu0
  %v358 = vadd.f32 %v277, %v303
  %v359 = vadd.f32 %v358, %v329
  %vm360 = vcmask 539648
  %v361 = vsel %vm360, %v355, 0.0
  %v362 = vadd.f32 %v359, %v361
  %363 = vadd.xlane.f32.xlu0 %v362
  %v364 = vpop.xlane.xlu0 %363
  %v365 = vmul.f32 %v364, 0.0022222223
  %v366 = vsub.f32 %v277, %v365
  %v367 = vsub.f32 %v303, %v365
  %v368 = vsub.f32 %v329, %v365
  %v369 = vsub.f32 %v355, %v365
  %v370 = vmul.f32 %v366, %v366
  %v371 = vmul.f32 %v367, %v367
  %v372 = vmul.f32 %v368, %v368
  %v373 = vmul.f32 %v369, %v369
  %v374 = vadd.f32 %v370, %v371
  %v375 = vadd.f32 %v374, %v372
  %v376 = vsel %vm360, %v373, 0.0
  %v377 = vadd.f32 %v375, %v376
  %378 = vadd.xlane.f32.xlu0 %v377
  %v379 = vpop.xlane.xlu0 %378
  %v380 = vmul.f32 %v379, 0.0022222223
  %v381 = vld [vmem:[%s3] sm:$0xff]
  %v382 = vadd.f32 %v380, 1e-05
  %v383 = vrsqrt.pop %v382
  %v384 = vmul.f32 %v383, %v382
  %v385 = vmul.f32 %v384, %v383
  %v386 = vmul.f32 0.5, %v385
  %v387 = vsub.f32 1.5, %v386
  %v388 = vmul.f32 %v383, %v387
  %vm389 = vweird.f32 %v382
  %vm390 = vweird.f32 %v383
  %vm391 = vmor %vm389, %vm390
  %v392 = vsel %vm391, %v383, %v388
  %v393 = vmul.f32 %v381, %v392
  %395 = vset.pattern.permute.xlu0 0
  %396 = vperm.xlu0 %395, %v393
  %v397 = vpop.permute.xlu0 %396
  %v399 = vmul.f32 %v366, %v397
  %v400 = vmul.f32 %v367, %v397
  %v401 = vmul.f32 %v368, %v397
  %v402 = vmul.f32 %v369, %v397
  %v403 = vld [vmem:[%s4] sm:$0xff]
  %405 = vset.pattern.permute.xlu0 0
  %406 = vperm.xlu0 %405, %v403
  %v407 = vpop.permute.xlu0 %406
  %v409 = vadd.f32 %v399, %v407
  %v410 = vadd.f32 %v400, %v407
  %v411 = vadd.f32 %v401, %v407
  %v412 = vadd.f32 %v402, %v407
  %v413 = vpack.c.bf16 %v410, %v409
  %v414 = vpack.c.bf16 %v412, %v411
  %415 = vst [vmem:[%s5] sm:$0xff] %v413
  %vm416 = vcmask 1043456
  %vm417 = vcmask 539652
  %vm418 = vmor %vm417, %vm416
  %419 = vst.msk [vmem:[%s5 + $0x8] sm:$0xff] %vm418, %v414
  // Predicated region
  $region22: #{generator_forward.18} parent=0 // pred_check
    _
  $region23: #{generator_forward.18} parent=0 // pred_check_branch
    %421 = sbr.rel (0) target = $region25
  $region24: #{generator_forward.18} parent=0 // pred_region
    _
  $region25: #{generator_forward.18} parent=0 // pred_fallthru
    _
  // Predicated region
  $region26: #{generator_forward.18} parent=0 // pred_check
    _
  $region27: #{generator_forward.18} parent=0 // pred_check_branch
    %423 = sbr.rel (0) target = $region29
  $region28: #{generator_forward.18} parent=0 // pred_region
    _
  $region29: #{generator_forward.18} parent=0 // pred_fallthru
    _

// kernel: generator_forward.19
$region0: #{generator_forward.19}
  #allocation0 [shape = 'u32[]', space=smem, size = 0x4, offset = 0x4, fixed_abs, tag = 'smem constant byte address 0x4 - core index']
  #allocation1 [shape = 'u32[72,128]{1,0:T(1,128)}', space=vmem, size = 0x9000, scoped, tag = 'internal scratch']
  %s0 = inlined_call_operand.vmem [shape: bf16[8,392], index: 0, kind: input, shape index: {}]
  %s1 = inlined_call_operand.vmem [shape: bf16[392,512], index: 1, kind: input, shape index: {}]
  %s2 = inlined_call_operand.vmem [shape: f32[8,1], index: 2, kind: input, shape index: {}]
  %s3 = inlined_call_operand.vmem [shape: f32[8,512], index: 3, kind: output, shape index: {}]
  %s4 = sld [smem:[#allocation0]]
  $region83: #{generator_forward.19} parent=0
    _
  %s6 = ssub.s32 1, %s4
  %s7 = scalar_select 0, %s6, %s4
  $region1: #{generator_forward.19} parent=0
    #allocation2 [shape = 'u8[401408]{0}', space=vmem, size = 0x62000, scoped, tag = 'input window, operand 1']
    loop: start=0, step=1, limit=4
    $region2: #{generator_forward.19} parent=1 // loop_pre_header
      _
    $region3: #{generator_forward.19} parent=1 // loop_header
      %s9 = sphi 0, %s13
      %p10 = scmp.ge.s32.totalorder %s9, 4
      %s17 = sphi 0, %s17
      %s19 = sphi 0, %s17
      %s20 = sphi 0, %s19
      %s34 = sphi 0, %s20
      %s40 = sphi 0, %s42
      %s43 = sphi 0, %s40
      %s44 = sphi 0, %s43
      %s60 = sphi 0, %s44
      %s64 = sphi 0, %s64
      %s66 = sphi 0, %s64
      %s67 = sphi 0, %s66
      %s81 = sphi 0, %s67
      %s87 = sphi 0, %s89
      %s90 = sphi 0, %s87
      %s91 = sphi 0, %s90
      %s107 = sphi 0, %s91
    $region4: #{generator_forward.19} parent=1 // loop_header_branch
      %12 = sbr.rel (%p10) target = $region8
    $region5: #{generator_forward.19} parent=1 // loop_body
      %s14 = ssub.s32 %s9, 1
      %s15 = ssub.s32 %s9, 2
      %s16 = sadd.s32 %s9, 1
      %s18 = sadd.s32 %s17, 1
      %p21 = scmp.eq.s32.totalorder %s9, 1
      %p22 = scmp.ne.s32.totalorder %s17, %s19
      %p23 = scmp.eq.s32.totalorder %s9, 0
      %p24 = por %p22, %p23
      %p25 = scmp.ne.s32.totalorder %s17, %s19
      %p26 = scmp.eq.s32.totalorder %s14, 1
      %p27 = por %p25, %p26
      %p28 = scmp.ne.s32.totalorder %s19, %s20
      %p29 = scmp.eq.s32.totalorder %s14, 0
      %p30 = por %p28, %p29
      %p31 = scmp.ne.s32.totalorder %s19, %s20
      %p32 = scmp.eq.s32.totalorder %s15, 1
      %p33 = por %p31, %p32
      %p35 = scmp.ne.s32.totalorder %s20, %s34
      %p36 = scmp.eq.s32.totalorder %s15, 0
      %p37 = por %p35, %p36
      %s38 = ssub.s32 %s9, %s16
      %p39 = scmp.eq.s32.totalorder %s38, 0
      %s41 = sadd.s32 %s40, 1
      %s42 = scalar_select %p39, %s40, %s41
      %p45 = pneg %p39
      %p46 = scmp.eq.s32.totalorder %s9, 1
      %p47 = por %p45, %p46
      %p48 = scmp.ne.s32.totalorder %s40, %s43
      %p49 = scmp.eq.s32.totalorder %s9, 0
      %p50 = por %p48, %p49
      %p51 = scmp.ne.s32.totalorder %s40, %s43
      %p52 = scmp.eq.s32.totalorder %s14, 1
      %p53 = por %p51, %p52
      %p54 = scmp.ne.s32.totalorder %s43, %s44
      %p55 = scmp.eq.s32.totalorder %s14, 0
      %p56 = por %p54, %p55
      %p57 = scmp.ne.s32.totalorder %s43, %s44
      %p58 = scmp.eq.s32.totalorder %s15, 1
      %p59 = por %p57, %p58
      %p61 = scmp.ne.s32.totalorder %s44, %s60
      %p62 = scmp.eq.s32.totalorder %s15, 0
      %p63 = por %p61, %p62
      %s65 = sadd.s32 %s64, 1
      %p68 = scmp.eq.s32.totalorder %s9, 1
      %p69 = scmp.ne.s32.totalorder %s64, %s66
      %p70 = scmp.eq.s32.totalorder %s9, 0
      %p71 = por %p69, %p70
      %p72 = scmp.ne.s32.totalorder %s64, %s66
      %p73 = scmp.eq.s32.totalorder %s14, 1
      %p74 = por %p72, %p73
      %p75 = scmp.ne.s32.totalorder %s66, %s67
      %p76 = scmp.eq.s32.totalorder %s14, 0
      %p77 = por %p75, %p76
      %p78 = scmp.ne.s32.totalorder %s66, %s67
      %p79 = scmp.eq.s32.totalorder %s15, 1
      %p80 = por %p78, %p79
      %p82 = scmp.ne.s32.totalorder %s67, %s81
      %p83 = scmp.eq.s32.totalorder %s15, 0
      %p84 = por %p82, %p83
      %s85 = ssub.s32 %s9, %s16
      %p86 = scmp.eq.s32.totalorder %s85, 0
      %s88 = sadd.s32 %s87, 1
      %s89 = scalar_select %p86, %s87, %s88
      %p92 = pneg %p86
      %p93 = scmp.eq.s32.totalorder %s9, 1
      %p94 = por %p92, %p93
      %p95 = scmp.ne.s32.totalorder %s87, %s90
      %p96 = scmp.eq.s32.totalorder %s9, 0
      %p97 = por %p95, %p96
      %p98 = scmp.ne.s32.totalorder %s87, %s90
      %p99 = scmp.eq.s32.totalorder %s14, 1
      %p100 = por %p98, %p99
      %p101 = scmp.ne.s32.totalorder %s90, %s91
      %p102 = scmp.eq.s32.totalorder %s14, 0
      %p103 = por %p101, %p102
      %p104 = scmp.ne.s32.totalorder %s90, %s91
      %p105 = scmp.eq.s32.totalorder %s15, 1
      %p106 = por %p104, %p105
      %p108 = scmp.ne.s32.totalorder %s91, %s107
      %p109 = scmp.eq.s32.totalorder %s15, 0
      %p110 = por %p108, %p109
      %p111 = scmp.le.s32.totalorder 1, %s9
      %p112 = scmp.lt.s32.totalorder %s9, 3
      %p113 = pnand %p111, %p112
      %p114 = pneg %p113
      // Predicated region
      $region9: #{generator_forward.19} parent=5 // pred_check
        _
      $region10: #{generator_forward.19} parent=5 // pred_check_branch
        %116 = sbr.rel (%p113) target = $region12
      $region11: #{generator_forward.19} parent=5 // pred_region
        %s117 = ssub.s32 %s9, 1
        // Predicated region
        $region13: #{generator_forward.19} parent=11 // pred_check
          %p118 = pneg %p30
        $region14: #{generator_forward.19} parent=11 // pred_check_branch
          %120 = sbr.rel (%p118) target = $region16
        $region15: #{generator_forward.19} parent=11 // pred_region
          _
        $region16: #{generator_forward.19} parent=11 // pred_fallthru
          _
        // Predicated region
        $region17: #{generator_forward.19} parent=11 // pred_check
          %p121 = pneg %p77
        $region18: #{generator_forward.19} parent=11 // pred_check_branch
          %123 = sbr.rel (%p121) target = $region20
        $region19: #{generator_forward.19} parent=11 // pred_region
          _
        $region20: #{generator_forward.19} parent=11 // pred_fallthru
          _
      $region12: #{generator_forward.19} parent=5 // pred_fallthru
        _
      %p124 = scmp.lt.s32.totalorder %s9, 2
      // Predicated region
      $region21: #{generator_forward.19} parent=5 // pred_check
        %p125 = pneg %p124
      $region22: #{generator_forward.19} parent=5 // pred_check_branch
        %127 = sbr.rel (%p125) target = $region24
      $region23: #{generator_forward.19} parent=5 // pred_region
        // Predicated region
        $region25: #{generator_forward.19} parent=23 // pred_check
          %p128 = pneg %p50
        $region26: #{generator_forward.19} parent=23 // pred_check_branch
          %130 = sbr.rel (%p128) target = $region28
        $region27: #{generator_forward.19} parent=23 // pred_region
          %s131 = sand.u32 %s40, 1
          %s132 = sand.u32 %s40, 1
          %s133 = smul.addr %s132, 392
          %s134 = scalar_lea.vmem [#allocation2], %s133
          %s135 = smul.u32 2, %s9
          %s136 = smul.addr %s135, 4
          %s137 = scalar_lea.vmem %s1, %s136
          // Predicated region
          $region29: #{generator_forward.19} parent=27 // pred_check
            _
          $region30: #{generator_forward.19} parent=27 // pred_check_branch
            %139 = sbr.rel (0) target = $region32
          $region31: #{generator_forward.19} parent=27 // pred_region
            // Predicated region
            $region33: #{generator_forward.19} parent=31 // pred_check
              _
            $region34: #{generator_forward.19} parent=31 // pred_check_branch
              %141 = sbr.rel (0) target = $region36
            $region35: #{generator_forward.19} parent=31 // pred_region
              // Predicated region
              $region48: #{generator_forward.19} parent=35 // pred_check
                _
              $region49: #{generator_forward.19} parent=35 // pred_check_branch
                %253 = sbr.rel (0) target = $region51
              $region50: #{generator_forward.19} parent=35 // pred_region
                loop: start=0, step=1, limit=1
                $region52: #{generator_forward.19} parent=50 // loop_pre_header
                  _
                $region53: #{generator_forward.19} parent=50 // loop_header
                  %s255 = sphi 0, %s259
                  %p256 = scmp.ge.s32.totalorder %s255, 1
                  %s260 = sphi %s137, %s137
                  %s261 = sphi %s134, %s134
                $region54: #{generator_forward.19} parent=50 // loop_header_branch
                  %258 = sbr.rel (%p256) target = $region58
                $region55: #{generator_forward.19} parent=50 // loop_body
                  %v262 = vld [vmem:[%s260] sm:$0xff]
                  %263 = vst [vmem:[%s261] sm:$0xff] %v262
                  %v264 = vld [vmem:[%s260 + $0x10] sm:$0xff]
                  %265 = vst [vmem:[%s261 + $0x8] sm:$0xff] %v264
                  %v266 = vld [vmem:[%s260 + $0x20] sm:$0xff]
                  %267 = vst [vmem:[%s261 + $0x10] sm:$0xff] %v266
                  %v268 = vld [vmem:[%s260 + $0x30] sm:$0xff]
                  %269 = vst [vmem:[%s261 + $0x18] sm:$0xff] %v268
                  %v270 = vld [vmem:[%s260 + $0x40] sm:$0xff]
                  %271 = vst [vmem:[%s261 + $0x20] sm:$0xff] %v270
                  %v272 = vld [vmem:[%s260 + $0x50] sm:$0xff]
                  %273 = vst [vmem:[%s261 + $0x28] sm:$0xff] %v272
                  %v274 = vld [vmem:[%s260 + $0x60] sm:$0xff]
                  %275 = vst [vmem:[%s261 + $0x30] sm:$0xff] %v274
                  %v276 = vld [vmem:[%s260 + $0x70] sm:$0xff]
                  %277 = vst [vmem:[%s261 + $0x38] sm:$0xff] %v276
                  %v278 = vld [vmem:[%s260 + $0x80] sm:$0xff]
                  %279 = vst [vmem:[%s261 + $0x40] sm:$0xff] %v278
                  %v280 = vld [vmem:[%s260 + $0x90] sm:$0xff]
                  %281 = vst [vmem:[%s261 + $0x48] sm:$0xff] %v280
                  %v282 = vld [vmem:[%s260 + $0xa0] sm:$0xff]
                  %283 = vst [vmem:[%s261 + $0x50] sm:$0xff] %v282
                  %v284 = vld [vmem:[%s260 + $0xb0] sm:$0xff]
                  %285 = vst [vmem:[%s261 + $0x58] sm:$0xff] %v284
                  %v286 = vld [vmem:[%s260 + $0xc0] sm:$0xff]
                  %287 = vst [vmem:[%s261 + $0x60] sm:$0xff] %v286
                  %v288 = vld [vmem:[%s260 + $0xd0] sm:$0xff]
                  %289 = vst [vmem:[%s261 + $0x68] sm:$0xff] %v288
                  %v290 = vld [vmem:[%s260 + $0xe0] sm:$0xff]
                  %291 = vst [vmem:[%s261 + $0x70] sm:$0xff] %v290
                  %v292 = vld [vmem:[%s260 + $0xf0] sm:$0xff]
                  %293 = vst [vmem:[%s261 + $0x78] sm:$0xff] %v292
                  %v294 = vld [vmem:[%s260 + $0x100] sm:$0xff]
                  %295 = vst [vmem:[%s261 + $0x80] sm:$0xff] %v294
                  %v296 = vld [vmem:[%s260 + $0x110] sm:$0xff]
                  %297 = vst [vmem:[%s261 + $0x88] sm:$0xff] %v296
                  %v298 = vld [vmem:[%s260 + $0x120] sm:$0xff]
                  %299 = vst [vmem:[%s261 + $0x90] sm:$0xff] %v298
                  %v300 = vld [vmem:[%s260 + $0x130] sm:$0xff]
                  %301 = vst [vmem:[%s261 + $0x98] sm:$0xff] %v300
                  %v302 = vld [vmem:[%s260 + $0x140] sm:$0xff]
                  %303 = vst [vmem:[%s261 + $0xa0] sm:$0xff] %v302
                  %v304 = vld [vmem:[%s260 + $0x150] sm:$0xff]
                  %305 = vst [vmem:[%s261 + $0xa8] sm:$0xff] %v304
                  %v306 = vld [vmem:[%s260 + $0x160] sm:$0xff]
                  %307 = vst [vmem:[%s261 + $0xb0] sm:$0xff] %v306
                  %v308 = vld [vmem:[%s260 + $0x170] sm:$0xff]
                  %309 = vst [vmem:[%s261 + $0xb8] sm:$0xff] %v308
                  %v310 = vld [vmem:[%s260 + $0x180] sm:$0xff]
                  %311 = vst [vmem:[%s261 + $0xc0] sm:$0xff] %v310
                  %v312 = vld [vmem:[%s260 + $0x190] sm:$0xff]
                  %313 = vst [vmem:[%s261 + $0xc8] sm:$0xff] %v312
                  %v314 = vld [vmem:[%s260 + $0x1a0] sm:$0xff]
                  %315 = vst [vmem:[%s261 + $0xd0] sm:$0xff] %v314
                  %v316 = vld [vmem:[%s260 + $0x1b0] sm:$0xff]
                  %317 = vst [vmem:[%s261 + $0xd8] sm:$0xff] %v316
                  %v318 = vld [vmem:[%s260 + $0x1c0] sm:$0xff]
                  %319 = vst [vmem:[%s261 + $0xe0] sm:$0xff] %v318
                  %v320 = vld [vmem:[%s260 + $0x1d0] sm:$0xff]
                  %321 = vst [vmem:[%s261 + $0xe8] sm:$0xff] %v320
                  %v322 = vld [vmem:[%s260 + $0x1e0] sm:$0xff]
                  %323 = vst [vmem:[%s261 + $0xf0] sm:$0xff] %v322
                  %v324 = vld [vmem:[%s260 + $0x1f0] sm:$0xff]
                  %325 = vst [vmem:[%s261 + $0xf8] sm:$0xff] %v324
                  %v326 = vld [vmem:[%s260 + $0x200] sm:$0xff]
                  %327 = vst [vmem:[%s261 + $0x100] sm:$0xff] %v326
                  %v328 = vld [vmem:[%s260 + $0x210] sm:$0xff]
                  %329 = vst [vmem:[%s261 + $0x108] sm:$0xff] %v328
                  %v330 = vld [vmem:[%s260 + $0x220] sm:$0xff]
                  %331 = vst [vmem:[%s261 + $0x110] sm:$0xff] %v330
                  %v332 = vld [vmem:[%s260 + $0x230] sm:$0xff]
                  %333 = vst [vmem:[%s261 + $0x118] sm:$0xff] %v332
                  %v334 = vld [vmem:[%s260 + $0x240] sm:$0xff]
                  %335 = vst [vmem:[%s261 + $0x120] sm:$0xff] %v334
                  %v336 = vld [vmem:[%s260 + $0x250] sm:$0xff]
                  %337 = vst [vmem:[%s261 + $0x128] sm:$0xff] %v336
                  %v338 = vld [vmem:[%s260 + $0x260] sm:$0xff]
                  %339 = vst [vmem:[%s261 + $0x130] sm:$0xff] %v338
                  %v340 = vld [vmem:[%s260 + $0x270] sm:$0xff]
                  %341 = vst [vmem:[%s261 + $0x138] sm:$0xff] %v340
                  %v342 = vld [vmem:[%s260 + $0x280] sm:$0xff]
                  %343 = vst [vmem:[%s261 + $0x140] sm:$0xff] %v342
                  %v344 = vld [vmem:[%s260 + $0x290] sm:$0xff]
                  %345 = vst [vmem:[%s261 + $0x148] sm:$0xff] %v344
                  %v346 = vld [vmem:[%s260 + $0x2a0] sm:$0xff]
                  %347 = vst [vmem:[%s261 + $0x150] sm:$0xff] %v346
                  %v348 = vld [vmem:[%s260 + $0x2b0] sm:$0xff]
                  %349 = vst [vmem:[%s261 + $0x158] sm:$0xff] %v348
                  %v350 = vld [vmem:[%s260 + $0x2c0] sm:$0xff]
                  %351 = vst [vmem:[%s261 + $0x160] sm:$0xff] %v350
                  %v352 = vld [vmem:[%s260 + $0x2d0] sm:$0xff]
                  %353 = vst [vmem:[%s261 + $0x168] sm:$0xff] %v352
                  %v354 = vld [vmem:[%s260 + $0x2e0] sm:$0xff]
                  %355 = vst [vmem:[%s261 + $0x170] sm:$0xff] %v354
                  %v356 = vld [vmem:[%s260 + $0x2f0] sm:$0xff]
                  %357 = vst [vmem:[%s261 + $0x178] sm:$0xff] %v356
                  %v358 = vld [vmem:[%s260 + $0x300] sm:$0xff]
                  %359 = vst [vmem:[%s261 + $0x180] sm:$0xff] %v358
                $region56: #{generator_forward.19} parent=50 // loop_footer
                  %s259 = sadd.s32 1, %s255
                $region57: #{generator_forward.19} parent=50 // loop_footer_branch
                  %254 = sbr.rel target = $region53
                $region58: #{generator_forward.19} parent=50 // loop_exit
                  _
              $region51: #{generator_forward.19} parent=35 // pred_fallthru
                _
              // Predicated region
              $region59: #{generator_forward.19} parent=35 // pred_check
                _
              $region60: #{generator_forward.19} parent=35 // pred_check_branch
                %361 = sbr.rel target = $region62
              $region61: #{generator_forward.19} parent=35 // pred_region
                _
              $region62: #{generator_forward.19} parent=35 // pred_fallthru
                _
            $region36: #{generator_forward.19} parent=31 // pred_fallthru
              _
            // Predicated region
            $region37: #{generator_forward.19} parent=31 // pred_check
              _
            $region38: #{generator_forward.19} parent=31 // pred_check_branch
              %143 = sbr.rel target = $region40
            $region39: #{generator_forward.19} parent=31 // pred_region
              %s145 = ssub.s32 256, 1
              loop: start=0, step=1, limit=1
              $region41: #{generator_forward.19} parent=39 // loop_pre_header
                _
              $region42: #{generator_forward.19} parent=39 // loop_header
                %s147 = sphi 0, %s151
                %p148 = scmp.ge.s32.totalorder %s147, 1
                %s152 = sphi %s137, %s137
                %s153 = sphi %s134, %s134
              $region43: #{generator_forward.19} parent=39 // loop_header_branch
                %150 = sbr.rel (%p148) target = $region47
              $region44: #{generator_forward.19} parent=39 // loop_body
                %v154 = vld [vmem:[%s152] sm:%s145]
                %155 = vst [vmem:[%s153] sm:%s145] %v154
                %v156 = vld [vmem:[%s152 + $0x10] sm:%s145]
                %157 = vst [vmem:[%s153 + $0x8] sm:%s145] %v156
                %v158 = vld [vmem:[%s152 + $0x20] sm:%s145]
                %159 = vst [vmem:[%s153 + $0x10] sm:%s145] %v158
                %v160 = vld [vmem:[%s152 + $0x30] sm:%s145]
                %161 = vst [vmem:[%s153 + $0x18] sm:%s145] %v160
                %v162 = vld [vmem:[%s152 + $0x40] sm:%s145]
                %163 = vst [vmem:[%s153 + $0x20] sm:%s145] %v162
                %v164 = vld [vmem:[%s152 + $0x50] sm:%s145]
                %165 = vst [vmem:[%s153 + $0x28] sm:%s145] %v164
                %v166 = vld [vmem:[%s152 + $0x60] sm:%s145]
                %167 = vst [vmem:[%s153 + $0x30] sm:%s145] %v166
                %v168 = vld [vmem:[%s152 + $0x70] sm:%s145]
                %169 = vst [vmem:[%s153 + $0x38] sm:%s145] %v168
                %v170 = vld [vmem:[%s152 + $0x80] sm:%s145]
                %171 = vst [vmem:[%s153 + $0x40] sm:%s145] %v170
                %v172 = vld [vmem:[%s152 + $0x90] sm:%s145]
                %173 = vst [vmem:[%s153 + $0x48] sm:%s145] %v172
                %v174 = vld [vmem:[%s152 + $0xa0] sm:%s145]
                %175 = vst [vmem:[%s153 + $0x50] sm:%s145] %v174
                %v176 = vld [vmem:[%s152 + $0xb0] sm:%s145]
                %177 = vst [vmem:[%s153 + $0x58] sm:%s145] %v176
                %v178 = vld [vmem:[%s152 + $0xc0] sm:%s145]
                %179 = vst [vmem:[%s153 + $0x60] sm:%s145] %v178
                %v180 = vld [vmem:[%s152 + $0xd0] sm:%s145]
                %181 = vst [vmem:[%s153 + $0x68] sm:%s145] %v180
                %v182 = vld [vmem:[%s152 + $0xe0] sm:%s145]
                %183 = vst [vmem:[%s153 + $0x70] sm:%s145] %v182
                %v184 = vld [vmem:[%s152 + $0xf0] sm:%s145]
                %185 = vst [vmem:[%s153 + $0x78] sm:%s145] %v184
                %v186 = vld [vmem:[%s152 + $0x100] sm:%s145]
                %187 = vst [vmem:[%s153 + $0x80] sm:%s145] %v186
                %v188 = vld [vmem:[%s152 + $0x110] sm:%s145]
                %189 = vst [vmem:[%s153 + $0x88] sm:%s145] %v188
                %v190 = vld [vmem:[%s152 + $0x120] sm:%s145]
                %191 = vst [vmem:[%s153 + $0x90] sm:%s145] %v190
                %v192 = vld [vmem:[%s152 + $0x130] sm:%s145]
                %193 = vst [vmem:[%s153 + $0x98] sm:%s145] %v192
                %v194 = vld [vmem:[%s152 + $0x140] sm:%s145]
                %195 = vst [vmem:[%s153 + $0xa0] sm:%s145] %v194
                %v196 = vld [vmem:[%s152 + $0x150] sm:%s145]
                %197 = vst [vmem:[%s153 + $0xa8] sm:%s145] %v196
                %v198 = vld [vmem:[%s152 + $0x160] sm:%s145]
                %199 = vst [vmem:[%s153 + $0xb0] sm:%s145] %v198
                %v200 = vld [vmem:[%s152 + $0x170] sm:%s145]
                %201 = vst [vmem:[%s153 + $0xb8] sm:%s145] %v200
                %v202 = vld [vmem:[%s152 + $0x180] sm:%s145]
                %203 = vst [vmem:[%s153 + $0xc0] sm:%s145] %v202
                %v204 = vld [vmem:[%s152 + $0x190] sm:%s145]
                %205 = vst [vmem:[%s153 + $0xc8] sm:%s145] %v204
                %v206 = vld [vmem:[%s152 + $0x1a0] sm:%s145]
                %207 = vst [vmem:[%s153 + $0xd0] sm:%s145] %v206
                %v208 = vld [vmem:[%s152 + $0x1b0] sm:%s145]
                %209 = vst [vmem:[%s153 + $0xd8] sm:%s145] %v208
                %v210 = vld [vmem:[%s152 + $0x1c0] sm:%s145]
                %211 = vst [vmem:[%s153 + $0xe0] sm:%s145] %v210
                %v212 = vld [vmem:[%s152 + $0x1d0] sm:%s145]
                %213 = vst [vmem:[%s153 + $0xe8] sm:%s145] %v212
                %v214 = vld [vmem:[%s152 + $0x1e0] sm:%s145]
                %215 = vst [vmem:[%s153 + $0xf0] sm:%s145] %v214
                %v216 = vld [vmem:[%s152 + $0x1f0] sm:%s145]
                %217 = vst [vmem:[%s153 + $0xf8] sm:%s145] %v216
                %v218 = vld [vmem:[%s152 + $0x200] sm:%s145]
                %219 = vst [vmem:[%s153 + $0x100] sm:%s145] %v218
                %v220 = vld [vmem:[%s152 + $0x210] sm:%s145]
                %221 = vst [vmem:[%s153 + $0x108] sm:%s145] %v220
                %v222 = vld [vmem:[%s152 + $0x220] sm:%s145]
                %223 = vst [vmem:[%s153 + $0x110] sm:%s145] %v222
                %v224 = vld [vmem:[%s152 + $0x230] sm:%s145]
                %225 = vst [vmem:[%s153 + $0x118] sm:%s145] %v224
                %v226 = vld [vmem:[%s152 + $0x240] sm:%s145]
                %227 = vst [vmem:[%s153 + $0x120] sm:%s145] %v226
                %v228 = vld [vmem:[%s152 + $0x250] sm:%s145]
                %229 = vst [vmem:[%s153 + $0x128] sm:%s145] %v228
                %v230 = vld [vmem:[%s152 + $0x260] sm:%s145]
                %231 = vst [vmem:[%s153 + $0x130] sm:%s145] %v230
                %v232 = vld [vmem:[%s152 + $0x270] sm:%s145]
                %233 = vst [vmem:[%s153 + $0x138] sm:%s145] %v232
                %v234 = vld [vmem:[%s152 + $0x280] sm:%s145]
                %235 = vst [vmem:[%s153 + $0x140] sm:%s145] %v234
                %v236 = vld [vmem:[%s152 + $0x290] sm:%s145]
                %237 = vst [vmem:[%s153 + $0x148] sm:%s145] %v236
                %v238 = vld [vmem:[%s152 + $0x2a0] sm:%s145]
                %239 = vst [vmem:[%s153 + $0x150] sm:%s145] %v238
                %v240 = vld [vmem:[%s152 + $0x2b0] sm:%s145]
                %241 = vst [vmem:[%s153 + $0x158] sm:%s145] %v240
                %v242 = vld [vmem:[%s152 + $0x2c0] sm:%s145]
                %243 = vst [vmem:[%s153 + $0x160] sm:%s145] %v242
                %v244 = vld [vmem:[%s152 + $0x2d0] sm:%s145]
                %245 = vst [vmem:[%s153 + $0x168] sm:%s145] %v244
                %v246 = vld [vmem:[%s152 + $0x2e0] sm:%s145]
                %247 = vst [vmem:[%s153 + $0x170] sm:%s145] %v246
                %v248 = vld [vmem:[%s152 + $0x2f0] sm:%s145]
                %249 = vst [vmem:[%s153 + $0x178] sm:%s145] %v248
                %v250 = vld [vmem:[%s152 + $0x300] sm:%s145]
                %251 = vst [vmem:[%s153 + $0x180] sm:%s145] %v250
              $region45: #{generator_forward.19} parent=39 // loop_footer
                %s151 = sadd.s32 1, %s147
              $region46: #{generator_forward.19} parent=39 // loop_footer_branch
                %146 = sbr.rel target = $region42
              $region47: #{generator_forward.19} parent=39 // loop_exit
                _
            $region40: #{generator_forward.19} parent=31 // pred_fallthru
              _
          $region32: #{generator_forward.19} parent=27 // pred_fallthru
            _
          %362 = vnop
        $region28: #{generator_forward.19} parent=23 // pred_fallthru
          _
      $region24: #{generator_forward.19} parent=5 // pred_fallthru
        _
      %p363 = scmp.le.s32.totalorder 1, %s9
      %p364 = scmp.lt.s32.totalorder %s9, 3
      %p365 = pnand %p363, %p364
      %p366 = pneg %p365
      // Predicated region
      $region63: #{generator_forward.19} parent=5 // pred_check
        _
      $region64: #{generator_forward.19} parent=5 // pred_check_branch
        %368 = sbr.rel (%p365) target = $region66
      $region65: #{generator_forward.19} parent=5 // pred_region
        %s369 = ssub.s32 %s9, 1
        %s370 = sand.u32 %s43, 1
        %s371 = sand.u32 %s43, 1
        %s372 = smul.addr %s371, 392
        %s373 = scalar_lea.vmem [#allocation2], %s372
        // Predicated region
        $region67: #{generator_forward.19} parent=65 // pred_check
          %p374 = pneg %p56
        $region68: #{generator_forward.19} parent=65 // pred_check_branch
          %376 = sbr.rel (%p374) target = $region70
        $region69: #{generator_forward.19} parent=65 // pred_region
          _
        $region70: #{generator_forward.19} parent=65 // pred_fallthru
          _
        %p377 = pneg %p30
        %p378 = pneg %p27
        %s379 = sand.u32 %s43, 1
        %s380 = sand.u32 %s43, 1
        %s381 = smul.addr %s380, 392
        %s382 = scalar_lea.vmem [#allocation2], %s381
        %p383 = pneg %p56
        %p384 = pneg %p53
        %p385 = pneg %p77
        %p386 = pneg %p74
        %p387 = pneg %p103
        %p388 = pneg %p100
        %s389 = smul.u32 2, %s14
        %p390 = scmp.lt.s32.totalorder %s389, 3
        %s391 = scalar_select %p390, %s389, 3
        %s392 = smul.addr %s391, 8
        %s393 = scalar_lea.vmem %s3, %s392
        %s394 = smul.u32 2, %s14
        %s395 = smul.u32 2, %s14
        %p396 = scmp.lt.s32.totalorder %s395, 3
        %s397 = scalar_select %p396, %s395, 3
        %s398 = smul.addr %s397, 8
        %s399 = scalar_lea.vmem %s3, %s398
        %s400 = smul.u32 2, %s14
        %v402 = vld [vmem:[%s0] sm:$0xff]
        %v403 = vld [vmem:[%s0 + $0x8] sm:$0xff]
        %v404 = vld [vmem:[%s373] sm:$0xff]
        %v405 = vld [vmem:[%s373 + $0x8] sm:$0xff]
        %v406 = vld [vmem:[%s373 + $0x10] sm:$0xff]
        %v407 = vld [vmem:[%s373 + $0x18] sm:$0xff]
        %v408 = vld [vmem:[%s373 + $0x20] sm:$0xff]
        %v409 = vld [vmem:[%s373 + $0x28] sm:$0xff]
        %v410 = vld [vmem:[%s373 + $0x30] sm:$0xff]
        %v411 = vld [vmem:[%s373 + $0x38] sm:$0xff]
        %v412 = vld [vmem:[%s373 + $0x40] sm:$0xff]
        %v413 = vld [vmem:[%s373 + $0x48] sm:$0xff]
        %v414 = vld [vmem:[%s373 + $0x50] sm:$0xff]
        %v415 = vld [vmem:[%s373 + $0x58] sm:$0xff]
        %v416 = vld [vmem:[%s373 + $0x60] sm:$0xff]
        %v417 = vld [vmem:[%s373 + $0x68] sm:$0xff]
        %v418 = vld [vmem:[%s373 + $0x70] sm:$0xff]
        %v419 = vld [vmem:[%s373 + $0x78] sm:$0xff]
        %v420 = vld [vmem:[%s373 + $0x80] sm:$0xff]
        %v421 = vld [vmem:[%s373 + $0x88] sm:$0xff]
        %v422 = vld [vmem:[%s373 + $0x90] sm:$0xff]
        %v423 = vld [vmem:[%s373 + $0x98] sm:$0xff]
        %v424 = vld [vmem:[%s373 + $0xa0] sm:$0xff]
        %v425 = vld [vmem:[%s373 + $0xa8] sm:$0xff]
        %v426 = vld [vmem:[%s373 + $0xb0] sm:$0xff]
        %v427 = vld [vmem:[%s373 + $0xb8] sm:$0xff]
        %v428 = vld [vmem:[%s373 + $0xc0] sm:$0xff]
        %v429 = vld [vmem:[%s373 + $0xc8] sm:$0xff]
        %v430 = vld [vmem:[%s373 + $0xd0] sm:$0xff]
        %v431 = vld [vmem:[%s373 + $0xd8] sm:$0xff]
        %v432 = vld [vmem:[%s373 + $0xe0] sm:$0xff]
        %v433 = vld [vmem:[%s373 + $0xe8] sm:$0xff]
        %v434 = vld [vmem:[%s373 + $0xf0] sm:$0xff]
        %v435 = vld [vmem:[%s373 + $0xf8] sm:$0xff]
        %v436 = vld [vmem:[%s373 + $0x100] sm:$0xff]
        %v437 = vld [vmem:[%s373 + $0x108] sm:$0xff]
        %v438 = vld [vmem:[%s373 + $0x110] sm:$0xff]
        %v439 = vld [vmem:[%s373 + $0x118] sm:$0xff]
        %v440 = vld [vmem:[%s373 + $0x120] sm:$0xff]
        %v441 = vld [vmem:[%s373 + $0x128] sm:$0xff]
        %v442 = vld [vmem:[%s373 + $0x130] sm:$0xff]
        %v443 = vld [vmem:[%s373 + $0x138] sm:$0xff]
        %v444 = vld [vmem:[%s373 + $0x140] sm:$0xff]
        %v445 = vld [vmem:[%s373 + $0x148] sm:$0xff]
        %v446 = vld [vmem:[%s373 + $0x150] sm:$0xff]
        %v447 = vld [vmem:[%s373 + $0x158] sm:$0xff]
        %v448 = vld [vmem:[%s373 + $0x160] sm:$0xff]
        %v449 = vld [vmem:[%s373 + $0x168] sm:$0xff]
        %v450 = vld [vmem:[%s373 + $0x170] sm:$0xff]
        %v451 = vld [vmem:[%s373 + $0x178] sm:$0xff]
        %v452 = vld [vmem:[%s373 + $0x180] sm:$0xff]
        %v453 = vld [vmem:[%s2] sm:$0xff]
        %455 = vset.pattern.permute.xlu0 0
        %456 = vperm.xlu0 %455, %v453
        %v457 = vpop.permute.xlu0 %456
        %v461 = vunpack.c.l.b16 %v402
        %v462 = vunpack.c.h.b16 %v402
        %v463 = vunpack.c.l.b16 %v403
        %v464 = vunpack.c.h.b16 %v403
        %v465 = vpack.c.b16 %v461, %v461
        %v466 = vpack.c.b16 %v462, %v462
        %v467 = vpack.c.b16 %v463, %v463
        %v468 = vpack.c.b16 %v464, %v464
        %v521 = vunpack.c.l.b16 %v404
        %v522 = vunpack.c.h.b16 %v404
        %v523 = vunpack.c.l.b16 %v405
        %v524 = vunpack.c.h.b16 %v405
        %v525 = vunpack.c.l.b16 %v406
        %v526 = vunpack.c.h.b16 %v406
        %v527 = vunpack.c.l.b16 %v407
        %v528 = vunpack.c.h.b16 %v407
        %v529 = vunpack.c.l.b16 %v408
        %v530 = vunpack.c.h.b16 %v408
        %v531 = vunpack.c.l.b16 %v409
        %v532 = vunpack.c.h.b16 %v409
        %v533 = vunpack.c.l.b16 %v410
        %v534 = vunpack.c.h.b16 %v410
        %v535 = vunpack.c.l.b16 %v411
        %v536 = vunpack.c.h.b16 %v411
        %v537 = vunpack.c.l.b16 %v412
        %v538 = vunpack.c.h.b16 %v412
        %v539 = vunpack.c.l.b16 %v413
        %v540 = vunpack.c.h.b16 %v413
        %v541 = vunpack.c.l.b16 %v414
        %v542 = vunpack.c.h.b16 %v414
        %v543 = vunpack.c.l.b16 %v415
        %v544 = vunpack.c.h.b16 %v415
        %v545 = vunpack.c.l.b16 %v416
        %v546 = vunpack.c.h.b16 %v416
        %v547 = vunpack.c.l.b16 %v417
        %v548 = vunpack.c.h.b16 %v417
        %v549 = vunpack.c.l.b16 %v418
        %v550 = vunpack.c.h.b16 %v418
        %v551 = vunpack.c.l.b16 %v419
        %v552 = vunpack.c.h.b16 %v419
        %v553 = vunpack.c.l.b16 %v420
        %v554 = vunpack.c.h.b16 %v420
        %v555 = vunpack.c.l.b16 %v421
        %v556 = vunpack.c.h.b16 %v421
        %v557 = vunpack.c.l.b16 %v422
        %v558 = vunpack.c.h.b16 %v422
        %v559 = vunpack.c.l.b16 %v423
        %v560 = vunpack.c.h.b16 %v423
        %v561 = vunpack.c.l.b16 %v424
        %v562 = vunpack.c.h.b16 %v424
        %v563 = vunpack.c.l.b16 %v425
        %v564 = vunpack.c.h.b16 %v425
        %v565 = vunpack.c.l.b16 %v426
        %v566 = vunpack.c.h.b16 %v426
        %v567 = vunpack.c.l.b16 %v427
        %v568 = vunpack.c.h.b16 %v427
        %v569 = vunpack.c.l.b16 %v428
        %v570 = vunpack.c.h.b16 %v428
        %v571 = vunpack.c.l.b16 %v429
        %v572 = vunpack.c.h.b16 %v429
        %v573 = vunpack.c.l.b16 %v430
        %v574 = vunpack.c.h.b16 %v430
        %v575 = vunpack.c.l.b16 %v431
        %v576 = vunpack.c.h.b16 %v431
        %v577 = vunpack.c.l.b16 %v432
        %v578 = vunpack.c.h.b16 %v432
        %v579 = vunpack.c.l.b16 %v433
        %v580 = vunpack.c.h.b16 %v433
        %v581 = vunpack.c.l.b16 %v434
        %v582 = vunpack.c.h.b16 %v434
        %v583 = vunpack.c.l.b16 %v435
        %v584 = vunpack.c.h.b16 %v435
        %v585 = vunpack.c.l.b16 %v436
        %v586 = vunpack.c.h.b16 %v436
        %v587 = vunpack.c.l.b16 %v437
        %v588 = vunpack.c.h.b16 %v437
        %v589 = vunpack.c.l.b16 %v438
        %v590 = vunpack.c.h.b16 %v438
        %v591 = vunpack.c.l.b16 %v439
        %v592 = vunpack.c.h.b16 %v439
        %v593 = vunpack.c.l.b16 %v440
        %v594 = vunpack.c.h.b16 %v440
        %v595 = vunpack.c.l.b16 %v441
        %v596 = vunpack.c.h.b16 %v441
        %v597 = vunpack.c.l.b16 %v442
        %v598 = vunpack.c.h.b16 %v442
        %v599 = vunpack.c.l.b16 %v443
        %v600 = vunpack.c.h.b16 %v443
        %v601 = vunpack.c.l.b16 %v444
        %v602 = vunpack.c.h.b16 %v444
        %v603 = vunpack.c.l.b16 %v445
        %v604 = vunpack.c.h.b16 %v445
        %v605 = vunpack.c.l.b16 %v446
        %v606 = vunpack.c.h.b16 %v446
        %v607 = vunpack.c.l.b16 %v447
        %v608 = vunpack.c.h.b16 %v447
        %v609 = vunpack.c.l.b16 %v448
        %v610 = vunpack.c.h.b16 %v448
        %v611 = vunpack.c.l.b16 %v449
        %v612 = vunpack.c.h.b16 %v449
        %v613 = vunpack.c.l.b16 %v450
        %v614 = vunpack.c.h.b16 %v450
        %v615 = vunpack.c.l.b16 %v451
        %v616 = vunpack.c.h.b16 %v451
        %v617 = vunpack.c.l.b16 %v452
        %v618 = vunpack.c.h.b16 %v452
        %v619 = vpack.c.b16 %v523, %v521
        %v620 = vpack.c.b16 %v524, %v522
        %v621 = vpack.c.b16 %v527, %v525
        %v622 = vpack.c.b16 %v528, %v526
        %v623 = vpack.c.b16 %v531, %v529
        %v624 = vpack.c.b16 %v532, %v530
        %v625 = vpack.c.b16 %v535, %v533
        %v626 = vpack.c.b16 %v536, %v534
        %v627 = vpack.c.b16 %v539, %v537
        %v628 = vpack.c.b16 %v540, %v538
        %v629 = vpack.c.b16 %v543, %v541
        %v630 = vpack.c.b16 %v544, %v542
        %v631 = vpack.c.b16 %v547, %v545
        %v632 = vpack.c.b16 %v548, %v546
        %v633 = vpack.c.b16 %v551, %v549
        %v634 = vpack.c.b16 %v552, %v550
        %v635 = vpack.c.b16 %v555, %v553
        %v636 = vpack.c.b16 %v556, %v554
        %v637 = vpack.c.b16 %v559, %v557
        %v638 = vpack.c.b16 %v560, %v558
        %v639 = vpack.c.b16 %v563, %v561
        %v640 = vpack.c.b16 %v564, %v562
        %v641 = vpack.c.b16 %v567, %v565
        %v642 = vpack.c.b16 %v568, %v566
        %v643 = vpack.c.b16 %v571, %v569
        %v644 = vpack.c.b16 %v572, %v570
        %v645 = vpack.c.b16 %v575, %v573
        %v646 = vpack.c.b16 %v576, %v574
        %v647 = vpack.c.b16 %v579, %v577
        %v648 = vpack.c.b16 %v580, %v578
        %v649 = vpack.c.b16 %v583, %v581
        %v650 = vpack.c.b16 %v584, %v582
        %v651 = vpack.c.b16 %v587, %v585
        %v652 = vpack.c.b16 %v588, %v586
        %v653 = vpack.c.b16 %v591, %v589
        %v654 = vpack.c.b16 %v592, %v590
        %v655 = vpack.c.b16 %v595, %v593
        %v656 = vpack.c.b16 %v596, %v594
        %v657 = vpack.c.b16 %v599, %v597
        %v658 = vpack.c.b16 %v600, %v598
        %v659 = vpack.c.b16 %v603, %v601
        %v660 = vpack.c.b16 %v604, %v602
        %v661 = vpack.c.b16 %v607, %v605
        %v662 = vpack.c.b16 %v608, %v606
        %v663 = vpack.c.b16 %v611, %v609
        %v664 = vpack.c.b16 %v612, %v610
        %v665 = vpack.c.b16 %v615, %v613
        %v666 = vpack.c.b16 %v616, %v614
        %v667 = vpack.c.b16 %v617, %v617
        %v668 = vpack.c.b16 %v618, %v618
        %vm717 = vcmask 64512
        %v719 = vsel %vm717, %v468, 0
        %vm721 = vcmask 1043456
        %v723 = vsel %vm721, %v667, 0
        %v726 = vsel %vm721, %v668, 0
        %728 = vmatpush.bf16.msra.mxu0 %v633
        %729 = vmatpush.bf16.msra.mxu0 %v631
        %730 = vmatpush.bf16.msra.mxu0 %v629
        %731 = vmatpush.bf16.msra.mxu0 %v627
        %732 = vmatpush.bf16.msra.mxu0 %v625
        %733 = vmatpush.bf16.msra.mxu0 %v623
        %734 = vmatpush.bf16.msra.mxu0 %v621
        %735 = vmatpush.bf16.msra.mxu0 %v619
        %736 = vmatmul.bf16.gmra.mxu0 %v465
        %v737 = vpop.f32.mrf.mxu0
        %v738 = vadd.f32 %v457, %v737
        %v739 = vpop.f32.mrf.mxu0
        %740 = vdwg.mxu0
        %741 = vmatpush.bf16.msra.mxu0 %v649
        %742 = vmatpush.bf16.msra.mxu0 %v647
        %743 = vmatpush.bf16.msra.mxu0 %v645
        %744 = vmatpush.bf16.msra.mxu0 %v643
        %745 = vmatpush.bf16.msra.mxu0 %v641
        %746 = vmatpush.bf16.msra.mxu0 %v639
        %747 = vmatpush.bf16.msra.mxu0 %v637
        %748 = vmatpush.bf16.msra.mxu0 %v635
        %749 = vmatmul.bf16.gmra.mxu0 %v466
        %v750 = vpop.f32.mrf.mxu0
        %v751 = vadd.f32 %v738, %v750
        %v752 = vpop.f32.mrf.mxu0
        %753 = vdwg.mxu0
        %754 = vmatpush.bf16.msra.mxu0 %v665
        %755 = vmatpush.bf16.msra.mxu0 %v663
        %756 = vmatpush.bf16.msra.mxu0 %v661
        %757 = vmatpush.bf16.msra.mxu0 %v659
        %758 = vmatpush.bf16.msra.mxu0 %v657
        %759 = vmatpush.bf16.msra.mxu0 %v655
        %760 = vmatpush.bf16.msra.mxu0 %v653
        %761 = vmatpush.bf16.msra.mxu0 %v651
        %762 = vmatmul.bf16.gmra.mxu0 %v467
        %v763 = vpop.f32.mrf.mxu0
        %v764 = vadd.f32 %v751, %v763
        %v765 = vpop.f32.mrf.mxu0
        %766 = vdwg.mxu0
        %767 = vmatpush.bf16.msra.mxu0 0
        %768 = vmatpush.bf16.msra.mxu0 0
        %769 = vmatpush.bf16.msra.mxu0 0
        %770 = vmatpush.bf16.msra.mxu0 0
        %771 = vmatpush.bf16.msra.mxu0 0
        %772 = vmatpush.bf16.msra.mxu0 0
        %773 = vmatpush.bf16.msra.mxu0 0
        %774 = vmatpush.bf16.msra.mxu0 %v723
        %775 = vmatmul.bf16.gmra.mxu0 %v719
        %v776 = vpop.f32.mrf.mxu0
        %v777 = vadd.f32 %v764, %v776
        %v778 = vpop.f32.mrf.mxu0
        %779 = vdwg.mxu0
        %780 = vmatpush.bf16.msra.mxu0 %v634
        %781 = vmatpush.bf16.msra.mxu0 %v632
        %782 = vmatpush.bf16.msra.mxu0 %v630
        %783 = vmatpush.bf16.msra.mxu0 %v628
        %784 = vmatpush.bf16.msra.mxu0 %v626
        %785 = vmatpush.bf16.msra.mxu0 %v624
        %786 = vmatpush.bf16.msra.mxu0 %v622
        %787 = vmatpush.bf16.msra.mxu0 %v620
        %788 = vmatmul.bf16.gmra.mxu0 %v465
        %v789 = vpop.f32.mrf.mxu0
        %v790 = vadd.f32 %v457, %v789
        %v791 = vpop.f32.mrf.mxu0
        %792 = vdwg.mxu0
        %793 = vmatpush.bf16.msra.mxu0 %v650
        %794 = vmatpush.bf16.msra.mxu0 %v648
        %795 = vmatpush.bf16.msra.mxu0 %v646
        %796 = vmatpush.bf16.msra.mxu0 %v644
        %797 = vmatpush.bf16.msra.mxu0 %v642
        %798 = vmatpush.bf16.msra.mxu0 %v640
        %799 = vmatpush.bf16.msra.mxu0 %v638
        %800 = vmatpush.bf16.msra.mxu0 %v636
        %801 = vmatmul.bf16.gmra.mxu0 %v466
        %v802 = vpop.f32.mrf.mxu0
        %v803 = vadd.f32 %v790, %v802
        %v804 = vpop.f32.mrf.mxu0
        %805 = vdwg.mxu0
        %806 = vmatpush.bf16.msra.mxu0 %v666
        %807 = vmatpush.bf16.msra.mxu0 %v664
        %808 = vmatpush.bf16.msra.mxu0 %v662
        %809 = vmatpush.bf16.msra.mxu0 %v660
        %810 = vmatpush.bf16.msra.mxu0 %v658
        %811 = vmatpush.bf16.msra.mxu0 %v656
        %812 = vmatpush.bf16.msra.mxu0 %v654
        %813 = vmatpush.bf16.msra.mxu0 %v652
        %814 = vmatmul.bf16.gmra.mxu0 %v467
        %v815 = vpop.f32.mrf.mxu0
        %v816 = vadd.f32 %v803, %v815
        %v817 = vpop.f32.mrf.mxu0
        %818 = vdwg.mxu0
        %819 = vmatpush.bf16.msra.mxu0 0
        %820 = vmatpush.bf16.msra.mxu0 0
        %821 = vmatpush.bf16.msra.mxu0 0
        %822 = vmatpush.bf16.msra.mxu0 0
        %823 = vmatpush.bf16.msra.mxu0 0
        %824 = vmatpush.bf16.msra.mxu0 0
        %825 = vmatpush.bf16.msra.mxu0 0
        %826 = vmatpush.bf16.msra.mxu0 %v726
        %827 = vmatmul.bf16.gmra.mxu0 %v719
        %v828 = vpop.f32.mrf.mxu0
        %v829 = vadd.f32 %v816, %v828
        %v830 = vpop.f32.mrf.mxu0
        %831 = vdwg.mxu0
        %832 = vst [vmem:[%s399] sm:$0xff] %v777
        %833 = vst [vmem:[%s399 + $0x8] sm:$0xff] %v829
        %s834 = smul.u32 2, %s14
        %p835 = scmp.lt.s32.totalorder %s834, 3
        %s836 = scalar_select %p835, %s834, 3
        %s837 = smul.addr %s836, 8
        %s838 = scalar_lea.vmem %s3, %s837
        // Predicated region
        $region71: #{generator_forward.19} parent=65 // pred_check
          %p839 = pneg %p100
        $region72: #{generator_forward.19} parent=65 // pred_check_branch
          %841 = sbr.rel (%p839) target = $region74
        $region73: #{generator_forward.19} parent=65 // pred_region
          %s842 = smul.u32 2, %s14
        $region74: #{generator_forward.19} parent=65 // pred_fallthru
          _
      $region66: #{generator_forward.19} parent=5 // pred_fallthru
        _
      %p843 = scmp.le.s32.totalorder 2, %s9
      // Predicated region
      $region75: #{generator_forward.19} parent=5 // pred_check
        %p844 = pneg %p843
      $region76: #{generator_forward.19} parent=5 // pred_check_branch
        %846 = sbr.rel (%p844) target = $region78
      $region77: #{generator_forward.19} parent=5 // pred_region
        %s847 = ssub.s32 %s9, 2
        // Predicated region
        $region79: #{generator_forward.19} parent=77 // pred_check
          %p848 = pneg %p106
        $region80: #{generator_forward.19} parent=77 // pred_check_branch
          %850 = sbr.rel (%p848) target = $region82
        $region81: #{generator_forward.19} parent=77 // pred_region
          %s851 = smul.u32 2, %s15
          %p852 = scmp.lt.s32.totalorder %s851, 3
          %s853 = scalar_select %p852, %s851, 3
          %s854 = smul.addr %s853, 8
          %s855 = scalar_lea.vmem %s3, %s854
        $region82: #{generator_forward.19} parent=77 // pred_fallthru
          _
      $region78: #{generator_forward.19} parent=5 // pred_fallthru
        _
    $region6: #{generator_forward.19} parent=1 // loop_footer
      %s13 = sadd.s32 1, %s9
    $region7: #{generator_forward.19} parent=1 // loop_footer_branch
      %8 = sbr.rel target = $region3
    $region8: #{generator_forward.19} parent=1 // loop_exit
      _

</llo_original>
